<compile_context>
chip_gen: v7x
topology: tpu7x:2x2x1
jax: 0.10.0
libtpu: 0.0.40
codegen_flags: <defaults>
</compile_context>

<pallas_src>
import jax
import jax.numpy as jnp
import numpy as np
from jax.experimental import pallas as pl
from jax.experimental.pallas import tpu as pltpu

EMB = 300           # embedding / conv filter count
EMB_P = 384         # 300 padded up to 3 * 128 lanes
SEQ = 21
FEAT = 603          # 300 + 300 + 3
NFEA = 63           # 21 * 3 extra features
NFEA_P = 128        # fea padded to one lane group
N1, N2, N3 = 10, 2, 2
NHEAD = N1 + N2 + N3              # 14
HEAD_K = NHEAD + NFEA_P           # 142  (fused head contraction dim)
H2 = 300
ROWS = 48           # 42 conv rows per example padded to a multiple of 8 sublanes
BBLK = 8            # examples per grid step (=> 384-row conv matmul per step)
                    # raise to 128-512 for real batches (v5e/v6e: bigger tiles,
                    # v7x: ~128-256 + explicit vmem_limit_bytes)

_F32 = jnp.float32
_BF16 = jnp.bfloat16


# ---------------------------------------------------------------------------
# Pallas kernel: one batch tile of the full forward pass.
# Per-example row layout inside the slab:
#   [ 0:16]=left seg3   [16:32]=right seg3   [32:36]=left seg2   [36:40]=right seg2
#   [40]   =left seg1   [41]   =right seg1   [42:48]=zero pad
# ---------------------------------------------------------------------------
def sem_kernel(slab_ref, fea_ref,
               wc_ref, bc_ref,
               w1_ref, b1_ref, w2_ref, b2_ref, w3_ref, b3_ref,
               wr_ref, br_ref, wf_ref, bf_ref,
               out_ref):
    nb, rows, ep = slab_ref.shape                     # (BBLK, 48, 384)

    def softmax(z):                                   # nn.Softmax() on 2-D -> dim=1
        z = z - jnp.max(z, axis=1, keepdims=True)
        e = jnp.exp(z)
        return e * pl.reciprocal(jnp.sum(e, axis=1, keepdims=True), approx=True)

    # ---- single fused conv matmul (bf16 in, f32 acc) + bias + ReLU ----
    x3 = slab_ref[...]                                # (nb, 48, 384) f32
    x2 = x3.reshape(nb * rows, ep).astype(_BF16)      # fold batch into rows
    h2 = jnp.dot(x2, wc_ref[...], preferred_element_type=_F32) + bc_ref[...]
    h2 = jnp.maximum(h2, 0.0)                         # (nb*48, 384)
    h3 = h2.reshape(nb, rows, ep)

    # ---- segment max-pools (MaxPool2d over the sequence axis) ----
    m3l = jnp.max(h3[:, 0:16, :], axis=1)             # (nb, 384)
    m3r = jnp.max(h3[:, 16:32, :], axis=1)
    m2l = jnp.max(h3[:, 32:36, :], axis=1)
    m2r = jnp.max(h3[:, 36:40, :], axis=1)
    h1l = h3[:, 40, :]                                # seq len 1 -> pool is identity
    h1r = h3[:, 41, :]
    s1l = x3[:, 40, :]                                # raw embeddings for x_dif_12
    s1r = x3[:, 41, :]

    # ---- regressor1: Linear(900, 10) + Softmax (lane-aligned padded concat) ----
    md1 = jnp.concatenate(
        [h1l * h1r, jnp.abs(h1l - h1r), jnp.abs(s1l - s1r)], axis=1)      # (nb, 1152)
    out1 = softmax(jnp.dot(md1, w1_ref[...], preferred_element_type=_F32)
                   + b1_ref[...])                                          # (nb, 10)

    # ---- regressor2 / regressor3: Linear(600, 2) + Softmax ----
    md2 = jnp.concatenate([m2l * m2r, jnp.abs(m2l - m2r)], axis=1)         # (nb, 768)
    out2 = softmax(jnp.dot(md2, w2_ref[...], preferred_element_type=_F32)
                   + b2_ref[...])                                          # (nb, 2)
    md3 = jnp.concatenate([m3l * m3r, jnp.abs(m3l - m3r)], axis=1)
    out3 = softmax(jnp.dot(md3, w3_ref[...], preferred_element_type=_F32)
                   + b3_ref[...])                                          # (nb, 2)

    # ---- fused final head: Linear(77, 300) -> Tanh -> Linear(300, 1) -> Sigmoid ----
    head = jnp.concatenate([out1, out2, out3, fea_ref[...]], axis=1)       # (nb, 142)
    hid = jnp.tanh(jnp.dot(head, wr_ref[...], preferred_element_type=_F32)
                   + br_ref[...])                                          # (nb, 384)
    # Linear(300, 1) as broadcast-mul + lane reduction (avoids an N=1 MXU push)
    logit = jnp.sum(hid * wf_ref[...], axis=1, keepdims=True) + bf_ref[...]
    out_ref[...] = 1.0 / (1.0 + jnp.exp(-logit))


# ---------------------------------------------------------------------------
# Parameters (deterministic, PyTorch-default-style uniform init)
# ---------------------------------------------------------------------------
def init_raw_params(key):
    ks = jax.random.split(key, 12)

    def u(k, shape, fan_in):
        bound = 1.0 / np.sqrt(fan_in)
        return jax.random.uniform(k, shape, _F32, -bound, bound)

    Wc = u(ks[0], (EMB, EMB), EMB)                 # Conv2d(1,300,(1,300)) weight
    bc = u(ks[1], (EMB,), EMB)
    W1 = u(ks[2], (N1, 3 * EMB), 3 * EMB)          # Linear(900, 10)
    b1 = u(ks[3], (N1,), 3 * EMB)
    W2 = u(ks[4], (N2, 2 * EMB), 2 * EMB)          # Linear(600, 2)
    b2 = u(ks[5], (N2,), 2 * EMB)
    W3 = u(ks[6], (N3, 2 * EMB), 2 * EMB)          # Linear(600, 2)
    b3 = u(ks[7], (N3,), 2 * EMB)
    Wr = u(ks[8], (H2, NHEAD + NFEA), NHEAD + NFEA)  # Linear(77, 300)
    br = u(ks[9], (H2,), NHEAD + NFEA)
    Wf = u(ks[10], (1, H2), H2)                    # Linear(300, 1)
    bf = u(ks[11], (1,), H2)
    return (Wc, bc, W1, b1, W2, b2, W3, b3, Wr, br, Wf, bf)


def kernel_params(raw):
    """Transpose / zero-pad the raw weights into the lane-aligned kernel layout."""
    (Wc, bc, W1, b1, W2, b2, W3, b3, Wr, br, Wf, bf) = raw

    wc_k = jnp.zeros((EMB_P, EMB_P), _F32).at[:EMB, :EMB].set(Wc.T).astype(_BF16)
    bc_k = jnp.zeros((1, EMB_P), _F32).at[0, :EMB].set(bc)

    def split(W, n_chunks):       # (out, n_chunks*300) -> (n_chunks*384, out), zero rows in pad
        out = jnp.zeros((n_chunks * EMB_P, W.shape[0]), _F32)
        for j in range(n_chunks):
            out = out.at[j * EMB_P:j * EMB_P + EMB, :].set(
                W[:, j * EMB:(j + 1) * EMB].T)
        return out

    w1_k, b1_k = split(W1, 3), b1.reshape(1, N1)
    w2_k, b2_k = split(W2, 2), b2.reshape(1, N2)
    w3_k, b3_k = split(W3, 2), b3.reshape(1, N3)

    # fused head weight: rows 0:77 <- Wr^T (out1|out2|out3|fea), rows 77:142 = 0 (fea pad)
    wr_k = jnp.zeros((HEAD_K, EMB_P), _F32).at[:NHEAD + NFEA, :H2].set(Wr.T)
    br_k = jnp.zeros((1, EMB_P), _F32).at[0, :H2].set(br)
    wf_k = jnp.zeros((1, EMB_P), _F32).at[0, :H2].set(Wf[0])
    bf_k = bf.reshape(1, 1)

    return (wc_k, bc_k, w1_k, b1_k, w2_k, b2_k, w3_k, b3_k, wr_k, br_k, wf_k, bf_k)


# ---------------------------------------------------------------------------
# Wrapper: layout glue (slab packing, padding) + gridded pallas_call
# ---------------------------------------------------------------------------
def sem_match_net_hcti(x, kparams, block_batch=BBLK):
    B = x.shape[0]
    nb = pl.cdiv(B, block_batch)
    b_pad = nb * block_batch

    xl = x[:, :, 0:EMB]
    xr = x[:, :, EMB:2 * EMB]
    fea = x[:, :, 2 * EMB:2 * EMB + 3].reshape(B, NFEA)

    # per-example rows: [0:16]=l3, [16:32]=r3, [32:36]=l2, [36:40]=r2, [40]=l1, [41]=r1
    lr = jnp.concatenate([xl[:, 5:21], xr[:, 5:21],
                          xl[:, 1:5], xr[:, 1:5],
                          xl[:, 0:1], xr[:, 0:1]], axis=1)          # (B, 42, 300)
    slab = jnp.pad(lr, ((0, b_pad - B), (0, ROWS - 42), (0, EMB_P - EMB)))
    fea_p = jnp.pad(fea, ((0, b_pad - B), (0, NFEA_P - NFEA)))

    weights = kparams

    slab_spec = pl.BlockSpec((block_batch, ROWS, EMB_P), lambda i: (i, 0, 0))
    fea_spec = pl.BlockSpec((block_batch, NFEA_P), lambda i: (i, 0))
    # constant index_map -> weights stay resident in VMEM across grid steps
    w_specs = [pl.BlockSpec(w.shape, lambda i: (0, 0)) for w in weights]
    out_spec = pl.BlockSpec((block_batch, 1), lambda i: (i, 0))

    out = pl.pallas_call(
        sem_kernel,
        out_shape=jax.ShapeDtypeStruct((b_pad, 1), _F32),
        grid=(nb,),
        in_specs=[slab_spec, fea_spec] + w_specs,
        out_specs=out_spec,
        compiler_params=pltpu.CompilerParams(
            dimension_semantics=("parallel",)),
    )(slab, fea_p, *weights)
    return out[:B]


# ---------------------------------------------------------------------------
# Pure-JAX reference (mirrors the PyTorch forward, f32 HIGHEST precision)
# ---------------------------------------------------------------------------
def reference(x, raw):
    (Wc, bc, W1, b1, W2, b2, W3, b3, Wr, br, Wf, bf) = raw
    HI = jax.lax.Precision.HIGHEST
    B = x.shape[0]
    xl = x[:, :, 0:EMB]
    xr = x[:, :, EMB:2 * EMB]
    fea = x[:, :, 2 * EMB:2 * EMB + 3].reshape(B, NFEA)

    def softmax(z):
        z = z - jnp.max(z, axis=1, keepdims=True)
        e = jnp.exp(z)
        return e / jnp.sum(e, axis=1, keepdims=True)

    def conv_max(seg):     # (B, S, 300) -> conv_1d + relu + max over S -> (B, 300)
        h = jnp.einsum("bse,fe->bsf", seg, Wc, precision=HI) + bc
        return jnp.max(jnp.maximum(h, 0.0), axis=1)

    xl1, xr1 = conv_max(xl[:, 0:1]), conv_max(xr[:, 0:1])
    xl2, xr2 = conv_max(xl[:, 1:5]), conv_max(xr[:, 1:5])
    xl3, xr3 = conv_max(xl[:, 5:21]), conv_max(xr[:, 5:21])

    md1 = jnp.concatenate([xl1 * xr1, jnp.abs(xl1 - xr1),
                           jnp.abs(xl[:, 0] - xr[:, 0])], axis=1)
    out1 = softmax(jnp.dot(md1, W1.T, precision=HI) + b1)
    md2 = jnp.concatenate([xl2 * xr2, jnp.abs(xl2 - xr2)], axis=1)
    out2 = softmax(jnp.dot(md2, W2.T, precision=HI) + b2)
    md3 = jnp.concatenate([xl3 * xr3, jnp.abs(xl3 - xr3)], axis=1)
    out3 = softmax(jnp.dot(md3, W3.T, precision=HI) + b3)

    out = jnp.concatenate([out1, out2, out3, fea], axis=1)
    hid = jnp.tanh(jnp.dot(out, Wr.T, precision=HI) + br)
    return jax.nn.sigmoid(jnp.dot(hid, Wf.T, precision=HI) + bf)


if __name__ == "__main__":
    key = jax.random.PRNGKey(0)
    kp, kx = jax.random.split(key)

    raw = init_raw_params(kp)
    kparams = kernel_params(raw)

    batch = 10   # exercises the batch grid (2 steps of 8) and the batch-padding path
    x = jax.random.normal(kx, (batch, SEQ, FEAT), dtype=_F32)

    pre = jax.block_until_ready(sem_match_net_hcti(x, kparams))
    ref = jax.block_until_ready(reference(x, raw))

    assert pre.shape == (batch, 1), pre.shape
    assert bool(jnp.all(jnp.isfinite(pre)))
    # bf16-in / f32-acc MXU + approx reciprocal vs f32 HIGHEST reference
    np.testing.assert_allclose(np.asarray(pre), np.asarray(ref), rtol=5e-3, atol=5e-3)

    print("KERNEL_OK")
</pallas_src>

<mosaic_0001>
module attributes {stable_mosaic.version = 11 : i64} {
  func.func @sem_kernel(%arg0: i32, %arg1: memref<8x48x384xf32, #tpu.memory_space<vmem>>, %arg2: memref<8x128xf32, #tpu.memory_space<vmem>>, %arg3: memref<384x384xbf16, #tpu.memory_space<vmem>>, %arg4: memref<1x384xf32, #tpu.memory_space<vmem>>, %arg5: memref<1152x10xf32, #tpu.memory_space<vmem>>, %arg6: memref<1x10xf32, #tpu.memory_space<vmem>>, %arg7: memref<768x2xf32, #tpu.memory_space<vmem>>, %arg8: memref<1x2xf32, #tpu.memory_space<vmem>>, %arg9: memref<768x2xf32, #tpu.memory_space<vmem>>, %arg10: memref<1x2xf32, #tpu.memory_space<vmem>>, %arg11: memref<142x384xf32, #tpu.memory_space<vmem>>, %arg12: memref<1x384xf32, #tpu.memory_space<vmem>>, %arg13: memref<1x384xf32, #tpu.memory_space<vmem>>, %arg14: memref<1x1xf32, #tpu.memory_space<vmem>>, %arg15: memref<8x1xf32, #tpu.memory_space<vmem>>) attributes {dimension_semantics = [#tpu.dimension_semantics<parallel>], iteration_bounds = array<i64: 2>, scalar_prefetch = 0 : i64, scratch_operands = 0 : i64, tpu.core_type = #tpu.core_type<tc>, window_params = [{transform_indices = @transform_0, window_bounds = array<i64: 8, 48, 384>}, {transform_indices = @transform_1, window_bounds = array<i64: 8, 128>}, {pipeline_mode = #tpu.pipeline_mode<synchronous>, transform_indices = @transform_2, window_bounds = array<i64: 384, 384>}, {pipeline_mode = #tpu.pipeline_mode<synchronous>, transform_indices = @transform_3, window_bounds = array<i64: 1, 384>}, {pipeline_mode = #tpu.pipeline_mode<synchronous>, transform_indices = @transform_4, window_bounds = array<i64: 1152, 10>}, {pipeline_mode = #tpu.pipeline_mode<synchronous>, transform_indices = @transform_5, window_bounds = array<i64: 1, 10>}, {pipeline_mode = #tpu.pipeline_mode<synchronous>, transform_indices = @transform_6, window_bounds = array<i64: 768, 2>}, {pipeline_mode = #tpu.pipeline_mode<synchronous>, transform_indices = @transform_7, window_bounds = array<i64: 1, 2>}, {pipeline_mode = #tpu.pipeline_mode<synchronous>, transform_indices = @transform_8, window_bounds = array<i64: 768, 2>}, {pipeline_mode = #tpu.pipeline_mode<synchronous>, transform_indices = @transform_9, window_bounds = array<i64: 1, 2>}, {pipeline_mode = #tpu.pipeline_mode<synchronous>, transform_indices = @transform_10, window_bounds = array<i64: 142, 384>}, {pipeline_mode = #tpu.pipeline_mode<synchronous>, transform_indices = @transform_11, window_bounds = array<i64: 1, 384>}, {pipeline_mode = #tpu.pipeline_mode<synchronous>, transform_indices = @transform_12, window_bounds = array<i64: 1, 384>}, {pipeline_mode = #tpu.pipeline_mode<synchronous>, transform_indices = @transform_13, window_bounds = array<i64: 1, 1>}, {transform_indices = @transform_14, window_bounds = array<i64: 8, 1>}]} {
    %c0 = arith.constant 0 : index
    %c0_0 = arith.constant 0 : index
    %c0_1 = arith.constant 0 : index
    %0 = vector.load %arg1[%c0, %c0_0, %c0_1] : memref<8x48x384xf32, #tpu.memory_space<vmem>>, vector<8x48x384xf32>
    %1 = vector.shape_cast %0 : vector<8x48x384xf32> to vector<384x384xf32>
    %2 = arith.truncf %1 : vector<384x384xf32> to vector<384x384xbf16>
    %c0_2 = arith.constant 0 : index
    %c0_3 = arith.constant 0 : index
    %3 = vector.load %arg3[%c0_2, %c0_3] : memref<384x384xbf16, #tpu.memory_space<vmem>>, vector<384x384xbf16>
    %cst = arith.constant dense<0.000000e+00> : vector<384x384xf32>
    %4 = tpu.matmul %2, %3, %cst {dimension_numbers = #tpu.dot_dimension_numbers<[1], [0], [0], [1], [0, 0, 1, 1], [], []>} : vector<384x384xbf16>, vector<384x384xbf16>, vector<384x384xf32> -> vector<384x384xf32>
    %c0_4 = arith.constant 0 : index
    %c0_5 = arith.constant 0 : index
    %5 = vector.load %arg4[%c0_4, %c0_5] : memref<1x384xf32, #tpu.memory_space<vmem>>, vector<1x384xf32>
    %6 = vector.broadcast %5 : vector<1x384xf32> to vector<384x384xf32>
    %7 = arith.addf %4, %6 : vector<384x384xf32>
    %cst_6 = arith.constant 0.000000e+00 : f32
    %8 = vector.broadcast %cst_6 : f32 to vector<384x384xf32>
    %9 = arith.maximumf %7, %8 : vector<384x384xf32>
    %10 = vector.shape_cast %9 : vector<384x384xf32> to vector<8x48x384xf32>
    %11 = vector.extract_strided_slice %10 {offsets = [0, 0, 0], sizes = [8, 16, 384], strides = [1, 1, 1]} : vector<8x48x384xf32> to vector<8x16x384xf32>
    %cst_7 = arith.constant dense<0xFF800000> : vector<8x384xf32>
    %12 = vector.multi_reduction <maximumf>, %11, %cst_7 [1] : vector<8x16x384xf32> to vector<8x384xf32>
    %13 = vector.extract_strided_slice %10 {offsets = [0, 16, 0], sizes = [8, 16, 384], strides = [1, 1, 1]} : vector<8x48x384xf32> to vector<8x16x384xf32>
    %cst_8 = arith.constant dense<0xFF800000> : vector<8x384xf32>
    %14 = vector.multi_reduction <maximumf>, %13, %cst_8 [1] : vector<8x16x384xf32> to vector<8x384xf32>
    %15 = vector.extract_strided_slice %10 {offsets = [0, 32, 0], sizes = [8, 4, 384], strides = [1, 1, 1]} : vector<8x48x384xf32> to vector<8x4x384xf32>
    %cst_9 = arith.constant dense<0xFF800000> : vector<8x384xf32>
    %16 = vector.multi_reduction <maximumf>, %15, %cst_9 [1] : vector<8x4x384xf32> to vector<8x384xf32>
    %17 = vector.extract_strided_slice %10 {offsets = [0, 36, 0], sizes = [8, 4, 384], strides = [1, 1, 1]} : vector<8x48x384xf32> to vector<8x4x384xf32>
    %cst_10 = arith.constant dense<0xFF800000> : vector<8x384xf32>
    %18 = vector.multi_reduction <maximumf>, %17, %cst_10 [1] : vector<8x4x384xf32> to vector<8x384xf32>
    %19 = vector.extract_strided_slice %10 {offsets = [0, 40, 0], sizes = [8, 1, 384], strides = [1, 1, 1]} : vector<8x48x384xf32> to vector<8x1x384xf32>
    %20 = vector.shape_cast %19 : vector<8x1x384xf32> to vector<8x384xf32>
    %21 = vector.extract_strided_slice %10 {offsets = [0, 41, 0], sizes = [8, 1, 384], strides = [1, 1, 1]} : vector<8x48x384xf32> to vector<8x1x384xf32>
    %22 = vector.shape_cast %21 : vector<8x1x384xf32> to vector<8x384xf32>
    %23 = vector.extract_strided_slice %0 {offsets = [0, 40, 0], sizes = [8, 1, 384], strides = [1, 1, 1]} : vector<8x48x384xf32> to vector<8x1x384xf32>
    %24 = vector.shape_cast %23 : vector<8x1x384xf32> to vector<8x384xf32>
    %25 = vector.extract_strided_slice %0 {offsets = [0, 41, 0], sizes = [8, 1, 384], strides = [1, 1, 1]} : vector<8x48x384xf32> to vector<8x1x384xf32>
    %26 = vector.shape_cast %25 : vector<8x1x384xf32> to vector<8x384xf32>
    %27 = arith.mulf %20, %22 : vector<8x384xf32>
    %28 = arith.subf %20, %22 : vector<8x384xf32>
    %29 = math.absf %28 : vector<8x384xf32>
    %30 = arith.subf %24, %26 : vector<8x384xf32>
    %31 = math.absf %30 : vector<8x384xf32>
    %32 = tpu.concatenate %27, %29, %31 in 1 : vector<8x384xf32>, vector<8x384xf32>, vector<8x384xf32> -> vector<8x1152xf32>
    %c0_11 = arith.constant 0 : index
    %c0_12 = arith.constant 0 : index
    %33 = vector.load %arg5[%c0_11, %c0_12] : memref<1152x10xf32, #tpu.memory_space<vmem>>, vector<1152x10xf32>
    %cst_13 = arith.constant dense<0.000000e+00> : vector<8x10xf32>
    %34 = tpu.matmul %32, %33, %cst_13 {dimension_numbers = #tpu.dot_dimension_numbers<[1], [0], [0], [1], [0, 0, 1, 1], [], []>} : vector<8x1152xf32>, vector<1152x10xf32>, vector<8x10xf32> -> vector<8x10xf32>
    %c0_14 = arith.constant 0 : index
    %c0_15 = arith.constant 0 : index
    %35 = vector.load %arg6[%c0_14, %c0_15] : memref<1x10xf32, #tpu.memory_space<vmem>>, vector<1x10xf32>
    %36 = vector.broadcast %35 : vector<1x10xf32> to vector<8x10xf32>
    %37 = arith.addf %34, %36 : vector<8x10xf32>
    %cst_16 = arith.constant dense<0xFF800000> : vector<8xf32>
    %38 = vector.multi_reduction <maximumf>, %37, %cst_16 [1] : vector<8x10xf32> to vector<8xf32>
    %39 = vector.shape_cast %38 : vector<8xf32> to vector<8x1xf32>
    %40 = vector.broadcast %39 : vector<8x1xf32> to vector<8x10xf32>
    %41 = arith.subf %37, %40 : vector<8x10xf32>
    %42 = math.exp %41 : vector<8x10xf32>
    %cst_17 = arith.constant dense<0.000000e+00> : vector<8xf32>
    %43 = vector.multi_reduction <add>, %42, %cst_17 [1] : vector<8x10xf32> to vector<8xf32>
    %44 = vector.shape_cast %43 : vector<8xf32> to vector<8x1xf32>
    %45 = tpu.reciprocal %44 {approx = true} : vector<8x1xf32> -> vector<8x1xf32>
    %46 = vector.broadcast %45 : vector<8x1xf32> to vector<8x10xf32>
    %47 = arith.mulf %42, %46 : vector<8x10xf32>
    %48 = arith.mulf %16, %18 : vector<8x384xf32>
    %49 = arith.subf %16, %18 : vector<8x384xf32>
    %50 = math.absf %49 : vector<8x384xf32>
    %51 = tpu.concatenate %48, %50 in 1 : vector<8x384xf32>, vector<8x384xf32> -> vector<8x768xf32>
    %c0_18 = arith.constant 0 : index
    %c0_19 = arith.constant 0 : index
    %52 = vector.load %arg7[%c0_18, %c0_19] : memref<768x2xf32, #tpu.memory_space<vmem>>, vector<768x2xf32>
    %cst_20 = arith.constant dense<0.000000e+00> : vector<8x2xf32>
    %53 = tpu.matmul %51, %52, %cst_20 {dimension_numbers = #tpu.dot_dimension_numbers<[1], [0], [0], [1], [0, 0, 1, 1], [], []>} : vector<8x768xf32>, vector<768x2xf32>, vector<8x2xf32> -> vector<8x2xf32>
    %c0_21 = arith.constant 0 : index
    %c0_22 = arith.constant 0 : index
    %54 = vector.load %arg8[%c0_21, %c0_22] : memref<1x2xf32, #tpu.memory_space<vmem>>, vector<1x2xf32>
    %55 = vector.broadcast %54 : vector<1x2xf32> to vector<8x2xf32>
    %56 = arith.addf %53, %55 : vector<8x2xf32>
    %cst_23 = arith.constant dense<0xFF800000> : vector<8xf32>
    %57 = vector.multi_reduction <maximumf>, %56, %cst_23 [1] : vector<8x2xf32> to vector<8xf32>
    %58 = vector.shape_cast %57 : vector<8xf32> to vector<8x1xf32>
    %59 = vector.broadcast %58 : vector<8x1xf32> to vector<8x2xf32>
    %60 = arith.subf %56, %59 : vector<8x2xf32>
    %61 = math.exp %60 : vector<8x2xf32>
    %cst_24 = arith.constant dense<0.000000e+00> : vector<8xf32>
    %62 = vector.multi_reduction <add>, %61, %cst_24 [1] : vector<8x2xf32> to vector<8xf32>
    %63 = vector.shape_cast %62 : vector<8xf32> to vector<8x1xf32>
    %64 = tpu.reciprocal %63 {approx = true} : vector<8x1xf32> -> vector<8x1xf32>
    %65 = vector.broadcast %64 : vector<8x1xf32> to vector<8x2xf32>
    %66 = arith.mulf %61, %65 : vector<8x2xf32>
    %67 = arith.mulf %12, %14 : vector<8x384xf32>
    %68 = arith.subf %12, %14 : vector<8x384xf32>
    %69 = math.absf %68 : vector<8x384xf32>
    %70 = tpu.concatenate %67, %69 in 1 : vector<8x384xf32>, vector<8x384xf32> -> vector<8x768xf32>
    %c0_25 = arith.constant 0 : index
    %c0_26 = arith.constant 0 : index
    %71 = vector.load %arg9[%c0_25, %c0_26] : memref<768x2xf32, #tpu.memory_space<vmem>>, vector<768x2xf32>
    %cst_27 = arith.constant dense<0.000000e+00> : vector<8x2xf32>
    %72 = tpu.matmul %70, %71, %cst_27 {dimension_numbers = #tpu.dot_dimension_numbers<[1], [0], [0], [1], [0, 0, 1, 1], [], []>} : vector<8x768xf32>, vector<768x2xf32>, vector<8x2xf32> -> vector<8x2xf32>
    %c0_28 = arith.constant 0 : index
    %c0_29 = arith.constant 0 : index
    %73 = vector.load %arg10[%c0_28, %c0_29] : memref<1x2xf32, #tpu.memory_space<vmem>>, vector<1x2xf32>
    %74 = vector.broadcast %73 : vector<1x2xf32> to vector<8x2xf32>
    %75 = arith.addf %72, %74 : vector<8x2xf32>
    %cst_30 = arith.constant dense<0xFF800000> : vector<8xf32>
    %76 = vector.multi_reduction <maximumf>, %75, %cst_30 [1] : vector<8x2xf32> to vector<8xf32>
    %77 = vector.shape_cast %76 : vector<8xf32> to vector<8x1xf32>
    %78 = vector.broadcast %77 : vector<8x1xf32> to vector<8x2xf32>
    %79 = arith.subf %75, %78 : vector<8x2xf32>
    %80 = math.exp %79 : vector<8x2xf32>
    %cst_31 = arith.constant dense<0.000000e+00> : vector<8xf32>
    %81 = vector.multi_reduction <add>, %80, %cst_31 [1] : vector<8x2xf32> to vector<8xf32>
    %82 = vector.shape_cast %81 : vector<8xf32> to vector<8x1xf32>
    %83 = tpu.reciprocal %82 {approx = true} : vector<8x1xf32> -> vector<8x1xf32>
    %84 = vector.broadcast %83 : vector<8x1xf32> to vector<8x2xf32>
    %85 = arith.mulf %80, %84 : vector<8x2xf32>
    %c0_32 = arith.constant 0 : index
    %c0_33 = arith.constant 0 : index
    %86 = vector.load %arg2[%c0_32, %c0_33] : memref<8x128xf32, #tpu.memory_space<vmem>>, vector<8x128xf32>
    %87 = tpu.concatenate %47, %66, %85, %86 in 1 : vector<8x10xf32>, vector<8x2xf32>, vector<8x2xf32>, vector<8x128xf32> -> vector<8x142xf32>
    %c0_34 = arith.constant 0 : index
    %c0_35 = arith.constant 0 : index
    %88 = vector.load %arg11[%c0_34, %c0_35] : memref<142x384xf32, #tpu.memory_space<vmem>>, vector<142x384xf32>
    %cst_36 = arith.constant dense<0.000000e+00> : vector<8x384xf32>
    %89 = tpu.matmul %87, %88, %cst_36 {dimension_numbers = #tpu.dot_dimension_numbers<[1], [0], [0], [1], [0, 0, 1, 1], [], []>} : vector<8x142xf32>, vector<142x384xf32>, vector<8x384xf32> -> vector<8x384xf32>
    %c0_37 = arith.constant 0 : index
    %c0_38 = arith.constant 0 : index
    %90 = vector.load %arg12[%c0_37, %c0_38] : memref<1x384xf32, #tpu.memory_space<vmem>>, vector<1x384xf32>
    %91 = vector.broadcast %90 : vector<1x384xf32> to vector<8x384xf32>
    %92 = arith.addf %89, %91 : vector<8x384xf32>
    %93 = math.tanh %92 : vector<8x384xf32>
    %c0_39 = arith.constant 0 : index
    %c0_40 = arith.constant 0 : index
    %94 = vector.load %arg13[%c0_39, %c0_40] : memref<1x384xf32, #tpu.memory_space<vmem>>, vector<1x384xf32>
    %95 = vector.broadcast %94 : vector<1x384xf32> to vector<8x384xf32>
    %96 = arith.mulf %93, %95 : vector<8x384xf32>
    %cst_41 = arith.constant dense<0.000000e+00> : vector<8xf32>
    %97 = vector.multi_reduction <add>, %96, %cst_41 [1] : vector<8x384xf32> to vector<8xf32>
    %98 = vector.shape_cast %97 : vector<8xf32> to vector<8x1xf32>
    %c0_42 = arith.constant 0 : index
    %c0_43 = arith.constant 0 : index
    %99 = vector.load %arg14[%c0_42, %c0_43] : memref<1x1xf32, #tpu.memory_space<vmem>>, vector<1x1xf32>
    %100 = vector.broadcast %99 : vector<1x1xf32> to vector<8x1xf32>
    %101 = arith.addf %98, %100 : vector<8x1xf32>
    %cst_44 = arith.constant 0.000000e+00 : f32
    %102 = vector.broadcast %cst_44 : f32 to vector<8x1xf32>
    %103 = arith.subf %102, %101 : vector<8x1xf32>
    %104 = math.exp %103 : vector<8x1xf32>
    %cst_45 = arith.constant 1.000000e+00 : f32
    %105 = vector.broadcast %cst_45 : f32 to vector<8x1xf32>
    %106 = arith.addf %105, %104 : vector<8x1xf32>
    %cst_46 = arith.constant 1.000000e+00 : f32
    %107 = vector.broadcast %cst_46 : f32 to vector<8x1xf32>
    %108 = arith.divf %107, %106 : vector<8x1xf32>
    %c0_47 = arith.constant 0 : index
    %c0_48 = arith.constant 0 : index
    %109 = vector.load %arg15[%c0_47, %c0_48] : memref<8x1xf32, #tpu.memory_space<vmem>>, vector<8x1xf32>
    tpu.vector_store %arg15[%c0_47, %c0_48], %108 {strides = array<i32>} : memref<8x1xf32, #tpu.memory_space<vmem>>, vector<8x1xf32>,
    return
  }
  func.func @transform_0(%arg0: i32) -> (i32, i32, i32) {
    %c0_i32 = arith.constant 0 : i32
    %c0_i32_0 = arith.constant 0 : i32
    %c0_i32_1 = arith.constant 0 : i32
    return %arg0, %c0_i32, %c0_i32_0 : i32, i32, i32
  }
  func.func @transform_1(%arg0: i32) -> (i32, i32) {
    %c0_i32 = arith.constant 0 : i32
    %c0_i32_0 = arith.constant 0 : i32
    return %arg0, %c0_i32 : i32, i32
  }
  func.func @transform_2(%arg0: i32) -> (i32, i32) {
    %c0_i32 = arith.constant 0 : i32
    %c0_i32_0 = arith.constant 0 : i32
    %c0_i32_1 = arith.constant 0 : i32
    return %c0_i32, %c0_i32_0 : i32, i32
  }
  func.func @transform_3(%arg0: i32) -> (i32, i32) {
    %c0_i32 = arith.constant 0 : i32
    %c0_i32_0 = arith.constant 0 : i32
    %c0_i32_1 = arith.constant 0 : i32
    return %c0_i32, %c0_i32_0 : i32, i32
  }
  func.func @transform_4(%arg0: i32) -> (i32, i32) {
    %c0_i32 = arith.constant 0 : i32
    %c0_i32_0 = arith.constant 0 : i32
    %c0_i32_1 = arith.constant 0 : i32
    return %c0_i32, %c0_i32_0 : i32, i32
  }
  func.func @transform_5(%arg0: i32) -> (i32, i32) {
    %c0_i32 = arith.constant 0 : i32
    %c0_i32_0 = arith.constant 0 : i32
    %c0_i32_1 = arith.constant 0 : i32
    return %c0_i32, %c0_i32_0 : i32, i32
  }
  func.func @transform_6(%arg0: i32) -> (i32, i32) {
    %c0_i32 = arith.constant 0 : i32
    %c0_i32_0 = arith.constant 0 : i32
    %c0_i32_1 = arith.constant 0 : i32
    return %c0_i32, %c0_i32_0 : i32, i32
  }
  func.func @transform_7(%arg0: i32) -> (i32, i32) {
    %c0_i32 = arith.constant 0 : i32
    %c0_i32_0 = arith.constant 0 : i32
    %c0_i32_1 = arith.constant 0 : i32
    return %c0_i32, %c0_i32_0 : i32, i32
  }
  func.func @transform_8(%arg0: i32) -> (i32, i32) {
    %c0_i32 = arith.constant 0 : i32
    %c0_i32_0 = arith.constant 0 : i32
    %c0_i32_1 = arith.constant 0 : i32
    return %c0_i32, %c0_i32_0 : i32, i32
  }
  func.func @transform_9(%arg0: i32) -> (i32, i32) {
    %c0_i32 = arith.constant 0 : i32
    %c0_i32_0 = arith.constant 0 : i32
    %c0_i32_1 = arith.constant 0 : i32
    return %c0_i32, %c0_i32_0 : i32, i32
  }
  func.func @transform_10(%arg0: i32) -> (i32, i32) {
    %c0_i32 = arith.constant 0 : i32
    %c0_i32_0 = arith.constant 0 : i32
    %c0_i32_1 = arith.constant 0 : i32
    return %c0_i32, %c0_i32_0 : i32, i32
  }
  func.func @transform_11(%arg0: i32) -> (i32, i32) {
    %c0_i32 = arith.constant 0 : i32
    %c0_i32_0 = arith.constant 0 : i32
    %c0_i32_1 = arith.constant 0 : i32
    return %c0_i32, %c0_i32_0 : i32, i32
  }
  func.func @transform_12(%arg0: i32) -> (i32, i32) {
    %c0_i32 = arith.constant 0 : i32
    %c0_i32_0 = arith.constant 0 : i32
    %c0_i32_1 = arith.constant 0 : i32
    return %c0_i32, %c0_i32_0 : i32, i32
  }
  func.func @transform_13(%arg0: i32) -> (i32, i32) {
    %c0_i32 = arith.constant 0 : i32
    %c0_i32_0 = arith.constant 0 : i32
    %c0_i32_1 = arith.constant 0 : i32
    return %c0_i32, %c0_i32_0 : i32, i32
  }
  func.func @transform_14(%arg0: i32) -> (i32, i32) {
    %c0_i32 = arith.constant 0 : i32
    %c0_i32_0 = arith.constant 0 : i32
    return %arg0, %c0_i32 : i32, i32
  }
}

</mosaic_0001>

<llo_original>
// kernel: tpu_custom_call.1
$region0: #{tpu_custom_call.1}
  #allocation0 [shape = 'u32[]', space=smem, size = 0x4, offset = 0x4, fixed_abs, tag = 'smem constant byte address 0x4 - core index']
  #allocation1 [shape = 'u32[144,128]{1,0:T(1,128)}', space=vmem, size = 0x12000, scoped, tag = 'internal scratch']
  #allocation2 [shape = 'f32[1,1]{1,0:T(1,128)S(1)}', space=vmem, size = 0x200, scoped, tag = 'scoped memory for tpu_custom_call.1']
  %s0 = inlined_call_operand.vmem [shape: f32[16,48,384], index: 0, kind: input, shape index: {}]
  %s1 = inlined_call_operand.vmem [shape: f32[16,128], index: 1, kind: input, shape index: {}]
  %s2 = inlined_call_operand.hbm [shape: bf16[384,384], index: 2, kind: input, shape index: {}]
  %s3 = inlined_call_operand.vmem [shape: f32[1,384], index: 3, kind: input, shape index: {}]
  %s4 = inlined_call_operand.vmem [shape: f32[1152,10], index: 4, kind: input, shape index: {}]
  %s5 = inlined_call_operand.vmem [shape: f32[1,10], index: 5, kind: input, shape index: {}]
  %s6 = inlined_call_operand.vmem [shape: f32[768,2], index: 6, kind: input, shape index: {}]
  %s7 = inlined_call_operand.vmem [shape: f32[1,2], index: 7, kind: input, shape index: {}]
  %s8 = inlined_call_operand.vmem [shape: f32[768,2], index: 8, kind: input, shape index: {}]
  %s9 = inlined_call_operand.vmem [shape: f32[1,2], index: 9, kind: input, shape index: {}]
  %s10 = inlined_call_operand.vmem [shape: f32[142,384], index: 10, kind: input, shape index: {}]
  %s11 = inlined_call_operand.vmem [shape: f32[1,384], index: 11, kind: input, shape index: {}]
  %s12 = inlined_call_operand.vmem [shape: f32[1,384], index: 12, kind: input, shape index: {}]
  %s13 = inlined_call_operand.<no memory space> [shape: f32[1,1], index: 13, kind: input, shape index: {}]
  %s14 = inlined_call_operand.vmem [shape: f32[16,1], index: 14, kind: output, shape index: {}]
  %s15 = sld [smem:[#allocation0]]
  $region93: #{tpu_custom_call.1} parent=0
    _
  %s17 = ssub.s32 1, %s15
  %s18 = scalar_select 0, %s17, %s15
  %v19 = vstv %s13
  %20 = vst [vmem:[#allocation2] sm:$0x1] %v19
  $region1: #{tpu_custom_call.1} parent=0
    #allocation3 [shape = 'u8[294912]{0}', space=vmem, size = 0x48000, scoped, tag = 'input window, operand 2, single buffered']
    #allocation4 [shape = 's32[2]{0}', space=sflag, size = 0x8, scoped, tag = 'scoped memory for tpu_custom_call.1']
    %21 = vsyncpa [#allocation4], 0
    loop: start=0, step=1, limit=4
    $region2: #{tpu_custom_call.1} parent=1 // loop_pre_header
      _
    $region3: #{tpu_custom_call.1} parent=1 // loop_header
      %s23 = sphi 0, %s27
      %p24 = scmp.ge.s32.totalorder %s23, 4
      %s33 = sphi 0, %s35
      %s36 = sphi 0, %s33
      %s37 = sphi 0, %s36
      %s53 = sphi 0, %s37
      %s59 = sphi 0, %s61
      %s62 = sphi 0, %s59
      %s63 = sphi 0, %s62
      %s79 = sphi 0, %s63
      %s83 = sphi 0, %s83
      %s85 = sphi 0, %s83
      %s86 = sphi 0, %s85
      %s100 = sphi 0, %s86
      %s104 = sphi 0, %s104
      %s106 = sphi 0, %s104
      %s107 = sphi 0, %s106
      %s121 = sphi 0, %s107
      %s125 = sphi 0, %s125
      %s127 = sphi 0, %s125
      %s128 = sphi 0, %s127
      %s142 = sphi 0, %s128
      %s146 = sphi 0, %s146
      %s148 = sphi 0, %s146
      %s149 = sphi 0, %s148
      %s163 = sphi 0, %s149
      %s167 = sphi 0, %s167
      %s169 = sphi 0, %s167
      %s170 = sphi 0, %s169
      %s184 = sphi 0, %s170
      %s188 = sphi 0, %s188
      %s190 = sphi 0, %s188
      %s191 = sphi 0, %s190
      %s205 = sphi 0, %s191
      %s209 = sphi 0, %s209
      %s211 = sphi 0, %s209
      %s212 = sphi 0, %s211
      %s226 = sphi 0, %s212
      %s230 = sphi 0, %s230
      %s232 = sphi 0, %s230
      %s233 = sphi 0, %s232
      %s247 = sphi 0, %s233
      %s251 = sphi 0, %s251
      %s253 = sphi 0, %s251
      %s254 = sphi 0, %s253
      %s268 = sphi 0, %s254
      %s272 = sphi 0, %s272
      %s274 = sphi 0, %s272
      %s275 = sphi 0, %s274
      %s289 = sphi 0, %s275
      %s293 = sphi 0, %s293
      %s295 = sphi 0, %s293
      %s296 = sphi 0, %s295
      %s310 = sphi 0, %s296
      %s314 = sphi 0, %s314
      %s316 = sphi 0, %s314
      %s317 = sphi 0, %s316
      %s331 = sphi 0, %s317
      %s337 = sphi 0, %s339
      %s340 = sphi 0, %s337
      %s341 = sphi 0, %s340
      %s357 = sphi 0, %s341
    $region4: #{tpu_custom_call.1} parent=1 // loop_header_branch
      %26 = sbr.rel (%p24) target = $region8
    $region5: #{tpu_custom_call.1} parent=1 // loop_body
      %s28 = ssub.s32 %s23, 1
      %s29 = ssub.s32 %s23, 2
      %s30 = sadd.s32 %s23, 1
      %s31 = ssub.s32 %s23, %s30
      %p32 = scmp.eq.s32.totalorder %s31, 0
      %s34 = sadd.s32 %s33, 1
      %s35 = scalar_select %p32, %s33, %s34
      %p38 = pneg %p32
      %p39 = scmp.eq.s32.totalorder %s23, 1
      %p40 = por %p38, %p39
      %p41 = scmp.ne.s32.totalorder %s33, %s36
      %p42 = scmp.eq.s32.totalorder %s23, 0
      %p43 = por %p41, %p42
      %p44 = scmp.ne.s32.totalorder %s33, %s36
      %p45 = scmp.eq.s32.totalorder %s28, 1
      %p46 = por %p44, %p45
      %p47 = scmp.ne.s32.totalorder %s36, %s37
      %p48 = scmp.eq.s32.totalorder %s28, 0
      %p49 = por %p47, %p48
      %p50 = scmp.ne.s32.totalorder %s36, %s37
      %p51 = scmp.eq.s32.totalorder %s29, 1
      %p52 = por %p50, %p51
      %p54 = scmp.ne.s32.totalorder %s37, %s53
      %p55 = scmp.eq.s32.totalorder %s29, 0
      %p56 = por %p54, %p55
      %s57 = ssub.s32 %s23, %s30
      %p58 = scmp.eq.s32.totalorder %s57, 0
      %s60 = sadd.s32 %s59, 1
      %s61 = scalar_select %p58, %s59, %s60
      %p64 = pneg %p58
      %p65 = scmp.eq.s32.totalorder %s23, 1
      %p66 = por %p64, %p65
      %p67 = scmp.ne.s32.totalorder %s59, %s62
      %p68 = scmp.eq.s32.totalorder %s23, 0
      %p69 = por %p67, %p68
      %p70 = scmp.ne.s32.totalorder %s59, %s62
      %p71 = scmp.eq.s32.totalorder %s28, 1
      %p72 = por %p70, %p71
      %p73 = scmp.ne.s32.totalorder %s62, %s63
      %p74 = scmp.eq.s32.totalorder %s28, 0
      %p75 = por %p73, %p74
      %p76 = scmp.ne.s32.totalorder %s62, %s63
      %p77 = scmp.eq.s32.totalorder %s29, 1
      %p78 = por %p76, %p77
      %p80 = scmp.ne.s32.totalorder %s63, %s79
      %p81 = scmp.eq.s32.totalorder %s29, 0
      %p82 = por %p80, %p81
      %s84 = sadd.s32 %s83, 1
      %p87 = scmp.eq.s32.totalorder %s23, 1
      %p88 = scmp.ne.s32.totalorder %s83, %s85
      %p89 = scmp.eq.s32.totalorder %s23, 0
      %p90 = por %p88, %p89
      %p91 = scmp.ne.s32.totalorder %s83, %s85
      %p92 = scmp.eq.s32.totalorder %s28, 1
      %p93 = por %p91, %p92
      %p94 = scmp.ne.s32.totalorder %s85, %s86
      %p95 = scmp.eq.s32.totalorder %s28, 0
      %p96 = por %p94, %p95
      %p97 = scmp.ne.s32.totalorder %s85, %s86
      %p98 = scmp.eq.s32.totalorder %s29, 1
      %p99 = por %p97, %p98
      %p101 = scmp.ne.s32.totalorder %s86, %s100
      %p102 = scmp.eq.s32.totalorder %s29, 0
      %p103 = por %p101, %p102
      %s105 = sadd.s32 %s104, 1
      %p108 = scmp.eq.s32.totalorder %s23, 1
      %p109 = scmp.ne.s32.totalorder %s104, %s106
      %p110 = scmp.eq.s32.totalorder %s23, 0
      %p111 = por %p109, %p110
      %p112 = scmp.ne.s32.totalorder %s104, %s106
      %p113 = scmp.eq.s32.totalorder %s28, 1
      %p114 = por %p112, %p113
      %p115 = scmp.ne.s32.totalorder %s106, %s107
      %p116 = scmp.eq.s32.totalorder %s28, 0
      %p117 = por %p115, %p116
      %p118 = scmp.ne.s32.totalorder %s106, %s107
      %p119 = scmp.eq.s32.totalorder %s29, 1
      %p120 = por %p118, %p119
      %p122 = scmp.ne.s32.totalorder %s107, %s121
      %p123 = scmp.eq.s32.totalorder %s29, 0
      %p124 = por %p122, %p123
      %s126 = sadd.s32 %s125, 1
      %p129 = scmp.eq.s32.totalorder %s23, 1
      %p130 = scmp.ne.s32.totalorder %s125, %s127
      %p131 = scmp.eq.s32.totalorder %s23, 0
      %p132 = por %p130, %p131
      %p133 = scmp.ne.s32.totalorder %s125, %s127
      %p134 = scmp.eq.s32.totalorder %s28, 1
      %p135 = por %p133, %p134
      %p136 = scmp.ne.s32.totalorder %s127, %s128
      %p137 = scmp.eq.s32.totalorder %s28, 0
      %p138 = por %p136, %p137
      %p139 = scmp.ne.s32.totalorder %s127, %s128
      %p140 = scmp.eq.s32.totalorder %s29, 1
      %p141 = por %p139, %p140
      %p143 = scmp.ne.s32.totalorder %s128, %s142
      %p144 = scmp.eq.s32.totalorder %s29, 0
      %p145 = por %p143, %p144
      %s147 = sadd.s32 %s146, 1
      %p150 = scmp.eq.s32.totalorder %s23, 1
      %p151 = scmp.ne.s32.totalorder %s146, %s148
      %p152 = scmp.eq.s32.totalorder %s23, 0
      %p153 = por %p151, %p152
      %p154 = scmp.ne.s32.totalorder %s146, %s148
      %p155 = scmp.eq.s32.totalorder %s28, 1
      %p156 = por %p154, %p155
      %p157 = scmp.ne.s32.totalorder %s148, %s149
      %p158 = scmp.eq.s32.totalorder %s28, 0
      %p159 = por %p157, %p158
      %p160 = scmp.ne.s32.totalorder %s148, %s149
      %p161 = scmp.eq.s32.totalorder %s29, 1
      %p162 = por %p160, %p161
      %p164 = scmp.ne.s32.totalorder %s149, %s163
      %p165 = scmp.eq.s32.totalorder %s29, 0
      %p166 = por %p164, %p165
      %s168 = sadd.s32 %s167, 1
      %p171 = scmp.eq.s32.totalorder %s23, 1
      %p172 = scmp.ne.s32.totalorder %s167, %s169
      %p173 = scmp.eq.s32.totalorder %s23, 0
      %p174 = por %p172, %p173
      %p175 = scmp.ne.s32.totalorder %s167, %s169
      %p176 = scmp.eq.s32.totalorder %s28, 1
      %p177 = por %p175, %p176
      %p178 = scmp.ne.s32.totalorder %s169, %s170
      %p179 = scmp.eq.s32.totalorder %s28, 0
      %p180 = por %p178, %p179
      %p181 = scmp.ne.s32.totalorder %s169, %s170
      %p182 = scmp.eq.s32.totalorder %s29, 1
      %p183 = por %p181, %p182
      %p185 = scmp.ne.s32.totalorder %s170, %s184
      %p186 = scmp.eq.s32.totalorder %s29, 0
      %p187 = por %p185, %p186
      %s189 = sadd.s32 %s188, 1
      %p192 = scmp.eq.s32.totalorder %s23, 1
      %p193 = scmp.ne.s32.totalorder %s188, %s190
      %p194 = scmp.eq.s32.totalorder %s23, 0
      %p195 = por %p193, %p194
      %p196 = scmp.ne.s32.totalorder %s188, %s190
      %p197 = scmp.eq.s32.totalorder %s28, 1
      %p198 = por %p196, %p197
      %p199 = scmp.ne.s32.totalorder %s190, %s191
      %p200 = scmp.eq.s32.totalorder %s28, 0
      %p201 = por %p199, %p200
      %p202 = scmp.ne.s32.totalorder %s190, %s191
      %p203 = scmp.eq.s32.totalorder %s29, 1
      %p204 = por %p202, %p203
      %p206 = scmp.ne.s32.totalorder %s191, %s205
      %p207 = scmp.eq.s32.totalorder %s29, 0
      %p208 = por %p206, %p207
      %s210 = sadd.s32 %s209, 1
      %p213 = scmp.eq.s32.totalorder %s23, 1
      %p214 = scmp.ne.s32.totalorder %s209, %s211
      %p215 = scmp.eq.s32.totalorder %s23, 0
      %p216 = por %p214, %p215
      %p217 = scmp.ne.s32.totalorder %s209, %s211
      %p218 = scmp.eq.s32.totalorder %s28, 1
      %p219 = por %p217, %p218
      %p220 = scmp.ne.s32.totalorder %s211, %s212
      %p221 = scmp.eq.s32.totalorder %s28, 0
      %p222 = por %p220, %p221
      %p223 = scmp.ne.s32.totalorder %s211, %s212
      %p224 = scmp.eq.s32.totalorder %s29, 1
      %p225 = por %p223, %p224
      %p227 = scmp.ne.s32.totalorder %s212, %s226
      %p228 = scmp.eq.s32.totalorder %s29, 0
      %p229 = por %p227, %p228
      %s231 = sadd.s32 %s230, 1
      %p234 = scmp.eq.s32.totalorder %s23, 1
      %p235 = scmp.ne.s32.totalorder %s230, %s232
      %p236 = scmp.eq.s32.totalorder %s23, 0
      %p237 = por %p235, %p236
      %p238 = scmp.ne.s32.totalorder %s230, %s232
      %p239 = scmp.eq.s32.totalorder %s28, 1
      %p240 = por %p238, %p239
      %p241 = scmp.ne.s32.totalorder %s232, %s233
      %p242 = scmp.eq.s32.totalorder %s28, 0
      %p243 = por %p241, %p242
      %p244 = scmp.ne.s32.totalorder %s232, %s233
      %p245 = scmp.eq.s32.totalorder %s29, 1
      %p246 = por %p244, %p245
      %p248 = scmp.ne.s32.totalorder %s233, %s247
      %p249 = scmp.eq.s32.totalorder %s29, 0
      %p250 = por %p248, %p249
      %s252 = sadd.s32 %s251, 1
      %p255 = scmp.eq.s32.totalorder %s23, 1
      %p256 = scmp.ne.s32.totalorder %s251, %s253
      %p257 = scmp.eq.s32.totalorder %s23, 0
      %p258 = por %p256, %p257
      %p259 = scmp.ne.s32.totalorder %s251, %s253
      %p260 = scmp.eq.s32.totalorder %s28, 1
      %p261 = por %p259, %p260
      %p262 = scmp.ne.s32.totalorder %s253, %s254
      %p263 = scmp.eq.s32.totalorder %s28, 0
      %p264 = por %p262, %p263
      %p265 = scmp.ne.s32.totalorder %s253, %s254
      %p266 = scmp.eq.s32.totalorder %s29, 1
      %p267 = por %p265, %p266
      %p269 = scmp.ne.s32.totalorder %s254, %s268
      %p270 = scmp.eq.s32.totalorder %s29, 0
      %p271 = por %p269, %p270
      %s273 = sadd.s32 %s272, 1
      %p276 = scmp.eq.s32.totalorder %s23, 1
      %p277 = scmp.ne.s32.totalorder %s272, %s274
      %p278 = scmp.eq.s32.totalorder %s23, 0
      %p279 = por %p277, %p278
      %p280 = scmp.ne.s32.totalorder %s272, %s274
      %p281 = scmp.eq.s32.totalorder %s28, 1
      %p282 = por %p280, %p281
      %p283 = scmp.ne.s32.totalorder %s274, %s275
      %p284 = scmp.eq.s32.totalorder %s28, 0
      %p285 = por %p283, %p284
      %p286 = scmp.ne.s32.totalorder %s274, %s275
      %p287 = scmp.eq.s32.totalorder %s29, 1
      %p288 = por %p286, %p287
      %p290 = scmp.ne.s32.totalorder %s275, %s289
      %p291 = scmp.eq.s32.totalorder %s29, 0
      %p292 = por %p290, %p291
      %s294 = sadd.s32 %s293, 1
      %p297 = scmp.eq.s32.totalorder %s23, 1
      %p298 = scmp.ne.s32.totalorder %s293, %s295
      %p299 = scmp.eq.s32.totalorder %s23, 0
      %p300 = por %p298, %p299
      %p301 = scmp.ne.s32.totalorder %s293, %s295
      %p302 = scmp.eq.s32.totalorder %s28, 1
      %p303 = por %p301, %p302
      %p304 = scmp.ne.s32.totalorder %s295, %s296
      %p305 = scmp.eq.s32.totalorder %s28, 0
      %p306 = por %p304, %p305
      %p307 = scmp.ne.s32.totalorder %s295, %s296
      %p308 = scmp.eq.s32.totalorder %s29, 1
      %p309 = por %p307, %p308
      %p311 = scmp.ne.s32.totalorder %s296, %s310
      %p312 = scmp.eq.s32.totalorder %s29, 0
      %p313 = por %p311, %p312
      %s315 = sadd.s32 %s314, 1
      %p318 = scmp.eq.s32.totalorder %s23, 1
      %p319 = scmp.ne.s32.totalorder %s314, %s316
      %p320 = scmp.eq.s32.totalorder %s23, 0
      %p321 = por %p319, %p320
      %p322 = scmp.ne.s32.totalorder %s314, %s316
      %p323 = scmp.eq.s32.totalorder %s28, 1
      %p324 = por %p322, %p323
      %p325 = scmp.ne.s32.totalorder %s316, %s317
      %p326 = scmp.eq.s32.totalorder %s28, 0
      %p327 = por %p325, %p326
      %p328 = scmp.ne.s32.totalorder %s316, %s317
      %p329 = scmp.eq.s32.totalorder %s29, 1
      %p330 = por %p328, %p329
      %p332 = scmp.ne.s32.totalorder %s317, %s331
      %p333 = scmp.eq.s32.totalorder %s29, 0
      %p334 = por %p332, %p333
      %s335 = ssub.s32 %s23, %s30
      %p336 = scmp.eq.s32.totalorder %s335, 0
      %s338 = sadd.s32 %s337, 1
      %s339 = scalar_select %p336, %s337, %s338
      %p342 = pneg %p336
      %p343 = scmp.eq.s32.totalorder %s23, 1
      %p344 = por %p342, %p343
      %p345 = scmp.ne.s32.totalorder %s337, %s340
      %p346 = scmp.eq.s32.totalorder %s23, 0
      %p347 = por %p345, %p346
      %p348 = scmp.ne.s32.totalorder %s337, %s340
      %p349 = scmp.eq.s32.totalorder %s28, 1
      %p350 = por %p348, %p349
      %p351 = scmp.ne.s32.totalorder %s340, %s341
      %p352 = scmp.eq.s32.totalorder %s28, 0
      %p353 = por %p351, %p352
      %p354 = scmp.ne.s32.totalorder %s340, %s341
      %p355 = scmp.eq.s32.totalorder %s29, 1
      %p356 = por %p354, %p355
      %p358 = scmp.ne.s32.totalorder %s341, %s357
      %p359 = scmp.eq.s32.totalorder %s29, 0
      %p360 = por %p358, %p359
      %p361 = scmp.le.s32.totalorder 1, %s23
      %p362 = scmp.lt.s32.totalorder %s23, 3
      %p363 = pnand %p361, %p362
      %p364 = pneg %p363
      // Predicated region
      $region9: #{tpu_custom_call.1} parent=5 // pred_check
        _
      $region10: #{tpu_custom_call.1} parent=5 // pred_check_branch
        %366 = sbr.rel (%p363) target = $region12
      $region11: #{tpu_custom_call.1} parent=5 // pred_region
        %s367 = ssub.s32 %s23, 1
        // Predicated region
        $region13: #{tpu_custom_call.1} parent=11 // pred_check
          %p368 = pneg %p96
        $region14: #{tpu_custom_call.1} parent=11 // pred_check_branch
          %370 = sbr.rel (%p368) target = $region16
        $region15: #{tpu_custom_call.1} parent=11 // pred_region
          %s372 = ssub.s32 9216, 9216
          %373 = vsyncadd [#allocation4], %s372
          %s374 = sshll.u32 [#allocation3], 4
          %s375 = int_to_ptr.vmem [resolvable:$true] %s374
          %380 = dma.hbm_to_vmem [thread:$0]  %s2, 9216, %s375, [#allocation4], 192, 192, 12
        $region16: #{tpu_custom_call.1} parent=11 // pred_fallthru
          _
        // Predicated region
        $region17: #{tpu_custom_call.1} parent=11 // pred_check
          %p381 = pneg %p117
        $region18: #{tpu_custom_call.1} parent=11 // pred_check_branch
          %383 = sbr.rel (%p381) target = $region20
        $region19: #{tpu_custom_call.1} parent=11 // pred_region
          _
        $region20: #{tpu_custom_call.1} parent=11 // pred_fallthru
          _
        // Predicated region
        $region21: #{tpu_custom_call.1} parent=11 // pred_check
          %p384 = pneg %p138
        $region22: #{tpu_custom_call.1} parent=11 // pred_check_branch
          %386 = sbr.rel (%p384) target = $region24
        $region23: #{tpu_custom_call.1} parent=11 // pred_region
          _
        $region24: #{tpu_custom_call.1} parent=11 // pred_fallthru
          _
        // Predicated region
        $region25: #{tpu_custom_call.1} parent=11 // pred_check
          %p387 = pneg %p159
        $region26: #{tpu_custom_call.1} parent=11 // pred_check_branch
          %389 = sbr.rel (%p387) target = $region28
        $region27: #{tpu_custom_call.1} parent=11 // pred_region
          _
        $region28: #{tpu_custom_call.1} parent=11 // pred_fallthru
          _
        // Predicated region
        $region29: #{tpu_custom_call.1} parent=11 // pred_check
          %p390 = pneg %p180
        $region30: #{tpu_custom_call.1} parent=11 // pred_check_branch
          %392 = sbr.rel (%p390) target = $region32
        $region31: #{tpu_custom_call.1} parent=11 // pred_region
          _
        $region32: #{tpu_custom_call.1} parent=11 // pred_fallthru
          _
        // Predicated region
        $region33: #{tpu_custom_call.1} parent=11 // pred_check
          %p393 = pneg %p201
        $region34: #{tpu_custom_call.1} parent=11 // pred_check_branch
          %395 = sbr.rel (%p393) target = $region36
        $region35: #{tpu_custom_call.1} parent=11 // pred_region
          _
        $region36: #{tpu_custom_call.1} parent=11 // pred_fallthru
          _
        // Predicated region
        $region37: #{tpu_custom_call.1} parent=11 // pred_check
          %p396 = pneg %p222
        $region38: #{tpu_custom_call.1} parent=11 // pred_check_branch
          %398 = sbr.rel (%p396) target = $region40
        $region39: #{tpu_custom_call.1} parent=11 // pred_region
          _
        $region40: #{tpu_custom_call.1} parent=11 // pred_fallthru
          _
        // Predicated region
        $region41: #{tpu_custom_call.1} parent=11 // pred_check
          %p399 = pneg %p243
        $region42: #{tpu_custom_call.1} parent=11 // pred_check_branch
          %401 = sbr.rel (%p399) target = $region44
        $region43: #{tpu_custom_call.1} parent=11 // pred_region
          _
        $region44: #{tpu_custom_call.1} parent=11 // pred_fallthru
          _
        // Predicated region
        $region45: #{tpu_custom_call.1} parent=11 // pred_check
          %p402 = pneg %p264
        $region46: #{tpu_custom_call.1} parent=11 // pred_check_branch
          %404 = sbr.rel (%p402) target = $region48
        $region47: #{tpu_custom_call.1} parent=11 // pred_region
          _
        $region48: #{tpu_custom_call.1} parent=11 // pred_fallthru
          _
        // Predicated region
        $region49: #{tpu_custom_call.1} parent=11 // pred_check
          %p405 = pneg %p285
        $region50: #{tpu_custom_call.1} parent=11 // pred_check_branch
          %407 = sbr.rel (%p405) target = $region52
        $region51: #{tpu_custom_call.1} parent=11 // pred_region
          _
        $region52: #{tpu_custom_call.1} parent=11 // pred_fallthru
          _
        // Predicated region
        $region53: #{tpu_custom_call.1} parent=11 // pred_check
          %p408 = pneg %p306
        $region54: #{tpu_custom_call.1} parent=11 // pred_check_branch
          %410 = sbr.rel (%p408) target = $region56
        $region55: #{tpu_custom_call.1} parent=11 // pred_region
          _
        $region56: #{tpu_custom_call.1} parent=11 // pred_fallthru
          _
        // Predicated region
        $region57: #{tpu_custom_call.1} parent=11 // pred_check
          %p411 = pneg %p327
        $region58: #{tpu_custom_call.1} parent=11 // pred_check_branch
          %413 = sbr.rel (%p411) target = $region60
        $region59: #{tpu_custom_call.1} parent=11 // pred_region
          _
        $region60: #{tpu_custom_call.1} parent=11 // pred_fallthru
          _
      $region12: #{tpu_custom_call.1} parent=5 // pred_fallthru
        _
      %p414 = scmp.lt.s32.totalorder %s23, 2
      // Predicated region
      $region61: #{tpu_custom_call.1} parent=5 // pred_check
        %p415 = pneg %p414
      $region62: #{tpu_custom_call.1} parent=5 // pred_check_branch
        %417 = sbr.rel (%p415) target = $region64
      $region63: #{tpu_custom_call.1} parent=5 // pred_region
        // Predicated region
        $region65: #{tpu_custom_call.1} parent=63 // pred_check
          %p418 = pneg %p43
        $region66: #{tpu_custom_call.1} parent=63 // pred_check_branch
          %420 = sbr.rel (%p418) target = $region68
        $region67: #{tpu_custom_call.1} parent=63 // pred_region
          %s421 = smul.u32 8, %s23
          %p422 = scmp.lt.s32.totalorder %s421, 15
          %s423 = scalar_select %p422, %s421, 15
          %s424 = smul.addr %s423, 18
          %s425 = smul.addr %s424, 8
          %s426 = scalar_lea.vmem %s0, %s425
          %s427 = smul.u32 8, %s23
        $region68: #{tpu_custom_call.1} parent=63 // pred_fallthru
          _
        // Predicated region
        $region69: #{tpu_custom_call.1} parent=63 // pred_check
          %p428 = pneg %p69
        $region70: #{tpu_custom_call.1} parent=63 // pred_check_branch
          %430 = sbr.rel (%p428) target = $region72
        $region71: #{tpu_custom_call.1} parent=63 // pred_region
          %p431 = scmp.lt.s32.totalorder %s23, 1
          %s432 = scalar_select %p431, %s23, 1
          %s433 = smul.addr %s432, 8
          %s434 = scalar_lea.vmem %s1, %s433
        $region72: #{tpu_custom_call.1} parent=63 // pred_fallthru
          _
      $region64: #{tpu_custom_call.1} parent=5 // pred_fallthru
        _
      %p435 = scmp.le.s32.totalorder 1, %s23
      %p436 = scmp.lt.s32.totalorder %s23, 3
      %p437 = pnand %p435, %p436
      %p438 = pneg %p437
      // Predicated region
      $region73: #{tpu_custom_call.1} parent=5 // pred_check
        _
      $region74: #{tpu_custom_call.1} parent=5 // pred_check_branch
        %440 = sbr.rel (%p437) target = $region76
      $region75: #{tpu_custom_call.1} parent=5 // pred_region
        %s441 = ssub.s32 %s23, 1
        // Predicated region
        $region77: #{tpu_custom_call.1} parent=75 // pred_check
          %p442 = pneg %p96
        $region78: #{tpu_custom_call.1} parent=75 // pred_check_branch
          %444 = sbr.rel (%p442) target = $region80
        $region79: #{tpu_custom_call.1} parent=75 // pred_region
          %445 = dma.done [#allocation4], 9216
        $region80: #{tpu_custom_call.1} parent=75 // pred_fallthru
          _
        %s446 = smul.u32 8, %s28
        %p447 = scmp.lt.s32.totalorder %s446, 15
        %s448 = scalar_select %p447, %s446, 15
        %s449 = smul.addr %s448, 18
        %s450 = smul.addr %s449, 8
        %s451 = scalar_lea.vmem %s0, %s450
        %p452 = pneg %p49
        %p453 = pneg %p46
        %p454 = scmp.lt.s32.totalorder %s28, 1
        %s455 = scalar_select %p454, %s28, 1
        %s456 = smul.addr %s455, 8
        %s457 = scalar_lea.vmem %s1, %s456
        %p458 = pneg %p75
        %p459 = pneg %p72
        %p460 = pneg %p96
        %p461 = pneg %p93
        %p462 = pneg %p117
        %p463 = pneg %p114
        %p464 = pneg %p138
        %p465 = pneg %p135
        %p466 = pneg %p159
        %p467 = pneg %p156
        %p468 = pneg %p180
        %p469 = pneg %p177
        %p470 = pneg %p201
        %p471 = pneg %p198
        %p472 = pneg %p222
        %p473 = pneg %p219
        %p474 = pneg %p243
        %p475 = pneg %p240
        %p476 = pneg %p264
        %p477 = pneg %p261
        %p478 = pneg %p285
        %p479 = pneg %p282
        %p480 = pneg %p306
        %p481 = pneg %p303
        %p482 = pneg %p327
        %p483 = pneg %p324
        %p484 = pneg %p353
        %p485 = pneg %p350
        %p486 = scmp.lt.s32.totalorder %s28, 1
        %s487 = scalar_select %p486, %s28, 1
        %s488 = smul.addr %s487, 8
        %s489 = scalar_lea.vmem %s14, %s488
        %s490 = smul.u32 8, %s28
        %p491 = scmp.lt.s32.totalorder %s490, 15
        %s492 = scalar_select %p491, %s490, 15
        %s493 = smul.addr %s492, 18
        %s494 = smul.addr %s493, 8
        %s495 = scalar_lea.vmem %s0, %s494
        %s496 = smul.u32 8, %s28
        %p497 = scmp.lt.s32.totalorder %s28, 1
        %s498 = scalar_select %p497, %s28, 1
        %s499 = smul.addr %s498, 8
        %s500 = scalar_lea.vmem %s1, %s499
        %p501 = scmp.lt.s32.totalorder %s28, 1
        %s502 = scalar_select %p501, %s28, 1
        %s503 = smul.addr %s502, 8
        %s504 = scalar_lea.vmem %s14, %s503
        %v506 = vld [vmem:[%s495] sm:$0xff]
        %v507 = vld [vmem:[%s495 + $0x8] sm:$0xff]
        %v508 = vld [vmem:[%s495 + $0x10] sm:$0xff]
        %v509 = vld [vmem:[%s495 + $0x18] sm:$0xff]
        %v510 = vld [vmem:[%s495 + $0x20] sm:$0xff]
        %v511 = vld [vmem:[%s495 + $0x28] sm:$0xff]
        %v512 = vld [vmem:[%s495 + $0x30] sm:$0xff]
        %v513 = vld [vmem:[%s495 + $0x38] sm:$0xff]
        %v514 = vld [vmem:[%s495 + $0x40] sm:$0xff]
        %v515 = vld [vmem:[%s495 + $0x48] sm:$0xff]
        %v516 = vld [vmem:[%s495 + $0x50] sm:$0xff]
        %v517 = vld [vmem:[%s495 + $0x58] sm:$0xff]
        %v518 = vld [vmem:[%s495 + $0x60] sm:$0xff]
        %v519 = vld [vmem:[%s495 + $0x68] sm:$0xff]
        %v520 = vld [vmem:[%s495 + $0x70] sm:$0xff]
        %v521 = vld [vmem:[%s495 + $0x78] sm:$0xff]
        %v522 = vld [vmem:[%s495 + $0x80] sm:$0xff]
        %v523 = vld [vmem:[%s495 + $0x88] sm:$0xff]
        %v524 = vld [vmem:[%s495 + $0x90] sm:$0xff]
        %v525 = vld [vmem:[%s495 + $0x98] sm:$0xff]
        %v526 = vld [vmem:[%s495 + $0xa0] sm:$0xff]
        %v527 = vld [vmem:[%s495 + $0xa8] sm:$0xff]
        %v528 = vld [vmem:[%s495 + $0xb0] sm:$0xff]
        %v529 = vld [vmem:[%s495 + $0xb8] sm:$0xff]
        %v530 = vld [vmem:[%s495 + $0xc0] sm:$0xff]
        %v531 = vld [vmem:[%s495 + $0xc8] sm:$0xff]
        %v532 = vld [vmem:[%s495 + $0xd0] sm:$0xff]
        %v533 = vld [vmem:[%s495 + $0xd8] sm:$0xff]
        %v534 = vld [vmem:[%s495 + $0xe0] sm:$0xff]
        %v535 = vld [vmem:[%s495 + $0xe8] sm:$0xff]
        %v536 = vld [vmem:[%s495 + $0xf0] sm:$0xff]
        %v537 = vld [vmem:[%s495 + $0xf8] sm:$0xff]
        %v538 = vld [vmem:[%s495 + $0x100] sm:$0xff]
        %v539 = vld [vmem:[%s495 + $0x108] sm:$0xff]
        %v540 = vld [vmem:[%s495 + $0x110] sm:$0xff]
        %v541 = vld [vmem:[%s495 + $0x118] sm:$0xff]
        %v542 = vld [vmem:[%s495 + $0x120] sm:$0xff]
        %v543 = vld [vmem:[%s495 + $0x128] sm:$0xff]
        %v544 = vld [vmem:[%s495 + $0x130] sm:$0xff]
        %v545 = vld [vmem:[%s495 + $0x138] sm:$0xff]
        %v546 = vld [vmem:[%s495 + $0x140] sm:$0xff]
        %v547 = vld [vmem:[%s495 + $0x148] sm:$0xff]
        %v548 = vld [vmem:[%s495 + $0x150] sm:$0xff]
        %v549 = vld [vmem:[%s495 + $0x158] sm:$0xff]
        %v550 = vld [vmem:[%s495 + $0x160] sm:$0xff]
        %v551 = vld [vmem:[%s495 + $0x168] sm:$0xff]
        %v552 = vld [vmem:[%s495 + $0x170] sm:$0xff]
        %v553 = vld [vmem:[%s495 + $0x178] sm:$0xff]
        %v554 = vld [vmem:[%s495 + $0x180] sm:$0xff]
        %v555 = vld [vmem:[%s495 + $0x188] sm:$0xff]
        %v556 = vld [vmem:[%s495 + $0x190] sm:$0xff]
        %v557 = vld [vmem:[%s495 + $0x198] sm:$0xff]
        %v558 = vld [vmem:[%s495 + $0x1a0] sm:$0xff]
        %v559 = vld [vmem:[%s495 + $0x1a8] sm:$0xff]
        %v560 = vld [vmem:[%s495 + $0x1b0] sm:$0xff]
        %v561 = vld [vmem:[%s495 + $0x1b8] sm:$0xff]
        %v562 = vld [vmem:[%s495 + $0x1c0] sm:$0xff]
        %v563 = vld [vmem:[%s495 + $0x1c8] sm:$0xff]
        %v564 = vld [vmem:[%s495 + $0x1d0] sm:$0xff]
        %v565 = vld [vmem:[%s495 + $0x1d8] sm:$0xff]
        %v566 = vld [vmem:[%s495 + $0x1e0] sm:$0xff]
        %v567 = vld [vmem:[%s495 + $0x1e8] sm:$0xff]
        %v568 = vld [vmem:[%s495 + $0x1f0] sm:$0xff]
        %v569 = vld [vmem:[%s495 + $0x1f8] sm:$0xff]
        %v570 = vld [vmem:[%s495 + $0x200] sm:$0xff]
        %v571 = vld [vmem:[%s495 + $0x208] sm:$0xff]
        %v572 = vld [vmem:[%s495 + $0x210] sm:$0xff]
        %v573 = vld [vmem:[%s495 + $0x218] sm:$0xff]
        %v574 = vld [vmem:[%s495 + $0x220] sm:$0xff]
        %v575 = vld [vmem:[%s495 + $0x228] sm:$0xff]
        %v576 = vld [vmem:[%s495 + $0x230] sm:$0xff]
        %v577 = vld [vmem:[%s495 + $0x238] sm:$0xff]
        %v578 = vld [vmem:[%s495 + $0x240] sm:$0xff]
        %v579 = vld [vmem:[%s495 + $0x248] sm:$0xff]
        %v580 = vld [vmem:[%s495 + $0x250] sm:$0xff]
        %v581 = vld [vmem:[%s495 + $0x258] sm:$0xff]
        %v582 = vld [vmem:[%s495 + $0x260] sm:$0xff]
        %v583 = vld [vmem:[%s495 + $0x268] sm:$0xff]
        %v584 = vld [vmem:[%s495 + $0x270] sm:$0xff]
        %v585 = vld [vmem:[%s495 + $0x278] sm:$0xff]
        %v586 = vld [vmem:[%s495 + $0x280] sm:$0xff]
        %v587 = vld [vmem:[%s495 + $0x288] sm:$0xff]
        %v588 = vld [vmem:[%s495 + $0x290] sm:$0xff]
        %v589 = vld [vmem:[%s495 + $0x298] sm:$0xff]
        %v590 = vld [vmem:[%s495 + $0x2a0] sm:$0xff]
        %v591 = vld [vmem:[%s495 + $0x2a8] sm:$0xff]
        %v592 = vld [vmem:[%s495 + $0x2b0] sm:$0xff]
        %v593 = vld [vmem:[%s495 + $0x2b8] sm:$0xff]
        %v594 = vld [vmem:[%s495 + $0x2c0] sm:$0xff]
        %v595 = vld [vmem:[%s495 + $0x2c8] sm:$0xff]
        %v596 = vld [vmem:[%s495 + $0x2d0] sm:$0xff]
        %v597 = vld [vmem:[%s495 + $0x2d8] sm:$0xff]
        %v598 = vld [vmem:[%s495 + $0x2e0] sm:$0xff]
        %v599 = vld [vmem:[%s495 + $0x2e8] sm:$0xff]
        %v600 = vld [vmem:[%s495 + $0x2f0] sm:$0xff]
        %v601 = vld [vmem:[%s495 + $0x2f8] sm:$0xff]
        %v602 = vld [vmem:[%s495 + $0x300] sm:$0xff]
        %v603 = vld [vmem:[%s495 + $0x308] sm:$0xff]
        %v604 = vld [vmem:[%s495 + $0x310] sm:$0xff]
        %v605 = vld [vmem:[%s495 + $0x318] sm:$0xff]
        %v606 = vld [vmem:[%s495 + $0x320] sm:$0xff]
        %v607 = vld [vmem:[%s495 + $0x328] sm:$0xff]
        %v608 = vld [vmem:[%s495 + $0x330] sm:$0xff]
        %v609 = vld [vmem:[%s495 + $0x338] sm:$0xff]
        %v610 = vld [vmem:[%s495 + $0x340] sm:$0xff]
        %v611 = vld [vmem:[%s495 + $0x348] sm:$0xff]
        %v612 = vld [vmem:[%s495 + $0x350] sm:$0xff]
        %v613 = vld [vmem:[%s495 + $0x358] sm:$0xff]
        %v614 = vld [vmem:[%s495 + $0x360] sm:$0xff]
        %v615 = vld [vmem:[%s495 + $0x368] sm:$0xff]
        %v616 = vld [vmem:[%s495 + $0x370] sm:$0xff]
        %v617 = vld [vmem:[%s495 + $0x378] sm:$0xff]
        %v618 = vld [vmem:[%s495 + $0x380] sm:$0xff]
        %v619 = vld [vmem:[%s495 + $0x388] sm:$0xff]
        %v620 = vld [vmem:[%s495 + $0x390] sm:$0xff]
        %v621 = vld [vmem:[%s495 + $0x398] sm:$0xff]
        %v622 = vld [vmem:[%s495 + $0x3a0] sm:$0xff]
        %v623 = vld [vmem:[%s495 + $0x3a8] sm:$0xff]
        %v624 = vld [vmem:[%s495 + $0x3b0] sm:$0xff]
        %v625 = vld [vmem:[%s495 + $0x3b8] sm:$0xff]
        %v626 = vld [vmem:[%s495 + $0x3c0] sm:$0xff]
        %v627 = vld [vmem:[%s495 + $0x3c8] sm:$0xff]
        %v628 = vld [vmem:[%s495 + $0x3d0] sm:$0xff]
        %v629 = vld [vmem:[%s495 + $0x3d8] sm:$0xff]
        %v630 = vld [vmem:[%s495 + $0x3e0] sm:$0xff]
        %v631 = vld [vmem:[%s495 + $0x3e8] sm:$0xff]
        %v632 = vld [vmem:[%s495 + $0x3f0] sm:$0xff]
        %v633 = vld [vmem:[%s495 + $0x3f8] sm:$0xff]
        %v634 = vld [vmem:[%s495 + $0x400] sm:$0xff]
        %v635 = vld [vmem:[%s495 + $0x408] sm:$0xff]
        %v636 = vld [vmem:[%s495 + $0x410] sm:$0xff]
        %v637 = vld [vmem:[%s495 + $0x418] sm:$0xff]
        %v638 = vld [vmem:[%s495 + $0x420] sm:$0xff]
        %v639 = vld [vmem:[%s495 + $0x428] sm:$0xff]
        %v640 = vld [vmem:[%s495 + $0x430] sm:$0xff]
        %v641 = vld [vmem:[%s495 + $0x438] sm:$0xff]
        %v642 = vld [vmem:[%s495 + $0x440] sm:$0xff]
        %v643 = vld [vmem:[%s495 + $0x448] sm:$0xff]
        %v644 = vld [vmem:[%s495 + $0x450] sm:$0xff]
        %v645 = vld [vmem:[%s495 + $0x458] sm:$0xff]
        %v646 = vld [vmem:[%s495 + $0x460] sm:$0xff]
        %v647 = vld [vmem:[%s495 + $0x468] sm:$0xff]
        %v648 = vld [vmem:[%s495 + $0x470] sm:$0xff]
        %v649 = vld [vmem:[%s495 + $0x478] sm:$0xff]
        %v650 = vpack.c.bf16 %v509, %v506
        %v651 = vpack.c.bf16 %v510, %v507
        %v652 = vpack.c.bf16 %v511, %v508
        %v653 = vpack.c.bf16 %v515, %v512
        %v654 = vpack.c.bf16 %v516, %v513
        %v655 = vpack.c.bf16 %v517, %v514
        %v656 = vpack.c.bf16 %v521, %v518
        %v657 = vpack.c.bf16 %v522, %v519
        %v658 = vpack.c.bf16 %v523, %v520
        %v659 = vpack.c.bf16 %v527, %v524
        %v660 = vpack.c.bf16 %v528, %v525
        %v661 = vpack.c.bf16 %v529, %v526
        %v662 = vpack.c.bf16 %v533, %v530
        %v663 = vpack.c.bf16 %v534, %v531
        %v664 = vpack.c.bf16 %v535, %v532
        %v665 = vpack.c.bf16 %v539, %v536
        %v666 = vpack.c.bf16 %v540, %v537
        %v667 = vpack.c.bf16 %v541, %v538
        %v668 = vpack.c.bf16 %v545, %v542
        %v669 = vpack.c.bf16 %v546, %v543
        %v670 = vpack.c.bf16 %v547, %v544
        %v671 = vpack.c.bf16 %v551, %v548
        %v672 = vpack.c.bf16 %v552, %v549
        %v673 = vpack.c.bf16 %v553, %v550
        %v674 = vpack.c.bf16 %v557, %v554
        %v675 = vpack.c.bf16 %v558, %v555
        %v676 = vpack.c.bf16 %v559, %v556
        %v677 = vpack.c.bf16 %v563, %v560
        %v678 = vpack.c.bf16 %v564, %v561
        %v679 = vpack.c.bf16 %v565, %v562
        %v680 = vpack.c.bf16 %v569, %v566
        %v681 = vpack.c.bf16 %v570, %v567
        %v682 = vpack.c.bf16 %v571, %v568
        %v683 = vpack.c.bf16 %v575, %v572
        %v684 = vpack.c.bf16 %v576, %v573
        %v685 = vpack.c.bf16 %v577, %v574
        %v686 = vpack.c.bf16 %v581, %v578
        %v687 = vpack.c.bf16 %v582, %v579
        %v688 = vpack.c.bf16 %v583, %v580
        %v689 = vpack.c.bf16 %v587, %v584
        %v690 = vpack.c.bf16 %v588, %v585
        %v691 = vpack.c.bf16 %v589, %v586
        %v692 = vpack.c.bf16 %v593, %v590
        %v693 = vpack.c.bf16 %v594, %v591
        %v694 = vpack.c.bf16 %v595, %v592
        %v695 = vpack.c.bf16 %v599, %v596
        %v696 = vpack.c.bf16 %v600, %v597
        %v697 = vpack.c.bf16 %v601, %v598
        %v698 = vpack.c.bf16 %v605, %v602
        %v699 = vpack.c.bf16 %v606, %v603
        %v700 = vpack.c.bf16 %v607, %v604
        %v701 = vpack.c.bf16 %v611, %v608
        %v702 = vpack.c.bf16 %v612, %v609
        %v703 = vpack.c.bf16 %v613, %v610
        %v704 = vpack.c.bf16 %v617, %v614
        %v705 = vpack.c.bf16 %v618, %v615
        %v706 = vpack.c.bf16 %v619, %v616
        %v707 = vpack.c.bf16 %v623, %v620
        %v708 = vpack.c.bf16 %v624, %v621
        %v709 = vpack.c.bf16 %v625, %v622
        %v710 = vpack.c.bf16 %v629, %v626
        %v711 = vpack.c.bf16 %v630, %v627
        %v712 = vpack.c.bf16 %v631, %v628
        %v713 = vpack.c.bf16 %v635, %v632
        %v714 = vpack.c.bf16 %v636, %v633
        %v715 = vpack.c.bf16 %v637, %v634
        %v716 = vpack.c.bf16 %v641, %v638
        %v717 = vpack.c.bf16 %v642, %v639
        %v718 = vpack.c.bf16 %v643, %v640
        %v719 = vpack.c.bf16 %v647, %v644
        %v720 = vpack.c.bf16 %v648, %v645
        %v721 = vpack.c.bf16 %v649, %v646
        %v722 = vld [vmem:[#allocation3] sm:$0xff]
        %v723 = vld [vmem:[#allocation3 + $0x8] sm:$0xf]
        %v724 = vld [vmem:[#allocation3 + $0xc] sm:$0xff]
        %v725 = vld [vmem:[#allocation3 + $0x14] sm:$0xf]
        %v726 = vld [vmem:[#allocation3 + $0x18] sm:$0xff]
        %v727 = vld [vmem:[#allocation3 + $0x20] sm:$0xf]
        %v728 = vld [vmem:[#allocation3 + $0x24] sm:$0xff]
        %v729 = vld [vmem:[#allocation3 + $0x2c] sm:$0xf]
        %v730 = vld [vmem:[#allocation3 + $0x30] sm:$0xff]
        %v731 = vld [vmem:[#allocation3 + $0x38] sm:$0xf]
        %v732 = vld [vmem:[#allocation3 + $0x3c] sm:$0xff]
        %v733 = vld [vmem:[#allocation3 + $0x44] sm:$0xf]
        %v734 = vld [vmem:[#allocation3 + $0x48] sm:$0xff]
        %v735 = vld [vmem:[#allocation3 + $0x50] sm:$0xf]
        %v736 = vld [vmem:[#allocation3 + $0x54] sm:$0xff]
        %v737 = vld [vmem:[#allocation3 + $0x5c] sm:$0xf]
        %v738 = vld [vmem:[#allocation3 + $0x60] sm:$0xff]
        %v739 = vld [vmem:[#allocation3 + $0x68] sm:$0xf]
        %v740 = vld [vmem:[#allocation3 + $0x6c] sm:$0xff]
        %v741 = vld [vmem:[#allocation3 + $0x74] sm:$0xf]
        %v742 = vld [vmem:[#allocation3 + $0x78] sm:$0xff]
        %v743 = vld [vmem:[#allocation3 + $0x80] sm:$0xf]
        %v744 = vld [vmem:[#allocation3 + $0x84] sm:$0xff]
        %v745 = vld [vmem:[#allocation3 + $0x8c] sm:$0xf]
        %v746 = vld [vmem:[#allocation3 + $0x90] sm:$0xff]
        %v747 = vld [vmem:[#allocation3 + $0x98] sm:$0xf]
        %v748 = vld [vmem:[#allocation3 + $0x9c] sm:$0xff]
        %v749 = vld [vmem:[#allocation3 + $0xa4] sm:$0xf]
        %v750 = vld [vmem:[#allocation3 + $0xa8] sm:$0xff]
        %v751 = vld [vmem:[#allocation3 + $0xb0] sm:$0xf]
        %v752 = vld [vmem:[#allocation3 + $0xb4] sm:$0xff]
        %v753 = vld [vmem:[#allocation3 + $0xbc] sm:$0xf]
        %v754 = vld [vmem:[#allocation3 + $0xc0] sm:$0xff]
        %v755 = vld [vmem:[#allocation3 + $0xc8] sm:$0xf]
        %v756 = vld [vmem:[#allocation3 + $0xcc] sm:$0xff]
        %v757 = vld [vmem:[#allocation3 + $0xd4] sm:$0xf]
        %v758 = vld [vmem:[#allocation3 + $0xd8] sm:$0xff]
        %v759 = vld [vmem:[#allocation3 + $0xe0] sm:$0xf]
        %v760 = vld [vmem:[#allocation3 + $0xe4] sm:$0xff]
        %v761 = vld [vmem:[#allocation3 + $0xec] sm:$0xf]
        %v762 = vld [vmem:[#allocation3 + $0xf0] sm:$0xff]
        %v763 = vld [vmem:[#allocation3 + $0xf8] sm:$0xf]
        %v764 = vld [vmem:[#allocation3 + $0xfc] sm:$0xff]
        %v765 = vld [vmem:[#allocation3 + $0x104] sm:$0xf]
        %v766 = vld [vmem:[#allocation3 + $0x108] sm:$0xff]
        %v767 = vld [vmem:[#allocation3 + $0x110] sm:$0xf]
        %v768 = vld [vmem:[#allocation3 + $0x114] sm:$0xff]
        %v769 = vld [vmem:[#allocation3 + $0x11c] sm:$0xf]
        %v770 = vld [vmem:[#allocation3 + $0x120] sm:$0xff]
        %v771 = vld [vmem:[#allocation3 + $0x128] sm:$0xf]
        %v772 = vld [vmem:[#allocation3 + $0x12c] sm:$0xff]
        %v773 = vld [vmem:[#allocation3 + $0x134] sm:$0xf]
        %v774 = vld [vmem:[#allocation3 + $0x138] sm:$0xff]
        %v775 = vld [vmem:[#allocation3 + $0x140] sm:$0xf]
        %v776 = vld [vmem:[#allocation3 + $0x144] sm:$0xff]
        %v777 = vld [vmem:[#allocation3 + $0x14c] sm:$0xf]
        %v778 = vld [vmem:[#allocation3 + $0x150] sm:$0xff]
        %v779 = vld [vmem:[#allocation3 + $0x158] sm:$0xf]
        %v780 = vld [vmem:[#allocation3 + $0x15c] sm:$0xff]
        %v781 = vld [vmem:[#allocation3 + $0x164] sm:$0xf]
        %v782 = vld [vmem:[#allocation3 + $0x168] sm:$0xff]
        %v783 = vld [vmem:[#allocation3 + $0x170] sm:$0xf]
        %v784 = vld [vmem:[#allocation3 + $0x174] sm:$0xff]
        %v785 = vld [vmem:[#allocation3 + $0x17c] sm:$0xf]
        %v786 = vld [vmem:[#allocation3 + $0x180] sm:$0xff]
        %v787 = vld [vmem:[#allocation3 + $0x188] sm:$0xf]
        %v788 = vld [vmem:[#allocation3 + $0x18c] sm:$0xff]
        %v789 = vld [vmem:[#allocation3 + $0x194] sm:$0xf]
        %v790 = vld [vmem:[#allocation3 + $0x198] sm:$0xff]
        %v791 = vld [vmem:[#allocation3 + $0x1a0] sm:$0xf]
        %v792 = vld [vmem:[#allocation3 + $0x1a4] sm:$0xff]
        %v793 = vld [vmem:[#allocation3 + $0x1ac] sm:$0xf]
        %v794 = vld [vmem:[#allocation3 + $0x1b0] sm:$0xff]
        %v795 = vld [vmem:[#allocation3 + $0x1b8] sm:$0xf]
        %v796 = vld [vmem:[#allocation3 + $0x1bc] sm:$0xff]
        %v797 = vld [vmem:[#allocation3 + $0x1c4] sm:$0xf]
        %v798 = vld [vmem:[#allocation3 + $0x1c8] sm:$0xff]
        %v799 = vld [vmem:[#allocation3 + $0x1d0] sm:$0xf]
        %v800 = vld [vmem:[#allocation3 + $0x1d4] sm:$0xff]
        %v801 = vld [vmem:[#allocation3 + $0x1dc] sm:$0xf]
        %v802 = vld [vmem:[#allocation3 + $0x1e0] sm:$0xff]
        %v803 = vld [vmem:[#allocation3 + $0x1e8] sm:$0xf]
        %v804 = vld [vmem:[#allocation3 + $0x1ec] sm:$0xff]
        %v805 = vld [vmem:[#allocation3 + $0x1f4] sm:$0xf]
        %v806 = vld [vmem:[#allocation3 + $0x1f8] sm:$0xff]
        %v807 = vld [vmem:[#allocation3 + $0x200] sm:$0xf]
        %v808 = vld [vmem:[#allocation3 + $0x204] sm:$0xff]
        %v809 = vld [vmem:[#allocation3 + $0x20c] sm:$0xf]
        %v810 = vld [vmem:[#allocation3 + $0x210] sm:$0xff]
        %v811 = vld [vmem:[#allocation3 + $0x218] sm:$0xf]
        %v812 = vld [vmem:[#allocation3 + $0x21c] sm:$0xff]
        %v813 = vld [vmem:[#allocation3 + $0x224] sm:$0xf]
        %v814 = vld [vmem:[#allocation3 + $0x228] sm:$0xff]
        %v815 = vld [vmem:[#allocation3 + $0x230] sm:$0xf]
        %v816 = vld [vmem:[#allocation3 + $0x234] sm:$0xff]
        %v817 = vld [vmem:[#allocation3 + $0x23c] sm:$0xf]
        %v818 = vld [vmem:[%s3] sm:$0x7]
        %v820 = vlaneseq
        %v821 = vshrl.u32 %v820, 7
        %v822 = vsub.s32 0, %v821
        %v823 = vrot.slane %v818, %v822
        %v824 = vlaneseq
        %v825 = vshrl.u32 %v824, 7
        %v826 = vsub.s32 1, %v825
        %v827 = vrot.slane %v818, %v826
        %v828 = vlaneseq
        %v829 = vshrl.u32 %v828, 7
        %v830 = vsub.s32 2, %v829
        %v831 = vrot.slane %v818, %v830
        %v931 = vunpack.c.l.b16 %v722
        %v932 = vunpack.c.h.b16 %v722
        %v933 = vunpack.c.l.b16 %v723
        %v934 = vunpack.c.l.b16 %v724
        %v935 = vunpack.c.h.b16 %v724
        %v936 = vunpack.c.l.b16 %v725
        %v937 = vunpack.c.l.b16 %v726
        %v938 = vunpack.c.h.b16 %v726
        %v939 = vunpack.c.l.b16 %v727
        %v940 = vunpack.c.l.b16 %v728
        %v941 = vunpack.c.h.b16 %v728
        %v942 = vunpack.c.l.b16 %v729
        %v943 = vunpack.c.l.b16 %v730
        %v944 = vunpack.c.h.b16 %v730
        %v945 = vunpack.c.l.b16 %v731
        %v946 = vunpack.c.l.b16 %v732
        %v947 = vunpack.c.h.b16 %v732
        %v948 = vunpack.c.l.b16 %v733
        %v949 = vunpack.c.l.b16 %v734
        %v950 = vunpack.c.h.b16 %v734
        %v951 = vunpack.c.l.b16 %v735
        %v952 = vunpack.c.l.b16 %v736
        %v953 = vunpack.c.h.b16 %v736
        %v954 = vunpack.c.l.b16 %v737
        %v955 = vunpack.c.l.b16 %v738
        %v956 = vunpack.c.h.b16 %v738
        %v957 = vunpack.c.l.b16 %v739
        %v958 = vunpack.c.l.b16 %v740
        %v959 = vunpack.c.h.b16 %v740
        %v960 = vunpack.c.l.b16 %v741
        %v961 = vunpack.c.l.b16 %v742
        %v962 = vunpack.c.h.b16 %v742
        %v963 = vunpack.c.l.b16 %v743
        %v964 = vunpack.c.l.b16 %v744
        %v965 = vunpack.c.h.b16 %v744
        %v966 = vunpack.c.l.b16 %v745
        %v967 = vunpack.c.l.b16 %v746
        %v968 = vunpack.c.h.b16 %v746
        %v969 = vunpack.c.l.b16 %v747
        %v970 = vunpack.c.l.b16 %v748
        %v971 = vunpack.c.h.b16 %v748
        %v972 = vunpack.c.l.b16 %v749
        %v973 = vunpack.c.l.b16 %v750
        %v974 = vunpack.c.h.b16 %v750
        %v975 = vunpack.c.l.b16 %v751
        %v976 = vunpack.c.l.b16 %v752
        %v977 = vunpack.c.h.b16 %v752
        %v978 = vunpack.c.l.b16 %v753
        %v979 = vunpack.c.l.b16 %v754
        %v980 = vunpack.c.h.b16 %v754
        %v981 = vunpack.c.l.b16 %v755
        %v982 = vunpack.c.l.b16 %v756
        %v983 = vunpack.c.h.b16 %v756
        %v984 = vunpack.c.l.b16 %v757
        %v985 = vunpack.c.l.b16 %v758
        %v986 = vunpack.c.h.b16 %v758
        %v987 = vunpack.c.l.b16 %v759
        %v988 = vunpack.c.l.b16 %v760
        %v989 = vunpack.c.h.b16 %v760
        %v990 = vunpack.c.l.b16 %v761
        %v991 = vunpack.c.l.b16 %v762
        %v992 = vunpack.c.h.b16 %v762
        %v993 = vunpack.c.l.b16 %v763
        %v994 = vunpack.c.l.b16 %v764
        %v995 = vunpack.c.h.b16 %v764
        %v996 = vunpack.c.l.b16 %v765
        %v997 = vunpack.c.l.b16 %v766
        %v998 = vunpack.c.h.b16 %v766
        %v999 = vunpack.c.l.b16 %v767
        %v1000 = vunpack.c.l.b16 %v768
        %v1001 = vunpack.c.h.b16 %v768
        %v1002 = vunpack.c.l.b16 %v769
        %v1003 = vunpack.c.l.b16 %v770
        %v1004 = vunpack.c.h.b16 %v770
        %v1005 = vunpack.c.l.b16 %v771
        %v1006 = vunpack.c.l.b16 %v772
        %v1007 = vunpack.c.h.b16 %v772
        %v1008 = vunpack.c.l.b16 %v773
        %v1009 = vunpack.c.l.b16 %v774
        %v1010 = vunpack.c.h.b16 %v774
        %v1011 = vunpack.c.l.b16 %v775
        %v1012 = vunpack.c.l.b16 %v776
        %v1013 = vunpack.c.h.b16 %v776
        %v1014 = vunpack.c.l.b16 %v777
        %v1015 = vunpack.c.l.b16 %v778
        %v1016 = vunpack.c.h.b16 %v778
        %v1017 = vunpack.c.l.b16 %v779
        %v1018 = vunpack.c.l.b16 %v780
        %v1019 = vunpack.c.h.b16 %v780
        %v1020 = vunpack.c.l.b16 %v781
        %v1021 = vunpack.c.l.b16 %v782
        %v1022 = vunpack.c.h.b16 %v782
        %v1023 = vunpack.c.l.b16 %v783
        %v1024 = vunpack.c.l.b16 %v784
        %v1025 = vunpack.c.h.b16 %v784
        %v1026 = vunpack.c.l.b16 %v785
        %v1027 = vunpack.c.l.b16 %v786
        %v1028 = vunpack.c.h.b16 %v786
        %v1029 = vunpack.c.l.b16 %v787
        %v1030 = vunpack.c.l.b16 %v788
        %v1031 = vunpack.c.h.b16 %v788
        %v1032 = vunpack.c.l.b16 %v789
        %v1033 = vunpack.c.l.b16 %v790
        %v1034 = vunpack.c.h.b16 %v790
        %v1035 = vunpack.c.l.b16 %v791
        %v1036 = vunpack.c.l.b16 %v792
        %v1037 = vunpack.c.h.b16 %v792
        %v1038 = vunpack.c.l.b16 %v793
        %v1039 = vunpack.c.l.b16 %v794
        %v1040 = vunpack.c.h.b16 %v794
        %v1041 = vunpack.c.l.b16 %v795
        %v1042 = vunpack.c.l.b16 %v796
        %v1043 = vunpack.c.h.b16 %v796
        %v1044 = vunpack.c.l.b16 %v797
        %v1045 = vunpack.c.l.b16 %v798
        %v1046 = vunpack.c.h.b16 %v798
        %v1047 = vunpack.c.l.b16 %v799
        %v1048 = vunpack.c.l.b16 %v800
        %v1049 = vunpack.c.h.b16 %v800
        %v1050 = vunpack.c.l.b16 %v801
        %v1051 = vunpack.c.l.b16 %v802
        %v1052 = vunpack.c.h.b16 %v802
        %v1053 = vunpack.c.l.b16 %v803
        %v1054 = vunpack.c.l.b16 %v804
        %v1055 = vunpack.c.h.b16 %v804
        %v1056 = vunpack.c.l.b16 %v805
        %v1057 = vunpack.c.l.b16 %v806
        %v1058 = vunpack.c.h.b16 %v806
        %v1059 = vunpack.c.l.b16 %v807
        %v1060 = vunpack.c.l.b16 %v808
        %v1061 = vunpack.c.h.b16 %v808
        %v1062 = vunpack.c.l.b16 %v809
        %v1063 = vunpack.c.l.b16 %v810
        %v1064 = vunpack.c.h.b16 %v810
        %v1065 = vunpack.c.l.b16 %v811
        %v1066 = vunpack.c.l.b16 %v812
        %v1067 = vunpack.c.h.b16 %v812
        %v1068 = vunpack.c.l.b16 %v813
        %v1069 = vunpack.c.l.b16 %v814
        %v1070 = vunpack.c.h.b16 %v814
        %v1071 = vunpack.c.l.b16 %v815
        %v1072 = vunpack.c.l.b16 %v816
        %v1073 = vunpack.c.h.b16 %v816
        %v1074 = vunpack.c.l.b16 %v817
        %v1075 = vpack.c.b16 %v934, %v931
        %v1076 = vpack.c.b16 %v935, %v932
        %v1077 = vpack.c.b16 %v936, %v933
        %v1078 = vpack.c.b16 %v940, %v937
        %v1079 = vpack.c.b16 %v941, %v938
        %v1080 = vpack.c.b16 %v942, %v939
        %v1081 = vpack.c.b16 %v946, %v943
        %v1082 = vpack.c.b16 %v947, %v944
        %v1083 = vpack.c.b16 %v948, %v945
        %v1084 = vpack.c.b16 %v952, %v949
        %v1085 = vpack.c.b16 %v953, %v950
        %v1086 = vpack.c.b16 %v954, %v951
        %v1087 = vpack.c.b16 %v958, %v955
        %v1088 = vpack.c.b16 %v959, %v956
        %v1089 = vpack.c.b16 %v960, %v957
        %v1090 = vpack.c.b16 %v964, %v961
        %v1091 = vpack.c.b16 %v965, %v962
        %v1092 = vpack.c.b16 %v966, %v963
        %v1093 = vpack.c.b16 %v970, %v967
        %v1094 = vpack.c.b16 %v971, %v968
        %v1095 = vpack.c.b16 %v972, %v969
        %v1096 = vpack.c.b16 %v976, %v973
        %v1097 = vpack.c.b16 %v977, %v974
        %v1098 = vpack.c.b16 %v978, %v975
        %v1099 = vpack.c.b16 %v982, %v979
        %v1100 = vpack.c.b16 %v983, %v980
        %v1101 = vpack.c.b16 %v984, %v981
        %v1102 = vpack.c.b16 %v988, %v985
        %v1103 = vpack.c.b16 %v989, %v986
        %v1104 = vpack.c.b16 %v990, %v987
        %v1105 = vpack.c.b16 %v994, %v991
        %v1106 = vpack.c.b16 %v995, %v992
        %v1107 = vpack.c.b16 %v996, %v993
        %v1108 = vpack.c.b16 %v1000, %v997
        %v1109 = vpack.c.b16 %v1001, %v998
        %v1110 = vpack.c.b16 %v1002, %v999
        %v1111 = vpack.c.b16 %v1006, %v1003
        %v1112 = vpack.c.b16 %v1007, %v1004
        %v1113 = vpack.c.b16 %v1008, %v1005
        %v1114 = vpack.c.b16 %v1012, %v1009
        %v1115 = vpack.c.b16 %v1013, %v1010
        %v1116 = vpack.c.b16 %v1014, %v1011
        %v1117 = vpack.c.b16 %v1018, %v1015
        %v1118 = vpack.c.b16 %v1019, %v1016
        %v1119 = vpack.c.b16 %v1020, %v1017
        %v1120 = vpack.c.b16 %v1024, %v1021
        %v1121 = vpack.c.b16 %v1025, %v1022
        %v1122 = vpack.c.b16 %v1026, %v1023
        %v1123 = vpack.c.b16 %v1030, %v1027
        %v1124 = vpack.c.b16 %v1031, %v1028
        %v1125 = vpack.c.b16 %v1032, %v1029
        %v1126 = vpack.c.b16 %v1036, %v1033
        %v1127 = vpack.c.b16 %v1037, %v1034
        %v1128 = vpack.c.b16 %v1038, %v1035
        %v1129 = vpack.c.b16 %v1042, %v1039
        %v1130 = vpack.c.b16 %v1043, %v1040
        %v1131 = vpack.c.b16 %v1044, %v1041
        %v1132 = vpack.c.b16 %v1048, %v1045
        %v1133 = vpack.c.b16 %v1049, %v1046
        %v1134 = vpack.c.b16 %v1050, %v1047
        %v1135 = vpack.c.b16 %v1054, %v1051
        %v1136 = vpack.c.b16 %v1055, %v1052
        %v1137 = vpack.c.b16 %v1056, %v1053
        %v1138 = vpack.c.b16 %v1060, %v1057
        %v1139 = vpack.c.b16 %v1061, %v1058
        %v1140 = vpack.c.b16 %v1062, %v1059
        %v1141 = vpack.c.b16 %v1066, %v1063
        %v1142 = vpack.c.b16 %v1067, %v1064
        %v1143 = vpack.c.b16 %v1068, %v1065
        %v1144 = vpack.c.b16 %v1072, %v1069
        %v1145 = vpack.c.b16 %v1073, %v1070
        %v1146 = vpack.c.b16 %v1074, %v1071
        %1219 = vmatprep.subr.bf16.mxu0 %v1076
        %1220 = vmatpush1.bf16.msra.mxu0 %v1075
        %1221 = vmatprep.subr.bf16.mxu0 %v1079
        %1222 = vmatpush1.bf16.msra.mxu0 %v1078
        %1223 = vmatprep.subr.bf16.mxu0 %v1082
        %1224 = vmatpush1.bf16.msra.mxu0 %v1081
        %1225 = vmatprep.subr.bf16.mxu0 %v1085
        %1226 = vmatpush1.bf16.msra.mxu0 %v1084
        %1227 = vmatprep.subr.bf16.mxu0 %v1088
        %1228 = vmatpush1.bf16.msra.mxu0 %v1087
        %1229 = vmatprep.subr.bf16.mxu0 %v1091
        %1230 = vmatpush1.bf16.msra.mxu0 %v1090
        %1231 = vmatprep.subr.bf16.mxu0 %v1094
        %1232 = vmatpush1.bf16.msra.mxu0 %v1093
        %1233 = vmatprep.subr.bf16.mxu0 %v1097
        %1234 = vmatpush1.bf16.msra.mxu0 %v1096
        %1235 = vmatprep.subr.bf16.mxu0 %v1100
        %1236 = vmatpush1.bf16.msra.mxu0 %v1099
        %1237 = vmatprep.subr.bf16.mxu0 %v1103
        %1238 = vmatpush1.bf16.msra.mxu0 %v1102
        %1239 = vmatprep.subr.bf16.mxu0 %v1106
        %1240 = vmatpush1.bf16.msra.mxu0 %v1105
        %1241 = vmatprep.subr.bf16.mxu0 %v1109
        %1242 = vmatpush1.bf16.msra.mxu0 %v1108
        %1243 = vmatprep.subr.bf16.mxu0 %v1112
        %1244 = vmatpush1.bf16.msra.mxu0 %v1111
        %1245 = vmatprep.subr.bf16.mxu0 %v1115
        %1246 = vmatpush1.bf16.msra.mxu0 %v1114
        %1247 = vmatprep.subr.bf16.mxu0 %v1118
        %1248 = vmatpush1.bf16.msra.mxu0 %v1117
        %1249 = vmatprep.subr.bf16.mxu0 %v1121
        %1250 = vmatpush1.bf16.msra.mxu0 %v1120
        %1251 = vmatprep.mubr.bf16.mxu0 %v651
        %1252 = vmatmul.mubr.bf16.gmra.mrb[0].mxu0 %v650
        %v1253 = vpop.f32.mrb[0].mxu0
        %v1254 = vadd.f32 %v823, %v1253
        %v1255 = vpop.f32.mrb[0].mxu0
        %v1256 = vadd.f32 %v827, %v1255
        %v1257 = vpop.f32.mrb[0].mxu0
        %v1258 = vadd.f32 %v823, %v1257
        %v1259 = vpop.f32.mrb[0].mxu0
        %v1260 = vadd.f32 %v827, %v1259
        %1261 = vmatprep.mubr.bf16.mxu0 %v654
        %1262 = vmatmul.mubr.bf16.gmra.mrb[0].mxu0 %v653
        %v1263 = vpop.f32.mrb[0].mxu0
        %v1264 = vadd.f32 %v823, %v1263
        %v1265 = vpop.f32.mrb[0].mxu0
        %v1266 = vadd.f32 %v827, %v1265
        %v1267 = vpop.f32.mrb[0].mxu0
        %v1268 = vadd.f32 %v823, %v1267
        %v1269 = vpop.f32.mrb[0].mxu0
        %v1270 = vadd.f32 %v827, %v1269
        %1271 = vmatprep.mubr.bf16.mxu0 %v657
        %1272 = vmatmul.mubr.bf16.gmra.mrb[0].mxu0 %v656
        %v1273 = vpop.f32.mrb[0].mxu0
        %v1274 = vadd.f32 %v823, %v1273
        %v1275 = vpop.f32.mrb[0].mxu0
        %v1276 = vadd.f32 %v827, %v1275
        %v1277 = vpop.f32.mrb[0].mxu0
        %v1278 = vadd.f32 %v823, %v1277
        %v1279 = vpop.f32.mrb[0].mxu0
        %v1280 = vadd.f32 %v827, %v1279
        %1281 = vmatprep.mubr.bf16.mxu0 %v660
        %1282 = vmatmul.mubr.bf16.gmra.mrb[0].mxu0 %v659
        %v1283 = vpop.f32.mrb[0].mxu0
        %v1284 = vadd.f32 %v823, %v1283
        %v1285 = vpop.f32.mrb[0].mxu0
        %v1286 = vadd.f32 %v827, %v1285
        %v1287 = vpop.f32.mrb[0].mxu0
        %v1288 = vadd.f32 %v823, %v1287
        %v1289 = vpop.f32.mrb[0].mxu0
        %v1290 = vadd.f32 %v827, %v1289
        %1291 = vmatprep.mubr.bf16.mxu0 %v663
        %1292 = vmatmul.mubr.bf16.gmra.mrb[0].mxu0 %v662
        %v1293 = vpop.f32.mrb[0].mxu0
        %v1294 = vadd.f32 %v823, %v1293
        %v1295 = vpop.f32.mrb[0].mxu0
        %v1296 = vadd.f32 %v827, %v1295
        %v1297 = vpop.f32.mrb[0].mxu0
        %v1298 = vadd.f32 %v823, %v1297
        %v1299 = vpop.f32.mrb[0].mxu0
        %v1300 = vadd.f32 %v827, %v1299
        %1301 = vmatprep.mubr.bf16.mxu0 %v666
        %1302 = vmatmul.mubr.bf16.gmra.mrb[0].mxu0 %v665
        %v1303 = vpop.f32.mrb[0].mxu0
        %v1304 = vadd.f32 %v823, %v1303
        %v1305 = vpop.f32.mrb[0].mxu0
        %v1306 = vadd.f32 %v827, %v1305
        %v1307 = vpop.f32.mrb[0].mxu0
        %v1308 = vadd.f32 %v823, %v1307
        %v1309 = vpop.f32.mrb[0].mxu0
        %v1310 = vadd.f32 %v827, %v1309
        %1311 = vmatprep.mubr.bf16.mxu0 %v669
        %1312 = vmatmul.mubr.bf16.gmra.mrb[0].mxu0 %v668
        %v1313 = vpop.f32.mrb[0].mxu0
        %v1314 = vadd.f32 %v823, %v1313
        %v1315 = vpop.f32.mrb[0].mxu0
        %v1316 = vadd.f32 %v827, %v1315
        %v1317 = vpop.f32.mrb[0].mxu0
        %v1318 = vadd.f32 %v823, %v1317
        %v1319 = vpop.f32.mrb[0].mxu0
        %v1320 = vadd.f32 %v827, %v1319
        %1321 = vmatprep.mubr.bf16.mxu0 %v672
        %1322 = vmatmul.mubr.bf16.gmra.mrb[0].mxu0 %v671
        %v1323 = vpop.f32.mrb[0].mxu0
        %v1324 = vadd.f32 %v823, %v1323
        %v1325 = vpop.f32.mrb[0].mxu0
        %v1326 = vadd.f32 %v827, %v1325
        %v1327 = vpop.f32.mrb[0].mxu0
        %v1328 = vadd.f32 %v823, %v1327
        %v1329 = vpop.f32.mrb[0].mxu0
        %v1330 = vadd.f32 %v827, %v1329
        %1331 = vmatprep.mubr.bf16.mxu0 %v675
        %1332 = vmatmul.mubr.bf16.gmra.mrb[0].mxu0 %v674
        %v1333 = vpop.f32.mrb[0].mxu0
        %v1334 = vadd.f32 %v823, %v1333
        %v1335 = vpop.f32.mrb[0].mxu0
        %v1336 = vadd.f32 %v827, %v1335
        %v1337 = vpop.f32.mrb[0].mxu0
        %v1338 = vadd.f32 %v823, %v1337
        %v1339 = vpop.f32.mrb[0].mxu0
        %v1340 = vadd.f32 %v827, %v1339
        %1341 = vmatprep.mubr.bf16.mxu0 %v678
        %1342 = vmatmul.mubr.bf16.gmra.mrb[0].mxu0 %v677
        %v1343 = vpop.f32.mrb[0].mxu0
        %v1344 = vadd.f32 %v823, %v1343
        %v1345 = vpop.f32.mrb[0].mxu0
        %v1346 = vadd.f32 %v827, %v1345
        %v1347 = vpop.f32.mrb[0].mxu0
        %v1348 = vadd.f32 %v823, %v1347
        %v1349 = vpop.f32.mrb[0].mxu0
        %v1350 = vadd.f32 %v827, %v1349
        %1351 = vmatprep.mubr.bf16.mxu0 %v681
        %1352 = vmatmul.mubr.bf16.gmra.mrb[0].mxu0 %v680
        %v1353 = vpop.f32.mrb[0].mxu0
        %v1354 = vadd.f32 %v823, %v1353
        %v1355 = vpop.f32.mrb[0].mxu0
        %v1356 = vadd.f32 %v827, %v1355
        %v1357 = vpop.f32.mrb[0].mxu0
        %v1358 = vadd.f32 %v823, %v1357
        %v1359 = vpop.f32.mrb[0].mxu0
        %v1360 = vadd.f32 %v827, %v1359
        %1361 = vmatprep.mubr.bf16.mxu0 %v684
        %1362 = vmatmul.mubr.bf16.gmra.mrb[0].mxu0 %v683
        %v1363 = vpop.f32.mrb[0].mxu0
        %v1364 = vadd.f32 %v823, %v1363
        %v1365 = vpop.f32.mrb[0].mxu0
        %v1366 = vadd.f32 %v827, %v1365
        %v1367 = vpop.f32.mrb[0].mxu0
        %v1368 = vadd.f32 %v823, %v1367
        %v1369 = vpop.f32.mrb[0].mxu0
        %v1370 = vadd.f32 %v827, %v1369
        %1371 = vmatprep.mubr.bf16.mxu0 %v687
        %1372 = vmatmul.mubr.bf16.gmra.mrb[0].mxu0 %v686
        %v1373 = vpop.f32.mrb[0].mxu0
        %v1374 = vadd.f32 %v823, %v1373
        %v1375 = vpop.f32.mrb[0].mxu0
        %v1376 = vadd.f32 %v827, %v1375
        %v1377 = vpop.f32.mrb[0].mxu0
        %v1378 = vadd.f32 %v823, %v1377
        %v1379 = vpop.f32.mrb[0].mxu0
        %v1380 = vadd.f32 %v827, %v1379
        %1381 = vmatprep.mubr.bf16.mxu0 %v690
        %1382 = vmatmul.mubr.bf16.gmra.mrb[0].mxu0 %v689
        %v1383 = vpop.f32.mrb[0].mxu0
        %v1384 = vadd.f32 %v823, %v1383
        %v1385 = vpop.f32.mrb[0].mxu0
        %v1386 = vadd.f32 %v827, %v1385
        %v1387 = vpop.f32.mrb[0].mxu0
        %v1388 = vadd.f32 %v823, %v1387
        %v1389 = vpop.f32.mrb[0].mxu0
        %v1390 = vadd.f32 %v827, %v1389
        %1391 = vmatprep.mubr.bf16.mxu0 %v693
        %1392 = vmatmul.mubr.bf16.gmra.mrb[0].mxu0 %v692
        %v1393 = vpop.f32.mrb[0].mxu0
        %v1394 = vadd.f32 %v823, %v1393
        %v1395 = vpop.f32.mrb[0].mxu0
        %v1396 = vadd.f32 %v827, %v1395
        %v1397 = vpop.f32.mrb[0].mxu0
        %v1398 = vadd.f32 %v823, %v1397
        %v1399 = vpop.f32.mrb[0].mxu0
        %v1400 = vadd.f32 %v827, %v1399
        %1401 = vmatprep.mubr.bf16.mxu0 %v696
        %1402 = vmatmul.mubr.bf16.gmra.mrb[0].mxu0 %v695
        %v1403 = vpop.f32.mrb[0].mxu0
        %v1404 = vadd.f32 %v823, %v1403
        %v1405 = vpop.f32.mrb[0].mxu0
        %v1406 = vadd.f32 %v827, %v1405
        %v1407 = vpop.f32.mrb[0].mxu0
        %v1408 = vadd.f32 %v823, %v1407
        %v1409 = vpop.f32.mrb[0].mxu0
        %v1410 = vadd.f32 %v827, %v1409
        %1411 = vmatprep.mubr.bf16.mxu0 %v699
        %1412 = vmatmul.mubr.bf16.gmra.mrb[0].mxu0 %v698
        %v1413 = vpop.f32.mrb[0].mxu0
        %v1414 = vadd.f32 %v823, %v1413
        %v1415 = vpop.f32.mrb[0].mxu0
        %v1416 = vadd.f32 %v827, %v1415
        %v1417 = vpop.f32.mrb[0].mxu0
        %v1418 = vadd.f32 %v823, %v1417
        %v1419 = vpop.f32.mrb[0].mxu0
        %v1420 = vadd.f32 %v827, %v1419
        %1421 = vmatprep.mubr.bf16.mxu0 %v702
        %1422 = vmatmul.mubr.bf16.gmra.mrb[0].mxu0 %v701
        %v1423 = vpop.f32.mrb[0].mxu0
        %v1424 = vadd.f32 %v823, %v1423
        %v1425 = vpop.f32.mrb[0].mxu0
        %v1426 = vadd.f32 %v827, %v1425
        %v1427 = vpop.f32.mrb[0].mxu0
        %v1428 = vadd.f32 %v823, %v1427
        %v1429 = vpop.f32.mrb[0].mxu0
        %v1430 = vadd.f32 %v827, %v1429
        %1431 = vmatprep.mubr.bf16.mxu0 %v705
        %1432 = vmatmul.mubr.bf16.gmra.mrb[0].mxu0 %v704
        %v1433 = vpop.f32.mrb[0].mxu0
        %v1434 = vadd.f32 %v823, %v1433
        %v1435 = vpop.f32.mrb[0].mxu0
        %v1436 = vadd.f32 %v827, %v1435
        %v1437 = vpop.f32.mrb[0].mxu0
        %v1438 = vadd.f32 %v823, %v1437
        %v1439 = vpop.f32.mrb[0].mxu0
        %v1440 = vadd.f32 %v827, %v1439
        %1441 = vmatprep.mubr.bf16.mxu0 %v708
        %1442 = vmatmul.mubr.bf16.gmra.mrb[0].mxu0 %v707
        %v1443 = vpop.f32.mrb[0].mxu0
        %v1444 = vadd.f32 %v823, %v1443
        %v1445 = vpop.f32.mrb[0].mxu0
        %v1446 = vadd.f32 %v827, %v1445
        %v1447 = vpop.f32.mrb[0].mxu0
        %v1448 = vadd.f32 %v823, %v1447
        %v1449 = vpop.f32.mrb[0].mxu0
        %v1450 = vadd.f32 %v827, %v1449
        %1451 = vmatprep.mubr.bf16.mxu0 %v711
        %1452 = vmatmul.mubr.bf16.gmra.mrb[0].mxu0 %v710
        %v1453 = vpop.f32.mrb[0].mxu0
        %v1454 = vadd.f32 %v823, %v1453
        %v1455 = vpop.f32.mrb[0].mxu0
        %v1456 = vadd.f32 %v827, %v1455
        %v1457 = vpop.f32.mrb[0].mxu0
        %v1458 = vadd.f32 %v823, %v1457
        %v1459 = vpop.f32.mrb[0].mxu0
        %v1460 = vadd.f32 %v827, %v1459
        %1461 = vmatprep.mubr.bf16.mxu0 %v714
        %1462 = vmatmul.mubr.bf16.gmra.mrb[0].mxu0 %v713
        %v1463 = vpop.f32.mrb[0].mxu0
        %v1464 = vadd.f32 %v823, %v1463
        %v1465 = vpop.f32.mrb[0].mxu0
        %v1466 = vadd.f32 %v827, %v1465
        %v1467 = vpop.f32.mrb[0].mxu0
        %v1468 = vadd.f32 %v823, %v1467
        %v1469 = vpop.f32.mrb[0].mxu0
        %v1470 = vadd.f32 %v827, %v1469
        %1471 = vmatprep.mubr.bf16.mxu0 %v717
        %1472 = vmatmul.mubr.bf16.gmra.mrb[0].mxu0 %v716
        %v1473 = vpop.f32.mrb[0].mxu0
        %v1474 = vadd.f32 %v823, %v1473
        %v1475 = vpop.f32.mrb[0].mxu0
        %v1476 = vadd.f32 %v827, %v1475
        %v1477 = vpop.f32.mrb[0].mxu0
        %v1478 = vadd.f32 %v823, %v1477
        %v1479 = vpop.f32.mrb[0].mxu0
        %v1480 = vadd.f32 %v827, %v1479
        %1481 = vmatprep.mubr.bf16.mxu0 %v720
        %1482 = vmatmul.mubr.bf16.gmra.mrb[0].mxu0 %v719
        %v1483 = vpop.f32.mrb[0].mxu0
        %v1484 = vadd.f32 %v823, %v1483
        %v1485 = vpop.f32.mrb[0].mxu0
        %v1486 = vadd.f32 %v827, %v1485
        %v1487 = vpop.f32.mrb[0].mxu0
        %v1488 = vadd.f32 %v823, %v1487
        %v1489 = vpop.f32.mrb[0].mxu0
        %v1490 = vadd.f32 %v827, %v1489
        %1491 = vdwg.mxu0
        %1492 = vmatprep.subr.bf16.mxu0 %v1124
        %1493 = vmatpush1.bf16.msra.mxu0 %v1123
        %1494 = vmatprep.subr.bf16.mxu0 %v1127
        %1495 = vmatpush1.bf16.msra.mxu0 %v1126
        %1496 = vmatprep.subr.bf16.mxu0 %v1130
        %1497 = vmatpush1.bf16.msra.mxu0 %v1129
        %1498 = vmatprep.subr.bf16.mxu0 %v1133
        %1499 = vmatpush1.bf16.msra.mxu0 %v1132
        %1500 = vmatprep.subr.bf16.mxu0 %v1136
        %1501 = vmatpush1.bf16.msra.mxu0 %v1135
        %1502 = vmatprep.subr.bf16.mxu0 %v1139
        %1503 = vmatpush1.bf16.msra.mxu0 %v1138
        %1504 = vmatprep.subr.bf16.mxu0 %v1142
        %1505 = vmatpush1.bf16.msra.mxu0 %v1141
        %1506 = vmatprep.subr.bf16.mxu0 %v1145
        %1507 = vmatpush1.bf16.msra.mxu0 %v1144
        %1508 = vmatprep.subr.bf16.mxu0 0
        %1509 = vmatpush1.bf16.msra.mxu0 0
        %1510 = vmatprep.subr.bf16.mxu0 0
        %1511 = vmatpush1.bf16.msra.mxu0 0
        %1512 = vmatprep.subr.bf16.mxu0 0
        %1513 = vmatpush1.bf16.msra.mxu0 0
        %1514 = vmatprep.subr.bf16.mxu0 0
        %1515 = vmatpush1.bf16.msra.mxu0 0
        %1516 = vmatprep.subr.bf16.mxu0 0
        %1517 = vmatpush1.bf16.msra.mxu0 0
        %1518 = vmatprep.subr.bf16.mxu0 0
        %1519 = vmatpush1.bf16.msra.mxu0 0
        %1520 = vmatprep.subr.bf16.mxu0 0
        %1521 = vmatpush1.bf16.msra.mxu0 0
        %1522 = vmatprep.subr.bf16.mxu0 0
        %1523 = vmatpush1.bf16.msra.mxu0 0
        %1524 = vmatprep.mubr.bf16.mxu0 0
        %1525 = vmatmul.mubr.bf16.gmra.mrb[0].mxu0 %v652
        %v1526 = vpop.f32.mrb[0].mxu0
        %v1527 = vadd.f32 %v1254, %v1526
        %v1528 = vpop.f32.mrb[0].mxu0
        %v1529 = vadd.f32 %v1256, %v1528
        %v1530 = vpop.f32.mrb[0].mxu0
        %v1531 = vadd.f32 %v1258, %v1530
        %v1532 = vpop.f32.mrb[0].mxu0
        %v1533 = vadd.f32 %v1260, %v1532
        %1534 = vmatprep.mubr.bf16.mxu0 0
        %1535 = vmatmul.mubr.bf16.gmra.mrb[0].mxu0 %v655
        %v1536 = vpop.f32.mrb[0].mxu0
        %v1537 = vadd.f32 %v1264, %v1536
        %v1538 = vpop.f32.mrb[0].mxu0
        %v1539 = vadd.f32 %v1266, %v1538
        %v1540 = vpop.f32.mrb[0].mxu0
        %v1541 = vadd.f32 %v1268, %v1540
        %v1542 = vpop.f32.mrb[0].mxu0
        %v1543 = vadd.f32 %v1270, %v1542
        %1544 = vmatprep.mubr.bf16.mxu0 0
        %1545 = vmatmul.mubr.bf16.gmra.mrb[0].mxu0 %v658
        %v1546 = vpop.f32.mrb[0].mxu0
        %v1547 = vadd.f32 %v1274, %v1546
        %v1548 = vpop.f32.mrb[0].mxu0
        %v1549 = vadd.f32 %v1276, %v1548
        %v1550 = vpop.f32.mrb[0].mxu0
        %v1551 = vadd.f32 %v1278, %v1550
        %v1552 = vpop.f32.mrb[0].mxu0
        %v1553 = vadd.f32 %v1280, %v1552
        %1554 = vmatprep.mubr.bf16.mxu0 0
        %1555 = vmatmul.mubr.bf16.gmra.mrb[0].mxu0 %v661
        %v1556 = vpop.f32.mrb[0].mxu0
        %v1557 = vadd.f32 %v1284, %v1556
        %v1558 = vpop.f32.mrb[0].mxu0
        %v1559 = vadd.f32 %v1286, %v1558
        %v1560 = vpop.f32.mrb[0].mxu0
        %v1561 = vadd.f32 %v1288, %v1560
        %v1562 = vpop.f32.mrb[0].mxu0
        %v1563 = vadd.f32 %v1290, %v1562
        %1564 = vmatprep.mubr.bf16.mxu0 0
        %1565 = vmatmul.mubr.bf16.gmra.mrb[0].mxu0 %v664
        %v1566 = vpop.f32.mrb[0].mxu0
        %v1567 = vadd.f32 %v1294, %v1566
        %v1568 = vpop.f32.mrb[0].mxu0
        %v1569 = vadd.f32 %v1296, %v1568
        %v1570 = vpop.f32.mrb[0].mxu0
        %v1571 = vadd.f32 %v1298, %v1570
        %v1572 = vpop.f32.mrb[0].mxu0
        %v1573 = vadd.f32 %v1300, %v1572
        %1574 = vmatprep.mubr.bf16.mxu0 0
        %1575 = vmatmul.mubr.bf16.gmra.mrb[0].mxu0 %v667
        %v1576 = vpop.f32.mrb[0].mxu0
        %v1577 = vadd.f32 %v1304, %v1576
        %v1578 = vpop.f32.mrb[0].mxu0
        %v1579 = vadd.f32 %v1306, %v1578
        %v1580 = vpop.f32.mrb[0].mxu0
        %v1581 = vadd.f32 %v1308, %v1580
        %v1582 = vpop.f32.mrb[0].mxu0
        %v1583 = vadd.f32 %v1310, %v1582
        %1584 = vmatprep.mubr.bf16.mxu0 0
        %1585 = vmatmul.mubr.bf16.gmra.mrb[0].mxu0 %v670
        %v1586 = vpop.f32.mrb[0].mxu0
        %v1587 = vadd.f32 %v1314, %v1586
        %v1588 = vpop.f32.mrb[0].mxu0
        %v1589 = vadd.f32 %v1316, %v1588
        %v1590 = vpop.f32.mrb[0].mxu0
        %v1591 = vadd.f32 %v1318, %v1590
        %v1592 = vpop.f32.mrb[0].mxu0
        %v1593 = vadd.f32 %v1320, %v1592
        %1594 = vmatprep.mubr.bf16.mxu0 0
        %1595 = vmatmul.mubr.bf16.gmra.mrb[0].mxu0 %v673
        %v1596 = vpop.f32.mrb[0].mxu0
        %v1597 = vadd.f32 %v1324, %v1596
        %v1598 = vpop.f32.mrb[0].mxu0
        %v1599 = vadd.f32 %v1326, %v1598
        %v1600 = vpop.f32.mrb[0].mxu0
        %v1601 = vadd.f32 %v1328, %v1600
        %v1602 = vpop.f32.mrb[0].mxu0
        %v1603 = vadd.f32 %v1330, %v1602
        %1604 = vmatprep.mubr.bf16.mxu0 0
        %1605 = vmatmul.mubr.bf16.gmra.mrb[0].mxu0 %v676
        %v1606 = vpop.f32.mrb[0].mxu0
        %v1607 = vadd.f32 %v1334, %v1606
        %v1608 = vpop.f32.mrb[0].mxu0
        %v1609 = vadd.f32 %v1336, %v1608
        %v1610 = vpop.f32.mrb[0].mxu0
        %v1611 = vadd.f32 %v1338, %v1610
        %v1612 = vpop.f32.mrb[0].mxu0
        %v1613 = vadd.f32 %v1340, %v1612
        %1614 = vmatprep.mubr.bf16.mxu0 0
        %1615 = vmatmul.mubr.bf16.gmra.mrb[0].mxu0 %v679
        %v1616 = vpop.f32.mrb[0].mxu0
        %v1617 = vadd.f32 %v1344, %v1616
        %v1618 = vpop.f32.mrb[0].mxu0
        %v1619 = vadd.f32 %v1346, %v1618
        %v1620 = vpop.f32.mrb[0].mxu0
        %v1621 = vadd.f32 %v1348, %v1620
        %v1622 = vpop.f32.mrb[0].mxu0
        %v1623 = vadd.f32 %v1350, %v1622
        %1624 = vmatprep.mubr.bf16.mxu0 0
        %1625 = vmatmul.mubr.bf16.gmra.mrb[0].mxu0 %v682
        %v1626 = vpop.f32.mrb[0].mxu0
        %v1627 = vadd.f32 %v1354, %v1626
        %v1628 = vpop.f32.mrb[0].mxu0
        %v1629 = vadd.f32 %v1356, %v1628
        %v1630 = vpop.f32.mrb[0].mxu0
        %v1631 = vadd.f32 %v1358, %v1630
        %v1632 = vpop.f32.mrb[0].mxu0
        %v1633 = vadd.f32 %v1360, %v1632
        %1634 = vmatprep.mubr.bf16.mxu0 0
        %1635 = vmatmul.mubr.bf16.gmra.mrb[0].mxu0 %v685
        %v1636 = vpop.f32.mrb[0].mxu0
        %v1637 = vadd.f32 %v1364, %v1636
        %v1638 = vpop.f32.mrb[0].mxu0
        %v1639 = vadd.f32 %v1366, %v1638
        %v1640 = vpop.f32.mrb[0].mxu0
        %v1641 = vadd.f32 %v1368, %v1640
        %v1642 = vpop.f32.mrb[0].mxu0
        %v1643 = vadd.f32 %v1370, %v1642
        %1644 = vmatprep.mubr.bf16.mxu0 0
        %1645 = vmatmul.mubr.bf16.gmra.mrb[0].mxu0 %v688
        %v1646 = vpop.f32.mrb[0].mxu0
        %v1647 = vadd.f32 %v1374, %v1646
        %v1648 = vpop.f32.mrb[0].mxu0
        %v1649 = vadd.f32 %v1376, %v1648
        %v1650 = vpop.f32.mrb[0].mxu0
        %v1651 = vadd.f32 %v1378, %v1650
        %v1652 = vpop.f32.mrb[0].mxu0
        %v1653 = vadd.f32 %v1380, %v1652
        %1654 = vmatprep.mubr.bf16.mxu0 0
        %1655 = vmatmul.mubr.bf16.gmra.mrb[0].mxu0 %v691
        %v1656 = vpop.f32.mrb[0].mxu0
        %v1657 = vadd.f32 %v1384, %v1656
        %v1658 = vpop.f32.mrb[0].mxu0
        %v1659 = vadd.f32 %v1386, %v1658
        %v1660 = vpop.f32.mrb[0].mxu0
        %v1661 = vadd.f32 %v1388, %v1660
        %v1662 = vpop.f32.mrb[0].mxu0
        %v1663 = vadd.f32 %v1390, %v1662
        %1664 = vmatprep.mubr.bf16.mxu0 0
        %1665 = vmatmul.mubr.bf16.gmra.mrb[0].mxu0 %v694
        %v1666 = vpop.f32.mrb[0].mxu0
        %v1667 = vadd.f32 %v1394, %v1666
        %v1668 = vpop.f32.mrb[0].mxu0
        %v1669 = vadd.f32 %v1396, %v1668
        %v1670 = vpop.f32.mrb[0].mxu0
        %v1671 = vadd.f32 %v1398, %v1670
        %v1672 = vpop.f32.mrb[0].mxu0
        %v1673 = vadd.f32 %v1400, %v1672
        %1674 = vmatprep.mubr.bf16.mxu0 0
        %1675 = vmatmul.mubr.bf16.gmra.mrb[0].mxu0 %v697
        %v1676 = vpop.f32.mrb[0].mxu0
        %v1677 = vadd.f32 %v1404, %v1676
        %v1678 = vpop.f32.mrb[0].mxu0
        %v1679 = vadd.f32 %v1406, %v1678
        %v1680 = vpop.f32.mrb[0].mxu0
        %v1681 = vadd.f32 %v1408, %v1680
        %v1682 = vpop.f32.mrb[0].mxu0
        %v1683 = vadd.f32 %v1410, %v1682
        %1684 = vmatprep.mubr.bf16.mxu0 0
        %1685 = vmatmul.mubr.bf16.gmra.mrb[0].mxu0 %v700
        %v1686 = vpop.f32.mrb[0].mxu0
        %v1687 = vadd.f32 %v1414, %v1686
        %v1688 = vpop.f32.mrb[0].mxu0
        %v1689 = vadd.f32 %v1416, %v1688
        %v1690 = vpop.f32.mrb[0].mxu0
        %v1691 = vadd.f32 %v1418, %v1690
        %v1692 = vpop.f32.mrb[0].mxu0
        %v1693 = vadd.f32 %v1420, %v1692
        %1694 = vmatprep.mubr.bf16.mxu0 0
        %1695 = vmatmul.mubr.bf16.gmra.mrb[0].mxu0 %v703
        %v1696 = vpop.f32.mrb[0].mxu0
        %v1697 = vadd.f32 %v1424, %v1696
        %v1698 = vpop.f32.mrb[0].mxu0
        %v1699 = vadd.f32 %v1426, %v1698
        %v1700 = vpop.f32.mrb[0].mxu0
        %v1701 = vadd.f32 %v1428, %v1700
        %v1702 = vpop.f32.mrb[0].mxu0
        %v1703 = vadd.f32 %v1430, %v1702
        %1704 = vmatprep.mubr.bf16.mxu0 0
        %1705 = vmatmul.mubr.bf16.gmra.mrb[0].mxu0 %v706
        %v1706 = vpop.f32.mrb[0].mxu0
        %v1707 = vadd.f32 %v1434, %v1706
        %v1708 = vpop.f32.mrb[0].mxu0
        %v1709 = vadd.f32 %v1436, %v1708
        %v1710 = vpop.f32.mrb[0].mxu0
        %v1711 = vadd.f32 %v1438, %v1710
        %v1712 = vpop.f32.mrb[0].mxu0
        %v1713 = vadd.f32 %v1440, %v1712
        %1714 = vmatprep.mubr.bf16.mxu0 0
        %1715 = vmatmul.mubr.bf16.gmra.mrb[0].mxu0 %v709
        %v1716 = vpop.f32.mrb[0].mxu0
        %v1717 = vadd.f32 %v1444, %v1716
        %v1718 = vpop.f32.mrb[0].mxu0
        %v1719 = vadd.f32 %v1446, %v1718
        %v1720 = vpop.f32.mrb[0].mxu0
        %v1721 = vadd.f32 %v1448, %v1720
        %v1722 = vpop.f32.mrb[0].mxu0
        %v1723 = vadd.f32 %v1450, %v1722
        %1724 = vmatprep.mubr.bf16.mxu0 0
        %1725 = vmatmul.mubr.bf16.gmra.mrb[0].mxu0 %v712
        %v1726 = vpop.f32.mrb[0].mxu0
        %v1727 = vadd.f32 %v1454, %v1726
        %v1728 = vpop.f32.mrb[0].mxu0
        %v1729 = vadd.f32 %v1456, %v1728
        %v1730 = vpop.f32.mrb[0].mxu0
        %v1731 = vadd.f32 %v1458, %v1730
        %v1732 = vpop.f32.mrb[0].mxu0
        %v1733 = vadd.f32 %v1460, %v1732
        %1734 = vmatprep.mubr.bf16.mxu0 0
        %1735 = vmatmul.mubr.bf16.gmra.mrb[0].mxu0 %v715
        %v1736 = vpop.f32.mrb[0].mxu0
        %v1737 = vadd.f32 %v1464, %v1736
        %v1738 = vpop.f32.mrb[0].mxu0
        %v1739 = vadd.f32 %v1466, %v1738
        %v1740 = vpop.f32.mrb[0].mxu0
        %v1741 = vadd.f32 %v1468, %v1740
        %v1742 = vpop.f32.mrb[0].mxu0
        %v1743 = vadd.f32 %v1470, %v1742
        %1744 = vmatprep.mubr.bf16.mxu0 0
        %1745 = vmatmul.mubr.bf16.gmra.mrb[0].mxu0 %v718
        %v1746 = vpop.f32.mrb[0].mxu0
        %v1747 = vadd.f32 %v1474, %v1746
        %v1748 = vpop.f32.mrb[0].mxu0
        %v1749 = vadd.f32 %v1476, %v1748
        %v1750 = vpop.f32.mrb[0].mxu0
        %v1751 = vadd.f32 %v1478, %v1750
        %v1752 = vpop.f32.mrb[0].mxu0
        %v1753 = vadd.f32 %v1480, %v1752
        %1754 = vmatprep.mubr.bf16.mxu0 0
        %1755 = vmatmul.mubr.bf16.gmra.mrb[0].mxu0 %v721
        %v1756 = vpop.f32.mrb[0].mxu0
        %v1757 = vadd.f32 %v1484, %v1756
        %v1758 = vpop.f32.mrb[0].mxu0
        %v1759 = vadd.f32 %v1486, %v1758
        %v1760 = vpop.f32.mrb[0].mxu0
        %v1761 = vadd.f32 %v1488, %v1760
        %v1762 = vpop.f32.mrb[0].mxu0
        %v1763 = vadd.f32 %v1490, %v1762
        %1764 = vdwg.mxu0
        %1765 = vmatprep.subr.bf16.mxu0 0
        %1766 = vmatpush1.bf16.msra.mxu0 %v1077
        %1767 = vmatprep.subr.bf16.mxu0 0
        %1768 = vmatpush1.bf16.msra.mxu0 %v1080
        %1769 = vmatprep.subr.bf16.mxu0 0
        %1770 = vmatpush1.bf16.msra.mxu0 %v1083
        %1771 = vmatprep.subr.bf16.mxu0 0
        %1772 = vmatpush1.bf16.msra.mxu0 %v1086
        %1773 = vmatprep.subr.bf16.mxu0 0
        %1774 = vmatpush1.bf16.msra.mxu0 %v1089
        %1775 = vmatprep.subr.bf16.mxu0 0
        %1776 = vmatpush1.bf16.msra.mxu0 %v1092
        %1777 = vmatprep.subr.bf16.mxu0 0
        %1778 = vmatpush1.bf16.msra.mxu0 %v1095
        %1779 = vmatprep.subr.bf16.mxu0 0
        %1780 = vmatpush1.bf16.msra.mxu0 %v1098
        %1781 = vmatprep.subr.bf16.mxu0 0
        %1782 = vmatpush1.bf16.msra.mxu0 %v1101
        %1783 = vmatprep.subr.bf16.mxu0 0
        %1784 = vmatpush1.bf16.msra.mxu0 %v1104
        %1785 = vmatprep.subr.bf16.mxu0 0
        %1786 = vmatpush1.bf16.msra.mxu0 %v1107
        %1787 = vmatprep.subr.bf16.mxu0 0
        %1788 = vmatpush1.bf16.msra.mxu0 %v1110
        %1789 = vmatprep.subr.bf16.mxu0 0
        %1790 = vmatpush1.bf16.msra.mxu0 %v1113
        %1791 = vmatprep.subr.bf16.mxu0 0
        %1792 = vmatpush1.bf16.msra.mxu0 %v1116
        %1793 = vmatprep.subr.bf16.mxu0 0
        %1794 = vmatpush1.bf16.msra.mxu0 %v1119
        %1795 = vmatprep.subr.bf16.mxu0 0
        %1796 = vmatpush1.bf16.msra.mxu0 %v1122
        %1797 = vmatprep.mubr.bf16.mxu0 %v651
        %1798 = vmatmul.mubr.bf16.gmra.mrb[0].mxu0 %v650
        %v1799 = vpop.f32.mrb[0].mxu0
        %v1800 = vadd.f32 %v831, %v1799
        %v1801 = vpop.f32.mrb[0].mxu0
        %v1802 = vpop.f32.mrb[0].mxu0
        %v1803 = vadd.f32 %v831, %v1802
        %v1804 = vpop.f32.mrb[0].mxu0
        %1805 = vmatprep.mubr.bf16.mxu0 %v654
        %1806 = vmatmul.mubr.bf16.gmra.mrb[0].mxu0 %v653
        %v1807 = vpop.f32.mrb[0].mxu0
        %v1808 = vadd.f32 %v831, %v1807
        %v1809 = vpop.f32.mrb[0].mxu0
        %v1810 = vpop.f32.mrb[0].mxu0
        %v1811 = vadd.f32 %v831, %v1810
        %v1812 = vpop.f32.mrb[0].mxu0
        %1813 = vmatprep.mubr.bf16.mxu0 %v657
        %1814 = vmatmul.mubr.bf16.gmra.mrb[0].mxu0 %v656
        %v1815 = vpop.f32.mrb[0].mxu0
        %v1816 = vadd.f32 %v831, %v1815
        %v1817 = vpop.f32.mrb[0].mxu0
        %v1818 = vpop.f32.mrb[0].mxu0
        %v1819 = vadd.f32 %v831, %v1818
        %v1820 = vpop.f32.mrb[0].mxu0
        %1821 = vmatprep.mubr.bf16.mxu0 %v660
        %1822 = vmatmul.mubr.bf16.gmra.mrb[0].mxu0 %v659
        %v1823 = vpop.f32.mrb[0].mxu0
        %v1824 = vadd.f32 %v831, %v1823
        %v1825 = vpop.f32.mrb[0].mxu0
        %v1826 = vpop.f32.mrb[0].mxu0
        %v1827 = vadd.f32 %v831, %v1826
        %v1828 = vpop.f32.mrb[0].mxu0
        %1829 = vmatprep.mubr.bf16.mxu0 %v663
        %1830 = vmatmul.mubr.bf16.gmra.mrb[0].mxu0 %v662
        %v1831 = vpop.f32.mrb[0].mxu0
        %v1832 = vadd.f32 %v831, %v1831
        %v1833 = vpop.f32.mrb[0].mxu0
        %v1834 = vpop.f32.mrb[0].mxu0
        %v1835 = vadd.f32 %v831, %v1834
        %v1836 = vpop.f32.mrb[0].mxu0
        %1837 = vmatprep.mubr.bf16.mxu0 %v666
        %1838 = vmatmul.mubr.bf16.gmra.mrb[0].mxu0 %v665
        %v1839 = vpop.f32.mrb[0].mxu0
        %v1840 = vadd.f32 %v831, %v1839
        %v1841 = vpop.f32.mrb[0].mxu0
        %v1842 = vpop.f32.mrb[0].mxu0
        %v1843 = vadd.f32 %v831, %v1842
        %v1844 = vpop.f32.mrb[0].mxu0
        %1845 = vmatprep.mubr.bf16.mxu0 %v669
        %1846 = vmatmul.mubr.bf16.gmra.mrb[0].mxu0 %v668
        %v1847 = vpop.f32.mrb[0].mxu0
        %v1848 = vadd.f32 %v831, %v1847
        %v1849 = vpop.f32.mrb[0].mxu0
        %v1850 = vpop.f32.mrb[0].mxu0
        %v1851 = vadd.f32 %v831, %v1850
        %v1852 = vpop.f32.mrb[0].mxu0
        %1853 = vmatprep.mubr.bf16.mxu0 %v672
        %1854 = vmatmul.mubr.bf16.gmra.mrb[0].mxu0 %v671
        %v1855 = vpop.f32.mrb[0].mxu0
        %v1856 = vadd.f32 %v831, %v1855
        %v1857 = vpop.f32.mrb[0].mxu0
        %v1858 = vpop.f32.mrb[0].mxu0
        %v1859 = vadd.f32 %v831, %v1858
        %v1860 = vpop.f32.mrb[0].mxu0
        %1861 = vmatprep.mubr.bf16.mxu0 %v675
        %1862 = vmatmul.mubr.bf16.gmra.mrb[0].mxu0 %v674
        %v1863 = vpop.f32.mrb[0].mxu0
        %v1864 = vadd.f32 %v831, %v1863
        %v1865 = vpop.f32.mrb[0].mxu0
        %v1866 = vpop.f32.mrb[0].mxu0
        %v1867 = vadd.f32 %v831, %v1866
        %v1868 = vpop.f32.mrb[0].mxu0
        %1869 = vmatprep.mubr.bf16.mxu0 %v678
        %1870 = vmatmul.mubr.bf16.gmra.mrb[0].mxu0 %v677
        %v1871 = vpop.f32.mrb[0].mxu0
        %v1872 = vadd.f32 %v831, %v1871
        %v1873 = vpop.f32.mrb[0].mxu0
        %v1874 = vpop.f32.mrb[0].mxu0
        %v1875 = vadd.f32 %v831, %v1874
        %v1876 = vpop.f32.mrb[0].mxu0
        %1877 = vmatprep.mubr.bf16.mxu0 %v681
        %1878 = vmatmul.mubr.bf16.gmra.mrb[0].mxu0 %v680
        %v1879 = vpop.f32.mrb[0].mxu0
        %v1880 = vadd.f32 %v831, %v1879
        %v1881 = vpop.f32.mrb[0].mxu0
        %v1882 = vpop.f32.mrb[0].mxu0
        %v1883 = vadd.f32 %v831, %v1882
        %v1884 = vpop.f32.mrb[0].mxu0
        %1885 = vmatprep.mubr.bf16.mxu0 %v684
        %1886 = vmatmul.mubr.bf16.gmra.mrb[0].mxu0 %v683
        %v1887 = vpop.f32.mrb[0].mxu0
        %v1888 = vadd.f32 %v831, %v1887
        %v1889 = vpop.f32.mrb[0].mxu0
        %v1890 = vpop.f32.mrb[0].mxu0
        %v1891 = vadd.f32 %v831, %v1890
        %v1892 = vpop.f32.mrb[0].mxu0
        %1893 = vmatprep.mubr.bf16.mxu0 %v687
        %1894 = vmatmul.mubr.bf16.gmra.mrb[0].mxu0 %v686
        %v1895 = vpop.f32.mrb[0].mxu0
        %v1896 = vadd.f32 %v831, %v1895
        %v1897 = vpop.f32.mrb[0].mxu0
        %v1898 = vpop.f32.mrb[0].mxu0
        %v1899 = vadd.f32 %v831, %v1898
        %v1900 = vpop.f32.mrb[0].mxu0
        %1901 = vmatprep.mubr.bf16.mxu0 %v690
        %1902 = vmatmul.mubr.bf16.gmra.mrb[0].mxu0 %v689
        %v1903 = vpop.f32.mrb[0].mxu0
        %v1904 = vadd.f32 %v831, %v1903
        %v1905 = vpop.f32.mrb[0].mxu0
        %v1906 = vpop.f32.mrb[0].mxu0
        %v1907 = vadd.f32 %v831, %v1906
        %v1908 = vpop.f32.mrb[0].mxu0
        %1909 = vmatprep.mubr.bf16.mxu0 %v693
        %1910 = vmatmul.mubr.bf16.gmra.mrb[0].mxu0 %v692
        %v1911 = vpop.f32.mrb[0].mxu0
        %v1912 = vadd.f32 %v831, %v1911
        %v1913 = vpop.f32.mrb[0].mxu0
        %v1914 = vpop.f32.mrb[0].mxu0
        %v1915 = vadd.f32 %v831, %v1914
        %v1916 = vpop.f32.mrb[0].mxu0
        %1917 = vmatprep.mubr.bf16.mxu0 %v696
        %1918 = vmatmul.mubr.bf16.gmra.mrb[0].mxu0 %v695
        %v1919 = vpop.f32.mrb[0].mxu0
        %v1920 = vadd.f32 %v831, %v1919
        %v1921 = vpop.f32.mrb[0].mxu0
        %v1922 = vpop.f32.mrb[0].mxu0
        %v1923 = vadd.f32 %v831, %v1922
        %v1924 = vpop.f32.mrb[0].mxu0
        %1925 = vmatprep.mubr.bf16.mxu0 %v699
        %1926 = vmatmul.mubr.bf16.gmra.mrb[0].mxu0 %v698
        %v1927 = vpop.f32.mrb[0].mxu0
        %v1928 = vadd.f32 %v831, %v1927
        %v1929 = vpop.f32.mrb[0].mxu0
        %v1930 = vpop.f32.mrb[0].mxu0
        %v1931 = vadd.f32 %v831, %v1930
        %v1932 = vpop.f32.mrb[0].mxu0
        %1933 = vmatprep.mubr.bf16.mxu0 %v702
        %1934 = vmatmul.mubr.bf16.gmra.mrb[0].mxu0 %v701
        %v1935 = vpop.f32.mrb[0].mxu0
        %v1936 = vadd.f32 %v831, %v1935
        %v1937 = vpop.f32.mrb[0].mxu0
        %v1938 = vpop.f32.mrb[0].mxu0
        %v1939 = vadd.f32 %v831, %v1938
        %v1940 = vpop.f32.mrb[0].mxu0
        %1941 = vmatprep.mubr.bf16.mxu0 %v705
        %1942 = vmatmul.mubr.bf16.gmra.mrb[0].mxu0 %v704
        %v1943 = vpop.f32.mrb[0].mxu0
        %v1944 = vadd.f32 %v831, %v1943
        %v1945 = vpop.f32.mrb[0].mxu0
        %v1946 = vpop.f32.mrb[0].mxu0
        %v1947 = vadd.f32 %v831, %v1946
        %v1948 = vpop.f32.mrb[0].mxu0
        %1949 = vmatprep.mubr.bf16.mxu0 %v708
        %1950 = vmatmul.mubr.bf16.gmra.mrb[0].mxu0 %v707
        %v1951 = vpop.f32.mrb[0].mxu0
        %v1952 = vadd.f32 %v831, %v1951
        %v1953 = vpop.f32.mrb[0].mxu0
        %v1954 = vpop.f32.mrb[0].mxu0
        %v1955 = vadd.f32 %v831, %v1954
        %v1956 = vpop.f32.mrb[0].mxu0
        %1957 = vmatprep.mubr.bf16.mxu0 %v711
        %1958 = vmatmul.mubr.bf16.gmra.mrb[0].mxu0 %v710
        %v1959 = vpop.f32.mrb[0].mxu0
        %v1960 = vadd.f32 %v831, %v1959
        %v1961 = vpop.f32.mrb[0].mxu0
        %v1962 = vpop.f32.mrb[0].mxu0
        %v1963 = vadd.f32 %v831, %v1962
        %v1964 = vpop.f32.mrb[0].mxu0
        %1965 = vmatprep.mubr.bf16.mxu0 %v714
        %1966 = vmatmul.mubr.bf16.gmra.mrb[0].mxu0 %v713
        %v1967 = vpop.f32.mrb[0].mxu0
        %v1968 = vadd.f32 %v831, %v1967
        %v1969 = vpop.f32.mrb[0].mxu0
        %v1970 = vpop.f32.mrb[0].mxu0
        %v1971 = vadd.f32 %v831, %v1970
        %v1972 = vpop.f32.mrb[0].mxu0
        %1973 = vmatprep.mubr.bf16.mxu0 %v717
        %1974 = vmatmul.mubr.bf16.gmra.mrb[0].mxu0 %v716
        %v1975 = vpop.f32.mrb[0].mxu0
        %v1976 = vadd.f32 %v831, %v1975
        %v1977 = vpop.f32.mrb[0].mxu0
        %v1978 = vpop.f32.mrb[0].mxu0
        %v1979 = vadd.f32 %v831, %v1978
        %v1980 = vpop.f32.mrb[0].mxu0
        %1981 = vmatprep.mubr.bf16.mxu0 %v720
        %1982 = vmatmul.mubr.bf16.gmra.mrb[0].mxu0 %v719
        %v1983 = vpop.f32.mrb[0].mxu0
        %v1984 = vadd.f32 %v831, %v1983
        %v1985 = vpop.f32.mrb[0].mxu0
        %v1986 = vpop.f32.mrb[0].mxu0
        %v1987 = vadd.f32 %v831, %v1986
        %v1988 = vpop.f32.mrb[0].mxu0
        %1989 = vdwg.mxu0
        %1990 = vmatprep.subr.bf16.mxu0 0
        %1991 = vmatpush1.bf16.msra.mxu0 %v1125
        %1992 = vmatprep.subr.bf16.mxu0 0
        %1993 = vmatpush1.bf16.msra.mxu0 %v1128
        %1994 = vmatprep.subr.bf16.mxu0 0
        %1995 = vmatpush1.bf16.msra.mxu0 %v1131
        %1996 = vmatprep.subr.bf16.mxu0 0
        %1997 = vmatpush1.bf16.msra.mxu0 %v1134
        %1998 = vmatprep.subr.bf16.mxu0 0
        %1999 = vmatpush1.bf16.msra.mxu0 %v1137
        %2000 = vmatprep.subr.bf16.mxu0 0
        %2001 = vmatpush1.bf16.msra.mxu0 %v1140
        %2002 = vmatprep.subr.bf16.mxu0 0
        %2003 = vmatpush1.bf16.msra.mxu0 %v1143
        %2004 = vmatprep.subr.bf16.mxu0 0
        %2005 = vmatpush1.bf16.msra.mxu0 %v1146
        %2006 = vmatprep.subr.bf16.mxu0 0
        %2007 = vmatpush1.bf16.msra.mxu0 0
        %2008 = vmatprep.subr.bf16.mxu0 0
        %2009 = vmatpush1.bf16.msra.mxu0 0
        %2010 = vmatprep.subr.bf16.mxu0 0
        %2011 = vmatpush1.bf16.msra.mxu0 0
        %2012 = vmatprep.subr.bf16.mxu0 0
        %2013 = vmatpush1.bf16.msra.mxu0 0
        %2014 = vmatprep.subr.bf16.mxu0 0
        %2015 = vmatpush1.bf16.msra.mxu0 0
        %2016 = vmatprep.subr.bf16.mxu0 0
        %2017 = vmatpush1.bf16.msra.mxu0 0
        %2018 = vmatprep.subr.bf16.mxu0 0
        %2019 = vmatpush1.bf16.msra.mxu0 0
        %2020 = vmatprep.subr.bf16.mxu0 0
        %2021 = vmatpush1.bf16.msra.mxu0 0
        %2022 = vmatprep.mubr.bf16.mxu0 0
        %2023 = vmatmul.mubr.bf16.gmra.mrb[0].mxu0 %v652
        %v2024 = vpop.f32.mrb[0].mxu0
        %v2025 = vadd.f32 %v1800, %v2024
        %v2026 = vpop.f32.mrb[0].mxu0
        %v2027 = vpop.f32.mrb[0].mxu0
        %v2028 = vadd.f32 %v1803, %v2027
        %v2029 = vpop.f32.mrb[0].mxu0
        %2030 = vmatprep.mubr.bf16.mxu0 0
        %2031 = vmatmul.mubr.bf16.gmra.mrb[0].mxu0 %v655
        %v2032 = vpop.f32.mrb[0].mxu0
        %v2033 = vadd.f32 %v1808, %v2032
        %v2034 = vpop.f32.mrb[0].mxu0
        %v2035 = vpop.f32.mrb[0].mxu0
        %v2036 = vadd.f32 %v1811, %v2035
        %v2037 = vpop.f32.mrb[0].mxu0
        %2038 = vmatprep.mubr.bf16.mxu0 0
        %2039 = vmatmul.mubr.bf16.gmra.mrb[0].mxu0 %v658
        %v2040 = vpop.f32.mrb[0].mxu0
        %v2041 = vadd.f32 %v1816, %v2040
        %v2042 = vpop.f32.mrb[0].mxu0
        %v2043 = vpop.f32.mrb[0].mxu0
        %v2044 = vadd.f32 %v1819, %v2043
        %v2045 = vpop.f32.mrb[0].mxu0
        %2046 = vmatprep.mubr.bf16.mxu0 0
        %2047 = vmatmul.mubr.bf16.gmra.mrb[0].mxu0 %v661
        %v2048 = vpop.f32.mrb[0].mxu0
        %v2049 = vadd.f32 %v1824, %v2048
        %v2050 = vpop.f32.mrb[0].mxu0
        %v2051 = vpop.f32.mrb[0].mxu0
        %v2052 = vadd.f32 %v1827, %v2051
        %v2053 = vpop.f32.mrb[0].mxu0
        %2054 = vmatprep.mubr.bf16.mxu0 0
        %2055 = vmatmul.mubr.bf16.gmra.mrb[0].mxu0 %v664
        %v2056 = vpop.f32.mrb[0].mxu0
        %v2057 = vadd.f32 %v1832, %v2056
        %v2058 = vpop.f32.mrb[0].mxu0
        %v2059 = vpop.f32.mrb[0].mxu0
        %v2060 = vadd.f32 %v1835, %v2059
        %v2061 = vpop.f32.mrb[0].mxu0
        %2062 = vmatprep.mubr.bf16.mxu0 0
        %2063 = vmatmul.mubr.bf16.gmra.mrb[0].mxu0 %v667
        %v2064 = vpop.f32.mrb[0].mxu0
        %v2065 = vadd.f32 %v1840, %v2064
        %v2066 = vpop.f32.mrb[0].mxu0
        %v2067 = vpop.f32.mrb[0].mxu0
        %v2068 = vadd.f32 %v1843, %v2067
        %v2069 = vpop.f32.mrb[0].mxu0
        %2070 = vmatprep.mubr.bf16.mxu0 0
        %2071 = vmatmul.mubr.bf16.gmra.mrb[0].mxu0 %v670
        %v2072 = vpop.f32.mrb[0].mxu0
        %v2073 = vadd.f32 %v1848, %v2072
        %v2074 = vpop.f32.mrb[0].mxu0
        %v2075 = vpop.f32.mrb[0].mxu0
        %v2076 = vadd.f32 %v1851, %v2075
        %v2077 = vpop.f32.mrb[0].mxu0
        %2078 = vmatprep.mubr.bf16.mxu0 0
        %2079 = vmatmul.mubr.bf16.gmra.mrb[0].mxu0 %v673
        %v2080 = vpop.f32.mrb[0].mxu0
        %v2081 = vadd.f32 %v1856, %v2080
        %v2082 = vpop.f32.mrb[0].mxu0
        %v2083 = vpop.f32.mrb[0].mxu0
        %v2084 = vadd.f32 %v1859, %v2083
        %v2085 = vpop.f32.mrb[0].mxu0
        %2086 = vmatprep.mubr.bf16.mxu0 0
        %2087 = vmatmul.mubr.bf16.gmra.mrb[0].mxu0 %v676
        %v2088 = vpop.f32.mrb[0].mxu0
        %v2089 = vadd.f32 %v1864, %v2088
        %v2090 = vpop.f32.mrb[0].mxu0
        %v2091 = vpop.f32.mrb[0].mxu0
        %v2092 = vadd.f32 %v1867, %v2091
        %v2093 = vpop.f32.mrb[0].mxu0
        %2094 = vmatprep.mubr.bf16.mxu0 0
        %2095 = vmatmul.mubr.bf16.gmra.mrb[0].mxu0 %v679
        %v2096 = vpop.f32.mrb[0].mxu0
        %v2097 = vadd.f32 %v1872, %v2096
        %v2098 = vpop.f32.mrb[0].mxu0
        %v2099 = vpop.f32.mrb[0].mxu0
        %v2100 = vadd.f32 %v1875, %v2099
        %v2101 = vpop.f32.mrb[0].mxu0
        %2102 = vmatprep.mubr.bf16.mxu0 0
        %2103 = vmatmul.mubr.bf16.gmra.mrb[0].mxu0 %v682
        %v2104 = vpop.f32.mrb[0].mxu0
        %v2105 = vadd.f32 %v1880, %v2104
        %v2106 = vpop.f32.mrb[0].mxu0
        %v2107 = vpop.f32.mrb[0].mxu0
        %v2108 = vadd.f32 %v1883, %v2107
        %v2109 = vpop.f32.mrb[0].mxu0
        %2110 = vmatprep.mubr.bf16.mxu0 0
        %2111 = vmatmul.mubr.bf16.gmra.mrb[0].mxu0 %v685
        %v2112 = vpop.f32.mrb[0].mxu0
        %v2113 = vadd.f32 %v1888, %v2112
        %v2114 = vpop.f32.mrb[0].mxu0
        %v2115 = vpop.f32.mrb[0].mxu0
        %v2116 = vadd.f32 %v1891, %v2115
        %v2117 = vpop.f32.mrb[0].mxu0
        %2118 = vmatprep.mubr.bf16.mxu0 0
        %2119 = vmatmul.mubr.bf16.gmra.mrb[0].mxu0 %v688
        %v2120 = vpop.f32.mrb[0].mxu0
        %v2121 = vadd.f32 %v1896, %v2120
        %v2122 = vpop.f32.mrb[0].mxu0
        %v2123 = vpop.f32.mrb[0].mxu0
        %v2124 = vadd.f32 %v1899, %v2123
        %v2125 = vpop.f32.mrb[0].mxu0
        %2126 = vmatprep.mubr.bf16.mxu0 0
        %2127 = vmatmul.mubr.bf16.gmra.mrb[0].mxu0 %v691
        %v2128 = vpop.f32.mrb[0].mxu0
        %v2129 = vadd.f32 %v1904, %v2128
        %v2130 = vpop.f32.mrb[0].mxu0
        %v2131 = vpop.f32.mrb[0].mxu0
        %v2132 = vadd.f32 %v1907, %v2131
        %v2133 = vpop.f32.mrb[0].mxu0
        %2134 = vmatprep.mubr.bf16.mxu0 0
        %2135 = vmatmul.mubr.bf16.gmra.mrb[0].mxu0 %v694
        %v2136 = vpop.f32.mrb[0].mxu0
        %v2137 = vadd.f32 %v1912, %v2136
        %v2138 = vpop.f32.mrb[0].mxu0
        %v2139 = vpop.f32.mrb[0].mxu0
        %v2140 = vadd.f32 %v1915, %v2139
        %v2141 = vpop.f32.mrb[0].mxu0
        %2142 = vmatprep.mubr.bf16.mxu0 0
        %2143 = vmatmul.mubr.bf16.gmra.mrb[0].mxu0 %v697
        %v2144 = vpop.f32.mrb[0].mxu0
        %v2145 = vadd.f32 %v1920, %v2144
        %v2146 = vpop.f32.mrb[0].mxu0
        %v2147 = vpop.f32.mrb[0].mxu0
        %v2148 = vadd.f32 %v1923, %v2147
        %v2149 = vpop.f32.mrb[0].mxu0
        %2150 = vmatprep.mubr.bf16.mxu0 0
        %2151 = vmatmul.mubr.bf16.gmra.mrb[0].mxu0 %v700
        %v2152 = vpop.f32.mrb[0].mxu0
        %v2153 = vadd.f32 %v1928, %v2152
        %v2154 = vpop.f32.mrb[0].mxu0
        %v2155 = vpop.f32.mrb[0].mxu0
        %v2156 = vadd.f32 %v1931, %v2155
        %v2157 = vpop.f32.mrb[0].mxu0
        %2158 = vmatprep.mubr.bf16.mxu0 0
        %2159 = vmatmul.mubr.bf16.gmra.mrb[0].mxu0 %v703
        %v2160 = vpop.f32.mrb[0].mxu0
        %v2161 = vadd.f32 %v1936, %v2160
        %v2162 = vpop.f32.mrb[0].mxu0
        %v2163 = vpop.f32.mrb[0].mxu0
        %v2164 = vadd.f32 %v1939, %v2163
        %v2165 = vpop.f32.mrb[0].mxu0
        %2166 = vmatprep.mubr.bf16.mxu0 0
        %2167 = vmatmul.mubr.bf16.gmra.mrb[0].mxu0 %v706
        %v2168 = vpop.f32.mrb[0].mxu0
        %v2169 = vadd.f32 %v1944, %v2168
        %v2170 = vpop.f32.mrb[0].mxu0
        %v2171 = vpop.f32.mrb[0].mxu0
        %v2172 = vadd.f32 %v1947, %v2171
        %v2173 = vpop.f32.mrb[0].mxu0
        %2174 = vmatprep.mubr.bf16.mxu0 0
        %2175 = vmatmul.mubr.bf16.gmra.mrb[0].mxu0 %v709
        %v2176 = vpop.f32.mrb[0].mxu0
        %v2177 = vadd.f32 %v1952, %v2176
        %v2178 = vpop.f32.mrb[0].mxu0
        %v2179 = vpop.f32.mrb[0].mxu0
        %v2180 = vadd.f32 %v1955, %v2179
        %v2181 = vpop.f32.mrb[0].mxu0
        %2182 = vmatprep.mubr.bf16.mxu0 0
        %2183 = vmatmul.mubr.bf16.gmra.mrb[0].mxu0 %v712
        %v2184 = vpop.f32.mrb[0].mxu0
        %v2185 = vadd.f32 %v1960, %v2184
        %v2186 = vpop.f32.mrb[0].mxu0
        %v2187 = vpop.f32.mrb[0].mxu0
        %v2188 = vadd.f32 %v1963, %v2187
        %v2189 = vpop.f32.mrb[0].mxu0
        %2190 = vmatprep.mubr.bf16.mxu0 0
        %2191 = vmatmul.mubr.bf16.gmra.mrb[0].mxu0 %v715
        %v2192 = vpop.f32.mrb[0].mxu0
        %v2193 = vadd.f32 %v1968, %v2192
        %v2194 = vpop.f32.mrb[0].mxu0
        %v2195 = vpop.f32.mrb[0].mxu0
        %v2196 = vadd.f32 %v1971, %v2195
        %v2197 = vpop.f32.mrb[0].mxu0
        %2198 = vmatprep.mubr.bf16.mxu0 0
        %2199 = vmatmul.mubr.bf16.gmra.mrb[0].mxu0 %v718
        %v2200 = vpop.f32.mrb[0].mxu0
        %v2201 = vadd.f32 %v1976, %v2200
        %v2202 = vpop.f32.mrb[0].mxu0
        %v2203 = vpop.f32.mrb[0].mxu0
        %v2204 = vadd.f32 %v1979, %v2203
        %v2205 = vpop.f32.mrb[0].mxu0
        %2206 = vmatprep.mubr.bf16.mxu0 0
        %2207 = vmatmul.mubr.bf16.gmra.mrb[0].mxu0 %v721
        %v2208 = vpop.f32.mrb[0].mxu0
        %v2209 = vadd.f32 %v1984, %v2208
        %v2210 = vpop.f32.mrb[0].mxu0
        %v2211 = vpop.f32.mrb[0].mxu0
        %v2212 = vadd.f32 %v1987, %v2211
        %v2213 = vpop.f32.mrb[0].mxu0
        %2214 = vdwg.mxu0
        %v2215 = vmax.f32 %v1527, 0.0
        %v2216 = vmax.f32 %v1529, 0.0
        %v2217 = vmax.f32 %v2025, 0.0
        %v2218 = vmax.f32 %v1531, 0.0
        %v2219 = vmax.f32 %v1533, 0.0
        %v2220 = vmax.f32 %v2028, 0.0
        %v2221 = vmax.f32 %v1537, 0.0
        %v2222 = vmax.f32 %v1539, 0.0
        %v2223 = vmax.f32 %v2033, 0.0
        %v2224 = vmax.f32 %v1541, 0.0
        %v2225 = vmax.f32 %v1543, 0.0
        %v2226 = vmax.f32 %v2036, 0.0
        %v2227 = vmax.f32 %v1547, 0.0
        %v2228 = vmax.f32 %v1549, 0.0
        %v2229 = vmax.f32 %v2041, 0.0
        %v2230 = vmax.f32 %v1551, 0.0
        %v2231 = vmax.f32 %v1553, 0.0
        %v2232 = vmax.f32 %v2044, 0.0
        %v2233 = vmax.f32 %v1557, 0.0
        %v2234 = vmax.f32 %v1559, 0.0
        %v2235 = vmax.f32 %v2049, 0.0
        %v2236 = vmax.f32 %v1561, 0.0
        %v2237 = vmax.f32 %v1563, 0.0
        %v2238 = vmax.f32 %v2052, 0.0
        %v2239 = vmax.f32 %v1567, 0.0
        %v2240 = vmax.f32 %v1569, 0.0
        %v2241 = vmax.f32 %v2057, 0.0
        %v2242 = vmax.f32 %v1571, 0.0
        %v2243 = vmax.f32 %v1573, 0.0
        %v2244 = vmax.f32 %v2060, 0.0
        %v2245 = vmax.f32 %v1577, 0.0
        %v2246 = vmax.f32 %v1579, 0.0
        %v2247 = vmax.f32 %v2065, 0.0
        %v2248 = vmax.f32 %v1581, 0.0
        %v2249 = vmax.f32 %v1583, 0.0
        %v2250 = vmax.f32 %v2068, 0.0
        %v2251 = vmax.f32 %v1587, 0.0
        %v2252 = vmax.f32 %v1589, 0.0
        %v2253 = vmax.f32 %v2073, 0.0
        %v2254 = vmax.f32 %v1591, 0.0
        %v2255 = vmax.f32 %v1593, 0.0
        %v2256 = vmax.f32 %v2076, 0.0
        %v2257 = vmax.f32 %v1597, 0.0
        %v2258 = vmax.f32 %v1599, 0.0
        %v2259 = vmax.f32 %v2081, 0.0
        %v2260 = vmax.f32 %v1601, 0.0
        %v2261 = vmax.f32 %v1603, 0.0
        %v2262 = vmax.f32 %v2084, 0.0
        %v2263 = vmax.f32 %v1607, 0.0
        %v2264 = vmax.f32 %v1609, 0.0
        %v2265 = vmax.f32 %v2089, 0.0
        %v2266 = vmax.f32 %v1611, 0.0
        %v2267 = vmax.f32 %v1613, 0.0
        %v2268 = vmax.f32 %v2092, 0.0
        %v2269 = vmax.f32 %v1617, 0.0
        %v2270 = vmax.f32 %v1619, 0.0
        %v2271 = vmax.f32 %v2097, 0.0
        %v2272 = vmax.f32 %v1621, 0.0
        %v2273 = vmax.f32 %v1623, 0.0
        %v2274 = vmax.f32 %v2100, 0.0
        %v2275 = vmax.f32 %v1627, 0.0
        %v2276 = vmax.f32 %v1629, 0.0
        %v2277 = vmax.f32 %v2105, 0.0
        %v2278 = vmax.f32 %v1631, 0.0
        %v2279 = vmax.f32 %v1633, 0.0
        %v2280 = vmax.f32 %v2108, 0.0
        %v2281 = vmax.f32 %v1637, 0.0
        %v2282 = vmax.f32 %v1639, 0.0
        %v2283 = vmax.f32 %v2113, 0.0
        %v2284 = vmax.f32 %v1641, 0.0
        %v2285 = vmax.f32 %v1643, 0.0
        %v2286 = vmax.f32 %v2116, 0.0
        %v2287 = vmax.f32 %v1647, 0.0
        %v2288 = vmax.f32 %v1649, 0.0
        %v2289 = vmax.f32 %v2121, 0.0
        %v2290 = vmax.f32 %v1651, 0.0
        %v2291 = vmax.f32 %v1653, 0.0
        %v2292 = vmax.f32 %v2124, 0.0
        %v2293 = vmax.f32 %v1657, 0.0
        %v2294 = vmax.f32 %v1659, 0.0
        %v2295 = vmax.f32 %v2129, 0.0
        %v2296 = vmax.f32 %v1661, 0.0
        %v2297 = vmax.f32 %v1663, 0.0
        %v2298 = vmax.f32 %v2132, 0.0
        %v2299 = vmax.f32 %v1667, 0.0
        %v2300 = vmax.f32 %v1669, 0.0
        %v2301 = vmax.f32 %v2137, 0.0
        %v2302 = vmax.f32 %v1671, 0.0
        %v2303 = vmax.f32 %v1673, 0.0
        %v2304 = vmax.f32 %v2140, 0.0
        %v2305 = vmax.f32 %v1677, 0.0
        %v2306 = vmax.f32 %v1679, 0.0
        %v2307 = vmax.f32 %v2145, 0.0
        %v2308 = vmax.f32 %v1681, 0.0
        %v2309 = vmax.f32 %v1683, 0.0
        %v2310 = vmax.f32 %v2148, 0.0
        %v2311 = vmax.f32 %v1687, 0.0
        %v2312 = vmax.f32 %v1689, 0.0
        %v2313 = vmax.f32 %v2153, 0.0
        %v2314 = vmax.f32 %v1691, 0.0
        %v2315 = vmax.f32 %v1693, 0.0
        %v2316 = vmax.f32 %v2156, 0.0
        %v2317 = vmax.f32 %v1697, 0.0
        %v2318 = vmax.f32 %v1699, 0.0
        %v2319 = vmax.f32 %v2161, 0.0
        %v2320 = vmax.f32 %v1701, 0.0
        %v2321 = vmax.f32 %v1703, 0.0
        %v2322 = vmax.f32 %v2164, 0.0
        %v2323 = vmax.f32 %v1707, 0.0
        %v2324 = vmax.f32 %v1709, 0.0
        %v2325 = vmax.f32 %v2169, 0.0
        %v2326 = vmax.f32 %v1711, 0.0
        %v2327 = vmax.f32 %v1713, 0.0
        %v2328 = vmax.f32 %v2172, 0.0
        %v2329 = vmax.f32 %v1717, 0.0
        %v2330 = vmax.f32 %v1719, 0.0
        %v2331 = vmax.f32 %v2177, 0.0
        %v2332 = vmax.f32 %v1721, 0.0
        %v2333 = vmax.f32 %v1723, 0.0
        %v2334 = vmax.f32 %v2180, 0.0
        %v2335 = vmax.f32 %v1727, 0.0
        %v2336 = vmax.f32 %v1729, 0.0
        %v2337 = vmax.f32 %v2185, 0.0
        %v2338 = vmax.f32 %v1731, 0.0
        %v2339 = vmax.f32 %v1733, 0.0
        %v2340 = vmax.f32 %v2188, 0.0
        %v2341 = vmax.f32 %v1737, 0.0
        %v2342 = vmax.f32 %v1739, 0.0
        %v2343 = vmax.f32 %v2193, 0.0
        %v2344 = vmax.f32 %v1741, 0.0
        %v2345 = vmax.f32 %v1743, 0.0
        %v2346 = vmax.f32 %v2196, 0.0
        %v2347 = vmax.f32 %v1747, 0.0
        %v2348 = vmax.f32 %v1749, 0.0
        %v2349 = vmax.f32 %v2201, 0.0
        %v2350 = vmax.f32 %v1751, 0.0
        %v2351 = vmax.f32 %v1753, 0.0
        %v2352 = vmax.f32 %v2204, 0.0
        %v2353 = vmax.f32 %v1757, 0.0
        %v2354 = vmax.f32 %v1759, 0.0
        %v2355 = vmax.f32 %v2209, 0.0
        %v2356 = vmax.f32 %v1761, 0.0
        %v2357 = vmax.f32 %v1763, 0.0
        %v2358 = vmax.f32 %v2212, 0.0
        %v2359 = vmax.f32 %v2215, %v2218
        %v2360 = vrot.slane %v2359, 4
        %v2361 = vmax.f32 %v2359, %v2360
        %v2362 = vrot.slane %v2361, 2
        %v2363 = vmax.f32 %v2361, %v2362
        %v2364 = vrot.slane %v2363, 1
        %v2365 = vmax.f32 %v2363, %v2364
        %v2366 = vmax.f32 %v2216, %v2219
        %v2367 = vrot.slane %v2366, 4
        %v2368 = vmax.f32 %v2366, %v2367
        %v2369 = vrot.slane %v2368, 2
        %v2370 = vmax.f32 %v2368, %v2369
        %v2371 = vrot.slane %v2370, 1
        %v2372 = vmax.f32 %v2370, %v2371
        %v2373 = vmax.f32 %v2217, %v2220
        %v2374 = vrot.slane %v2373, 4
        %v2375 = vmax.f32 %v2373, %v2374
        %v2376 = vrot.slane %v2375, 2
        %v2377 = vmax.f32 %v2375, %v2376
        %v2378 = vrot.slane %v2377, 1
        %v2379 = vmax.f32 %v2377, %v2378
        %v2380 = vmax.f32 %v2233, %v2236
        %v2381 = vrot.slane %v2380, 4
        %v2382 = vmax.f32 %v2380, %v2381
        %v2383 = vrot.slane %v2382, 2
        %v2384 = vmax.f32 %v2382, %v2383
        %v2385 = vrot.slane %v2384, 1
        %v2386 = vmax.f32 %v2384, %v2385
        %v2387 = vmax.f32 %v2234, %v2237
        %v2388 = vrot.slane %v2387, 4
        %v2389 = vmax.f32 %v2387, %v2388
        %v2390 = vrot.slane %v2389, 2
        %v2391 = vmax.f32 %v2389, %v2390
        %v2392 = vrot.slane %v2391, 1
        %v2393 = vmax.f32 %v2391, %v2392
        %v2394 = vmax.f32 %v2235, %v2238
        %v2395 = vrot.slane %v2394, 4
        %v2396 = vmax.f32 %v2394, %v2395
        %v2397 = vrot.slane %v2396, 2
        %v2398 = vmax.f32 %v2396, %v2397
        %v2399 = vrot.slane %v2398, 1
        %v2400 = vmax.f32 %v2398, %v2399
        %v2401 = vmax.f32 %v2251, %v2254
        %v2402 = vrot.slane %v2401, 4
        %v2403 = vmax.f32 %v2401, %v2402
        %v2404 = vrot.slane %v2403, 2
        %v2405 = vmax.f32 %v2403, %v2404
        %v2406 = vrot.slane %v2405, 1
        %v2407 = vmax.f32 %v2405, %v2406
        %v2408 = vmax.f32 %v2252, %v2255
        %v2409 = vrot.slane %v2408, 4
        %v2410 = vmax.f32 %v2408, %v2409
        %v2411 = vrot.slane %v2410, 2
        %v2412 = vmax.f32 %v2410, %v2411
        %v2413 = vrot.slane %v2412, 1
        %v2414 = vmax.f32 %v2412, %v2413
        %v2415 = vmax.f32 %v2253, %v2256
        %v2416 = vrot.slane %v2415, 4
        %v2417 = vmax.f32 %v2415, %v2416
        %v2418 = vrot.slane %v2417, 2
        %v2419 = vmax.f32 %v2417, %v2418
        %v2420 = vrot.slane %v2419, 1
        %v2421 = vmax.f32 %v2419, %v2420
        %v2422 = vmax.f32 %v2269, %v2272
        %v2423 = vrot.slane %v2422, 4
        %v2424 = vmax.f32 %v2422, %v2423
        %v2425 = vrot.slane %v2424, 2
        %v2426 = vmax.f32 %v2424, %v2425
        %v2427 = vrot.slane %v2426, 1
        %v2428 = vmax.f32 %v2426, %v2427
        %v2429 = vmax.f32 %v2270, %v2273
        %v2430 = vrot.slane %v2429, 4
        %v2431 = vmax.f32 %v2429, %v2430
        %v2432 = vrot.slane %v2431, 2
        %v2433 = vmax.f32 %v2431, %v2432
        %v2434 = vrot.slane %v2433, 1
        %v2435 = vmax.f32 %v2433, %v2434
        %v2436 = vmax.f32 %v2271, %v2274
        %v2437 = vrot.slane %v2436, 4
        %v2438 = vmax.f32 %v2436, %v2437
        %v2439 = vrot.slane %v2438, 2
        %v2440 = vmax.f32 %v2438, %v2439
        %v2441 = vrot.slane %v2440, 1
        %v2442 = vmax.f32 %v2440, %v2441
        %v2443 = vmax.f32 %v2287, %v2290
        %v2444 = vrot.slane %v2443, 4
        %v2445 = vmax.f32 %v2443, %v2444
        %v2446 = vrot.slane %v2445, 2
        %v2447 = vmax.f32 %v2445, %v2446
        %v2448 = vrot.slane %v2447, 1
        %v2449 = vmax.f32 %v2447, %v2448
        %v2450 = vmax.f32 %v2288, %v2291
        %v2451 = vrot.slane %v2450, 4
        %v2452 = vmax.f32 %v2450, %v2451
        %v2453 = vrot.slane %v2452, 2
        %v2454 = vmax.f32 %v2452, %v2453
        %v2455 = vrot.slane %v2454, 1
        %v2456 = vmax.f32 %v2454, %v2455
        %v2457 = vmax.f32 %v2289, %v2292
        %v2458 = vrot.slane %v2457, 4
        %v2459 = vmax.f32 %v2457, %v2458
        %v2460 = vrot.slane %v2459, 2
        %v2461 = vmax.f32 %v2459, %v2460
        %v2462 = vrot.slane %v2461, 1
        %v2463 = vmax.f32 %v2461, %v2462
        %v2464 = vmax.f32 %v2305, %v2308
        %v2465 = vrot.slane %v2464, 4
        %v2466 = vmax.f32 %v2464, %v2465
        %v2467 = vrot.slane %v2466, 2
        %v2468 = vmax.f32 %v2466, %v2467
        %v2469 = vrot.slane %v2468, 1
        %v2470 = vmax.f32 %v2468, %v2469
        %v2471 = vmax.f32 %v2306, %v2309
        %v2472 = vrot.slane %v2471, 4
        %v2473 = vmax.f32 %v2471, %v2472
        %v2474 = vrot.slane %v2473, 2
        %v2475 = vmax.f32 %v2473, %v2474
        %v2476 = vrot.slane %v2475, 1
        %v2477 = vmax.f32 %v2475, %v2476
        %v2478 = vmax.f32 %v2307, %v2310
        %v2479 = vrot.slane %v2478, 4
        %v2480 = vmax.f32 %v2478, %v2479
        %v2481 = vrot.slane %v2480, 2
        %v2482 = vmax.f32 %v2480, %v2481
        %v2483 = vrot.slane %v2482, 1
        %v2484 = vmax.f32 %v2482, %v2483
        %v2485 = vmax.f32 %v2323, %v2326
        %v2486 = vrot.slane %v2485, 4
        %v2487 = vmax.f32 %v2485, %v2486
        %v2488 = vrot.slane %v2487, 2
        %v2489 = vmax.f32 %v2487, %v2488
        %v2490 = vrot.slane %v2489, 1
        %v2491 = vmax.f32 %v2489, %v2490
        %v2492 = vmax.f32 %v2324, %v2327
        %v2493 = vrot.slane %v2492, 4
        %v2494 = vmax.f32 %v2492, %v2493
        %v2495 = vrot.slane %v2494, 2
        %v2496 = vmax.f32 %v2494, %v2495
        %v2497 = vrot.slane %v2496, 1
        %v2498 = vmax.f32 %v2496, %v2497
        %v2499 = vmax.f32 %v2325, %v2328
        %v2500 = vrot.slane %v2499, 4
        %v2501 = vmax.f32 %v2499, %v2500
        %v2502 = vrot.slane %v2501, 2
        %v2503 = vmax.f32 %v2501, %v2502
        %v2504 = vrot.slane %v2503, 1
        %v2505 = vmax.f32 %v2503, %v2504
        %v2506 = vmax.f32 %v2341, %v2344
        %v2507 = vrot.slane %v2506, 4
        %v2508 = vmax.f32 %v2506, %v2507
        %v2509 = vrot.slane %v2508, 2
        %v2510 = vmax.f32 %v2508, %v2509
        %v2511 = vrot.slane %v2510, 1
        %v2512 = vmax.f32 %v2510, %v2511
        %v2513 = vmax.f32 %v2342, %v2345
        %v2514 = vrot.slane %v2513, 4
        %v2515 = vmax.f32 %v2513, %v2514
        %v2516 = vrot.slane %v2515, 2
        %v2517 = vmax.f32 %v2515, %v2516
        %v2518 = vrot.slane %v2517, 1
        %v2519 = vmax.f32 %v2517, %v2518
        %v2520 = vmax.f32 %v2343, %v2346
        %v2521 = vrot.slane %v2520, 4
        %v2522 = vmax.f32 %v2520, %v2521
        %v2523 = vrot.slane %v2522, 2
        %v2524 = vmax.f32 %v2522, %v2523
        %v2525 = vrot.slane %v2524, 1
        %v2526 = vmax.f32 %v2524, %v2525
        %v2527 = vmax.f32 %v2221, %v2224
        %v2528 = vrot.slane %v2527, 4
        %v2529 = vmax.f32 %v2527, %v2528
        %v2530 = vrot.slane %v2529, 2
        %v2531 = vmax.f32 %v2529, %v2530
        %v2532 = vrot.slane %v2531, 1
        %v2533 = vmax.f32 %v2531, %v2532
        %v2534 = vmax.f32 %v2222, %v2225
        %v2535 = vrot.slane %v2534, 4
        %v2536 = vmax.f32 %v2534, %v2535
        %v2537 = vrot.slane %v2536, 2
        %v2538 = vmax.f32 %v2536, %v2537
        %v2539 = vrot.slane %v2538, 1
        %v2540 = vmax.f32 %v2538, %v2539
        %v2541 = vmax.f32 %v2223, %v2226
        %v2542 = vrot.slane %v2541, 4
        %v2543 = vmax.f32 %v2541, %v2542
        %v2544 = vrot.slane %v2543, 2
        %v2545 = vmax.f32 %v2543, %v2544
        %v2546 = vrot.slane %v2545, 1
        %v2547 = vmax.f32 %v2545, %v2546
        %v2548 = vmax.f32 %v2239, %v2242
        %v2549 = vrot.slane %v2548, 4
        %v2550 = vmax.f32 %v2548, %v2549
        %v2551 = vrot.slane %v2550, 2
        %v2552 = vmax.f32 %v2550, %v2551
        %v2553 = vrot.slane %v2552, 1
        %v2554 = vmax.f32 %v2552, %v2553
        %v2555 = vmax.f32 %v2240, %v2243
        %v2556 = vrot.slane %v2555, 4
        %v2557 = vmax.f32 %v2555, %v2556
        %v2558 = vrot.slane %v2557, 2
        %v2559 = vmax.f32 %v2557, %v2558
        %v2560 = vrot.slane %v2559, 1
        %v2561 = vmax.f32 %v2559, %v2560
        %v2562 = vmax.f32 %v2241, %v2244
        %v2563 = vrot.slane %v2562, 4
        %v2564 = vmax.f32 %v2562, %v2563
        %v2565 = vrot.slane %v2564, 2
        %v2566 = vmax.f32 %v2564, %v2565
        %v2567 = vrot.slane %v2566, 1
        %v2568 = vmax.f32 %v2566, %v2567
        %v2569 = vmax.f32 %v2257, %v2260
        %v2570 = vrot.slane %v2569, 4
        %v2571 = vmax.f32 %v2569, %v2570
        %v2572 = vrot.slane %v2571, 2
        %v2573 = vmax.f32 %v2571, %v2572
        %v2574 = vrot.slane %v2573, 1
        %v2575 = vmax.f32 %v2573, %v2574
        %v2576 = vmax.f32 %v2258, %v2261
        %v2577 = vrot.slane %v2576, 4
        %v2578 = vmax.f32 %v2576, %v2577
        %v2579 = vrot.slane %v2578, 2
        %v2580 = vmax.f32 %v2578, %v2579
        %v2581 = vrot.slane %v2580, 1
        %v2582 = vmax.f32 %v2580, %v2581
        %v2583 = vmax.f32 %v2259, %v2262
        %v2584 = vrot.slane %v2583, 4
        %v2585 = vmax.f32 %v2583, %v2584
        %v2586 = vrot.slane %v2585, 2
        %v2587 = vmax.f32 %v2585, %v2586
        %v2588 = vrot.slane %v2587, 1
        %v2589 = vmax.f32 %v2587, %v2588
        %v2590 = vmax.f32 %v2275, %v2278
        %v2591 = vrot.slane %v2590, 4
        %v2592 = vmax.f32 %v2590, %v2591
        %v2593 = vrot.slane %v2592, 2
        %v2594 = vmax.f32 %v2592, %v2593
        %v2595 = vrot.slane %v2594, 1
        %v2596 = vmax.f32 %v2594, %v2595
        %v2597 = vmax.f32 %v2276, %v2279
        %v2598 = vrot.slane %v2597, 4
        %v2599 = vmax.f32 %v2597, %v2598
        %v2600 = vrot.slane %v2599, 2
        %v2601 = vmax.f32 %v2599, %v2600
        %v2602 = vrot.slane %v2601, 1
        %v2603 = vmax.f32 %v2601, %v2602
        %v2604 = vmax.f32 %v2277, %v2280
        %v2605 = vrot.slane %v2604, 4
        %v2606 = vmax.f32 %v2604, %v2605
        %v2607 = vrot.slane %v2606, 2
        %v2608 = vmax.f32 %v2606, %v2607
        %v2609 = vrot.slane %v2608, 1
        %v2610 = vmax.f32 %v2608, %v2609
        %v2611 = vmax.f32 %v2293, %v2296
        %v2612 = vrot.slane %v2611, 4
        %v2613 = vmax.f32 %v2611, %v2612
        %v2614 = vrot.slane %v2613, 2
        %v2615 = vmax.f32 %v2613, %v2614
        %v2616 = vrot.slane %v2615, 1
        %v2617 = vmax.f32 %v2615, %v2616
        %v2618 = vmax.f32 %v2294, %v2297
        %v2619 = vrot.slane %v2618, 4
        %v2620 = vmax.f32 %v2618, %v2619
        %v2621 = vrot.slane %v2620, 2
        %v2622 = vmax.f32 %v2620, %v2621
        %v2623 = vrot.slane %v2622, 1
        %v2624 = vmax.f32 %v2622, %v2623
        %v2625 = vmax.f32 %v2295, %v2298
        %v2626 = vrot.slane %v2625, 4
        %v2627 = vmax.f32 %v2625, %v2626
        %v2628 = vrot.slane %v2627, 2
        %v2629 = vmax.f32 %v2627, %v2628
        %v2630 = vrot.slane %v2629, 1
        %v2631 = vmax.f32 %v2629, %v2630
        %v2632 = vmax.f32 %v2311, %v2314
        %v2633 = vrot.slane %v2632, 4
        %v2634 = vmax.f32 %v2632, %v2633
        %v2635 = vrot.slane %v2634, 2
        %v2636 = vmax.f32 %v2634, %v2635
        %v2637 = vrot.slane %v2636, 1
        %v2638 = vmax.f32 %v2636, %v2637
        %v2639 = vmax.f32 %v2312, %v2315
        %v2640 = vrot.slane %v2639, 4
        %v2641 = vmax.f32 %v2639, %v2640
        %v2642 = vrot.slane %v2641, 2
        %v2643 = vmax.f32 %v2641, %v2642
        %v2644 = vrot.slane %v2643, 1
        %v2645 = vmax.f32 %v2643, %v2644
        %v2646 = vmax.f32 %v2313, %v2316
        %v2647 = vrot.slane %v2646, 4
        %v2648 = vmax.f32 %v2646, %v2647
        %v2649 = vrot.slane %v2648, 2
        %v2650 = vmax.f32 %v2648, %v2649
        %v2651 = vrot.slane %v2650, 1
        %v2652 = vmax.f32 %v2650, %v2651
        %v2653 = vmax.f32 %v2329, %v2332
        %v2654 = vrot.slane %v2653, 4
        %v2655 = vmax.f32 %v2653, %v2654
        %v2656 = vrot.slane %v2655, 2
        %v2657 = vmax.f32 %v2655, %v2656
        %v2658 = vrot.slane %v2657, 1
        %v2659 = vmax.f32 %v2657, %v2658
        %v2660 = vmax.f32 %v2330, %v2333
        %v2661 = vrot.slane %v2660, 4
        %v2662 = vmax.f32 %v2660, %v2661
        %v2663 = vrot.slane %v2662, 2
        %v2664 = vmax.f32 %v2662, %v2663
        %v2665 = vrot.slane %v2664, 1
        %v2666 = vmax.f32 %v2664, %v2665
        %v2667 = vmax.f32 %v2331, %v2334
        %v2668 = vrot.slane %v2667, 4
        %v2669 = vmax.f32 %v2667, %v2668
        %v2670 = vrot.slane %v2669, 2
        %v2671 = vmax.f32 %v2669, %v2670
        %v2672 = vrot.slane %v2671, 1
        %v2673 = vmax.f32 %v2671, %v2672
        %v2674 = vmax.f32 %v2347, %v2350
        %v2675 = vrot.slane %v2674, 4
        %v2676 = vmax.f32 %v2674, %v2675
        %v2677 = vrot.slane %v2676, 2
        %v2678 = vmax.f32 %v2676, %v2677
        %v2679 = vrot.slane %v2678, 1
        %v2680 = vmax.f32 %v2678, %v2679
        %v2681 = vmax.f32 %v2348, %v2351
        %v2682 = vrot.slane %v2681, 4
        %v2683 = vmax.f32 %v2681, %v2682
        %v2684 = vrot.slane %v2683, 2
        %v2685 = vmax.f32 %v2683, %v2684
        %v2686 = vrot.slane %v2685, 1
        %v2687 = vmax.f32 %v2685, %v2686
        %v2688 = vmax.f32 %v2349, %v2352
        %v2689 = vrot.slane %v2688, 4
        %v2690 = vmax.f32 %v2688, %v2689
        %v2691 = vrot.slane %v2690, 2
        %v2692 = vmax.f32 %v2690, %v2691
        %v2693 = vrot.slane %v2692, 1
        %v2694 = vmax.f32 %v2692, %v2693
        %vm2695 = vcmask 1043456
        %v2696 = vsel %vm2695, %v2227, -inf
        %v2697 = vrot.slane %v2696, 4
        %v2698 = vmax.f32 %v2696, %v2697
        %v2699 = vrot.slane %v2698, 2
        %v2700 = vmax.f32 %v2698, %v2699
        %v2701 = vrot.slane %v2700, 1
        %v2702 = vmax.f32 %v2700, %v2701
        %v2703 = vsel %vm2695, %v2228, -inf
        %v2704 = vrot.slane %v2703, 4
        %v2705 = vmax.f32 %v2703, %v2704
        %v2706 = vrot.slane %v2705, 2
        %v2707 = vmax.f32 %v2705, %v2706
        %v2708 = vrot.slane %v2707, 1
        %v2709 = vmax.f32 %v2707, %v2708
        %v2710 = vsel %vm2695, %v2229, -inf
        %v2711 = vrot.slane %v2710, 4
        %v2712 = vmax.f32 %v2710, %v2711
        %v2713 = vrot.slane %v2712, 2
        %v2714 = vmax.f32 %v2712, %v2713
        %v2715 = vrot.slane %v2714, 1
        %v2716 = vmax.f32 %v2714, %v2715
        %v2717 = vsel %vm2695, %v2245, -inf
        %v2718 = vrot.slane %v2717, 4
        %v2719 = vmax.f32 %v2717, %v2718
        %v2720 = vrot.slane %v2719, 2
        %v2721 = vmax.f32 %v2719, %v2720
        %v2722 = vrot.slane %v2721, 1
        %v2723 = vmax.f32 %v2721, %v2722
        %v2724 = vsel %vm2695, %v2246, -inf
        %v2725 = vrot.slane %v2724, 4
        %v2726 = vmax.f32 %v2724, %v2725
        %v2727 = vrot.slane %v2726, 2
        %v2728 = vmax.f32 %v2726, %v2727
        %v2729 = vrot.slane %v2728, 1
        %v2730 = vmax.f32 %v2728, %v2729
        %v2731 = vsel %vm2695, %v2247, -inf
        %v2732 = vrot.slane %v2731, 4
        %v2733 = vmax.f32 %v2731, %v2732
        %v2734 = vrot.slane %v2733, 2
        %v2735 = vmax.f32 %v2733, %v2734
        %v2736 = vrot.slane %v2735, 1
        %v2737 = vmax.f32 %v2735, %v2736
        %v2738 = vsel %vm2695, %v2263, -inf
        %v2739 = vrot.slane %v2738, 4
        %v2740 = vmax.f32 %v2738, %v2739
        %v2741 = vrot.slane %v2740, 2
        %v2742 = vmax.f32 %v2740, %v2741
        %v2743 = vrot.slane %v2742, 1
        %v2744 = vmax.f32 %v2742, %v2743
        %v2745 = vsel %vm2695, %v2264, -inf
        %v2746 = vrot.slane %v2745, 4
        %v2747 = vmax.f32 %v2745, %v2746
        %v2748 = vrot.slane %v2747, 2
        %v2749 = vmax.f32 %v2747, %v2748
        %v2750 = vrot.slane %v2749, 1
        %v2751 = vmax.f32 %v2749, %v2750
        %v2752 = vsel %vm2695, %v2265, -inf
        %v2753 = vrot.slane %v2752, 4
        %v2754 = vmax.f32 %v2752, %v2753
        %v2755 = vrot.slane %v2754, 2
        %v2756 = vmax.f32 %v2754, %v2755
        %v2757 = vrot.slane %v2756, 1
        %v2758 = vmax.f32 %v2756, %v2757
        %v2759 = vsel %vm2695, %v2281, -inf
        %v2760 = vrot.slane %v2759, 4
        %v2761 = vmax.f32 %v2759, %v2760
        %v2762 = vrot.slane %v2761, 2
        %v2763 = vmax.f32 %v2761, %v2762
        %v2764 = vrot.slane %v2763, 1
        %v2765 = vmax.f32 %v2763, %v2764
        %v2766 = vsel %vm2695, %v2282, -inf
        %v2767 = vrot.slane %v2766, 4
        %v2768 = vmax.f32 %v2766, %v2767
        %v2769 = vrot.slane %v2768, 2
        %v2770 = vmax.f32 %v2768, %v2769
        %v2771 = vrot.slane %v2770, 1
        %v2772 = vmax.f32 %v2770, %v2771
        %v2773 = vsel %vm2695, %v2283, -inf
        %v2774 = vrot.slane %v2773, 4
        %v2775 = vmax.f32 %v2773, %v2774
        %v2776 = vrot.slane %v2775, 2
        %v2777 = vmax.f32 %v2775, %v2776
        %v2778 = vrot.slane %v2777, 1
        %v2779 = vmax.f32 %v2777, %v2778
        %v2780 = vsel %vm2695, %v2299, -inf
        %v2781 = vrot.slane %v2780, 4
        %v2782 = vmax.f32 %v2780, %v2781
        %v2783 = vrot.slane %v2782, 2
        %v2784 = vmax.f32 %v2782, %v2783
        %v2785 = vrot.slane %v2784, 1
        %v2786 = vmax.f32 %v2784, %v2785
        %v2787 = vsel %vm2695, %v2300, -inf
        %v2788 = vrot.slane %v2787, 4
        %v2789 = vmax.f32 %v2787, %v2788
        %v2790 = vrot.slane %v2789, 2
        %v2791 = vmax.f32 %v2789, %v2790
        %v2792 = vrot.slane %v2791, 1
        %v2793 = vmax.f32 %v2791, %v2792
        %v2794 = vsel %vm2695, %v2301, -inf
        %v2795 = vrot.slane %v2794, 4
        %v2796 = vmax.f32 %v2794, %v2795
        %v2797 = vrot.slane %v2796, 2
        %v2798 = vmax.f32 %v2796, %v2797
        %v2799 = vrot.slane %v2798, 1
        %v2800 = vmax.f32 %v2798, %v2799
        %v2801 = vsel %vm2695, %v2317, -inf
        %v2802 = vrot.slane %v2801, 4
        %v2803 = vmax.f32 %v2801, %v2802
        %v2804 = vrot.slane %v2803, 2
        %v2805 = vmax.f32 %v2803, %v2804
        %v2806 = vrot.slane %v2805, 1
        %v2807 = vmax.f32 %v2805, %v2806
        %v2808 = vsel %vm2695, %v2318, -inf
        %v2809 = vrot.slane %v2808, 4
        %v2810 = vmax.f32 %v2808, %v2809
        %v2811 = vrot.slane %v2810, 2
        %v2812 = vmax.f32 %v2810, %v2811
        %v2813 = vrot.slane %v2812, 1
        %v2814 = vmax.f32 %v2812, %v2813
        %v2815 = vsel %vm2695, %v2319, -inf
        %v2816 = vrot.slane %v2815, 4
        %v2817 = vmax.f32 %v2815, %v2816
        %v2818 = vrot.slane %v2817, 2
        %v2819 = vmax.f32 %v2817, %v2818
        %v2820 = vrot.slane %v2819, 1
        %v2821 = vmax.f32 %v2819, %v2820
        %v2822 = vsel %vm2695, %v2335, -inf
        %v2823 = vrot.slane %v2822, 4
        %v2824 = vmax.f32 %v2822, %v2823
        %v2825 = vrot.slane %v2824, 2
        %v2826 = vmax.f32 %v2824, %v2825
        %v2827 = vrot.slane %v2826, 1
        %v2828 = vmax.f32 %v2826, %v2827
        %v2829 = vsel %vm2695, %v2336, -inf
        %v2830 = vrot.slane %v2829, 4
        %v2831 = vmax.f32 %v2829, %v2830
        %v2832 = vrot.slane %v2831, 2
        %v2833 = vmax.f32 %v2831, %v2832
        %v2834 = vrot.slane %v2833, 1
        %v2835 = vmax.f32 %v2833, %v2834
        %v2836 = vsel %vm2695, %v2337, -inf
        %v2837 = vrot.slane %v2836, 4
        %v2838 = vmax.f32 %v2836, %v2837
        %v2839 = vrot.slane %v2838, 2
        %v2840 = vmax.f32 %v2838, %v2839
        %v2841 = vrot.slane %v2840, 1
        %v2842 = vmax.f32 %v2840, %v2841
        %v2843 = vsel %vm2695, %v2353, -inf
        %v2844 = vrot.slane %v2843, 4
        %v2845 = vmax.f32 %v2843, %v2844
        %v2846 = vrot.slane %v2845, 2
        %v2847 = vmax.f32 %v2845, %v2846
        %v2848 = vrot.slane %v2847, 1
        %v2849 = vmax.f32 %v2847, %v2848
        %v2850 = vsel %vm2695, %v2354, -inf
        %v2851 = vrot.slane %v2850, 4
        %v2852 = vmax.f32 %v2850, %v2851
        %v2853 = vrot.slane %v2852, 2
        %v2854 = vmax.f32 %v2852, %v2853
        %v2855 = vrot.slane %v2854, 1
        %v2856 = vmax.f32 %v2854, %v2855
        %v2857 = vsel %vm2695, %v2355, -inf
        %v2858 = vrot.slane %v2857, 4
        %v2859 = vmax.f32 %v2857, %v2858
        %v2860 = vrot.slane %v2859, 2
        %v2861 = vmax.f32 %v2859, %v2860
        %v2862 = vrot.slane %v2861, 1
        %v2863 = vmax.f32 %v2861, %v2862
        %vm2864 = vcmask 1047556
        %v2865 = vsel %vm2864, %v2227, -inf
        %v2866 = vrot.slane %v2865, 4
        %v2867 = vmax.f32 %v2865, %v2866
        %v2868 = vrot.slane %v2867, 2
        %v2869 = vmax.f32 %v2867, %v2868
        %v2870 = vrot.slane %v2869, 1
        %v2871 = vmax.f32 %v2869, %v2870
        %v2872 = vsel %vm2864, %v2228, -inf
        %v2873 = vrot.slane %v2872, 4
        %v2874 = vmax.f32 %v2872, %v2873
        %v2875 = vrot.slane %v2874, 2
        %v2876 = vmax.f32 %v2874, %v2875
        %v2877 = vrot.slane %v2876, 1
        %v2878 = vmax.f32 %v2876, %v2877
        %v2879 = vsel %vm2864, %v2229, -inf
        %v2880 = vrot.slane %v2879, 4
        %v2881 = vmax.f32 %v2879, %v2880
        %v2882 = vrot.slane %v2881, 2
        %v2883 = vmax.f32 %v2881, %v2882
        %v2884 = vrot.slane %v2883, 1
        %v2885 = vmax.f32 %v2883, %v2884
        %v2886 = vsel %vm2864, %v2245, -inf
        %v2887 = vrot.slane %v2886, 4
        %v2888 = vmax.f32 %v2886, %v2887
        %v2889 = vrot.slane %v2888, 2
        %v2890 = vmax.f32 %v2888, %v2889
        %v2891 = vrot.slane %v2890, 1
        %v2892 = vmax.f32 %v2890, %v2891
        %v2893 = vsel %vm2864, %v2246, -inf
        %v2894 = vrot.slane %v2893, 4
        %v2895 = vmax.f32 %v2893, %v2894
        %v2896 = vrot.slane %v2895, 2
        %v2897 = vmax.f32 %v2895, %v2896
        %v2898 = vrot.slane %v2897, 1
        %v2899 = vmax.f32 %v2897, %v2898
        %v2900 = vsel %vm2864, %v2247, -inf
        %v2901 = vrot.slane %v2900, 4
        %v2902 = vmax.f32 %v2900, %v2901
        %v2903 = vrot.slane %v2902, 2
        %v2904 = vmax.f32 %v2902, %v2903
        %v2905 = vrot.slane %v2904, 1
        %v2906 = vmax.f32 %v2904, %v2905
        %v2907 = vsel %vm2864, %v2263, -inf
        %v2908 = vrot.slane %v2907, 4
        %v2909 = vmax.f32 %v2907, %v2908
        %v2910 = vrot.slane %v2909, 2
        %v2911 = vmax.f32 %v2909, %v2910
        %v2912 = vrot.slane %v2911, 1
        %v2913 = vmax.f32 %v2911, %v2912
        %v2914 = vsel %vm2864, %v2264, -inf
        %v2915 = vrot.slane %v2914, 4
        %v2916 = vmax.f32 %v2914, %v2915
        %v2917 = vrot.slane %v2916, 2
        %v2918 = vmax.f32 %v2916, %v2917
        %v2919 = vrot.slane %v2918, 1
        %v2920 = vmax.f32 %v2918, %v2919
        %v2921 = vsel %vm2864, %v2265, -inf
        %v2922 = vrot.slane %v2921, 4
        %v2923 = vmax.f32 %v2921, %v2922
        %v2924 = vrot.slane %v2923, 2
        %v2925 = vmax.f32 %v2923, %v2924
        %v2926 = vrot.slane %v2925, 1
        %v2927 = vmax.f32 %v2925, %v2926
        %v2928 = vsel %vm2864, %v2281, -inf
        %v2929 = vrot.slane %v2928, 4
        %v2930 = vmax.f32 %v2928, %v2929
        %v2931 = vrot.slane %v2930, 2
        %v2932 = vmax.f32 %v2930, %v2931
        %v2933 = vrot.slane %v2932, 1
        %v2934 = vmax.f32 %v2932, %v2933
        %v2935 = vsel %vm2864, %v2282, -inf
        %v2936 = vrot.slane %v2935, 4
        %v2937 = vmax.f32 %v2935, %v2936
        %v2938 = vrot.slane %v2937, 2
        %v2939 = vmax.f32 %v2937, %v2938
        %v2940 = vrot.slane %v2939, 1
        %v2941 = vmax.f32 %v2939, %v2940
        %v2942 = vsel %vm2864, %v2283, -inf
        %v2943 = vrot.slane %v2942, 4
        %v2944 = vmax.f32 %v2942, %v2943
        %v2945 = vrot.slane %v2944, 2
        %v2946 = vmax.f32 %v2944, %v2945
        %v2947 = vrot.slane %v2946, 1
        %v2948 = vmax.f32 %v2946, %v2947
        %v2949 = vsel %vm2864, %v2299, -inf
        %v2950 = vrot.slane %v2949, 4
        %v2951 = vmax.f32 %v2949, %v2950
        %v2952 = vrot.slane %v2951, 2
        %v2953 = vmax.f32 %v2951, %v2952
        %v2954 = vrot.slane %v2953, 1
        %v2955 = vmax.f32 %v2953, %v2954
        %v2956 = vsel %vm2864, %v2300, -inf
        %v2957 = vrot.slane %v2956, 4
        %v2958 = vmax.f32 %v2956, %v2957
        %v2959 = vrot.slane %v2958, 2
        %v2960 = vmax.f32 %v2958, %v2959
        %v2961 = vrot.slane %v2960, 1
        %v2962 = vmax.f32 %v2960, %v2961
        %v2963 = vsel %vm2864, %v2301, -inf
        %v2964 = vrot.slane %v2963, 4
        %v2965 = vmax.f32 %v2963, %v2964
        %v2966 = vrot.slane %v2965, 2
        %v2967 = vmax.f32 %v2965, %v2966
        %v2968 = vrot.slane %v2967, 1
        %v2969 = vmax.f32 %v2967, %v2968
        %v2970 = vsel %vm2864, %v2317, -inf
        %v2971 = vrot.slane %v2970, 4
        %v2972 = vmax.f32 %v2970, %v2971
        %v2973 = vrot.slane %v2972, 2
        %v2974 = vmax.f32 %v2972, %v2973
        %v2975 = vrot.slane %v2974, 1
        %v2976 = vmax.f32 %v2974, %v2975
        %v2977 = vsel %vm2864, %v2318, -inf
        %v2978 = vrot.slane %v2977, 4
        %v2979 = vmax.f32 %v2977, %v2978
        %v2980 = vrot.slane %v2979, 2
        %v2981 = vmax.f32 %v2979, %v2980
        %v2982 = vrot.slane %v2981, 1
        %v2983 = vmax.f32 %v2981, %v2982
        %v2984 = vsel %vm2864, %v2319, -inf
        %v2985 = vrot.slane %v2984, 4
        %v2986 = vmax.f32 %v2984, %v2985
        %v2987 = vrot.slane %v2986, 2
        %v2988 = vmax.f32 %v2986, %v2987
        %v2989 = vrot.slane %v2988, 1
        %v2990 = vmax.f32 %v2988, %v2989
        %v2991 = vsel %vm2864, %v2335, -inf
        %v2992 = vrot.slane %v2991, 4
        %v2993 = vmax.f32 %v2991, %v2992
        %v2994 = vrot.slane %v2993, 2
        %v2995 = vmax.f32 %v2993, %v2994
        %v2996 = vrot.slane %v2995, 1
        %v2997 = vmax.f32 %v2995, %v2996
        %v2998 = vsel %vm2864, %v2336, -inf
        %v2999 = vrot.slane %v2998, 4
        %v3000 = vmax.f32 %v2998, %v2999
        %v3001 = vrot.slane %v3000, 2
        %v3002 = vmax.f32 %v3000, %v3001
        %v3003 = vrot.slane %v3002, 1
        %v3004 = vmax.f32 %v3002, %v3003
        %v3005 = vsel %vm2864, %v2337, -inf
        %v3006 = vrot.slane %v3005, 4
        %v3007 = vmax.f32 %v3005, %v3006
        %v3008 = vrot.slane %v3007, 2
        %v3009 = vmax.f32 %v3007, %v3008
        %v3010 = vrot.slane %v3009, 1
        %v3011 = vmax.f32 %v3009, %v3010
        %v3012 = vsel %vm2864, %v2353, -inf
        %v3013 = vrot.slane %v3012, 4
        %v3014 = vmax.f32 %v3012, %v3013
        %v3015 = vrot.slane %v3014, 2
        %v3016 = vmax.f32 %v3014, %v3015
        %v3017 = vrot.slane %v3016, 1
        %v3018 = vmax.f32 %v3016, %v3017
        %v3019 = vsel %vm2864, %v2354, -inf
        %v3020 = vrot.slane %v3019, 4
        %v3021 = vmax.f32 %v3019, %v3020
        %v3022 = vrot.slane %v3021, 2
        %v3023 = vmax.f32 %v3021, %v3022
        %v3024 = vrot.slane %v3023, 1
        %v3025 = vmax.f32 %v3023, %v3024
        %v3026 = vsel %vm2864, %v2355, -inf
        %v3027 = vrot.slane %v3026, 4
        %v3028 = vmax.f32 %v3026, %v3027
        %v3029 = vrot.slane %v3028, 2
        %v3030 = vmax.f32 %v3028, %v3029
        %v3031 = vrot.slane %v3030, 1
        %v3032 = vmax.f32 %v3030, %v3031
        %v3057 = vrot.slane %v2230, 1
        %v3058 = vrot.slane %v2231, 1
        %v3059 = vrot.slane %v2232, 1
        %v3060 = vrot.slane %v2248, 1
        %v3061 = vrot.slane %v2249, 1
        %v3062 = vrot.slane %v2250, 1
        %v3063 = vrot.slane %v2266, 1
        %v3064 = vrot.slane %v2267, 1
        %v3065 = vrot.slane %v2268, 1
        %v3066 = vrot.slane %v2284, 1
        %v3067 = vrot.slane %v2285, 1
        %v3068 = vrot.slane %v2286, 1
        %v3069 = vrot.slane %v2302, 1
        %v3070 = vrot.slane %v2303, 1
        %v3071 = vrot.slane %v2304, 1
        %v3072 = vrot.slane %v2320, 1
        %v3073 = vrot.slane %v2321, 1
        %v3074 = vrot.slane %v2322, 1
        %v3075 = vrot.slane %v2338, 1
        %v3076 = vrot.slane %v2339, 1
        %v3077 = vrot.slane %v2340, 1
        %v3078 = vrot.slane %v2356, 1
        %v3079 = vrot.slane %v2357, 1
        %v3080 = vrot.slane %v2358, 1
        %v3105 = vmul.f32 %v2230, %v3057
        %v3106 = vmul.f32 %v2231, %v3058
        %v3107 = vmul.f32 %v2232, %v3059
        %v3108 = vmul.f32 %v2248, %v3060
        %v3109 = vmul.f32 %v2249, %v3061
        %v3110 = vmul.f32 %v2250, %v3062
        %v3111 = vmul.f32 %v2266, %v3063
        %v3112 = vmul.f32 %v2267, %v3064
        %v3113 = vmul.f32 %v2268, %v3065
        %v3114 = vmul.f32 %v2284, %v3066
        %v3115 = vmul.f32 %v2285, %v3067
        %v3116 = vmul.f32 %v2286, %v3068
        %v3117 = vmul.f32 %v2302, %v3069
        %v3118 = vmul.f32 %v2303, %v3070
        %v3119 = vmul.f32 %v2304, %v3071
        %v3120 = vmul.f32 %v2320, %v3072
        %v3121 = vmul.f32 %v2321, %v3073
        %v3122 = vmul.f32 %v2322, %v3074
        %v3123 = vmul.f32 %v2338, %v3075
        %v3124 = vmul.f32 %v2339, %v3076
        %v3125 = vmul.f32 %v2340, %v3077
        %v3126 = vmul.f32 %v2356, %v3078
        %v3127 = vmul.f32 %v2357, %v3079
        %v3128 = vmul.f32 %v2358, %v3080
        %v3129 = vsub.f32 %v2230, %v3057
        %v3130 = vsub.f32 %v2231, %v3058
        %v3131 = vsub.f32 %v2232, %v3059
        %v3132 = vsub.f32 %v2248, %v3060
        %v3133 = vsub.f32 %v2249, %v3061
        %v3134 = vsub.f32 %v2250, %v3062
        %v3135 = vsub.f32 %v2266, %v3063
        %v3136 = vsub.f32 %v2267, %v3064
        %v3137 = vsub.f32 %v2268, %v3065
        %v3138 = vsub.f32 %v2284, %v3066
        %v3139 = vsub.f32 %v2285, %v3067
        %v3140 = vsub.f32 %v2286, %v3068
        %v3141 = vsub.f32 %v2302, %v3069
        %v3142 = vsub.f32 %v2303, %v3070
        %v3143 = vsub.f32 %v2304, %v3071
        %v3144 = vsub.f32 %v2320, %v3072
        %v3145 = vsub.f32 %v2321, %v3073
        %v3146 = vsub.f32 %v2322, %v3074
        %v3147 = vsub.f32 %v2338, %v3075
        %v3148 = vsub.f32 %v2339, %v3076
        %v3149 = vsub.f32 %v2340, %v3077
        %v3150 = vsub.f32 %v2356, %v3078
        %v3151 = vsub.f32 %v2357, %v3079
        %v3152 = vsub.f32 %v2358, %v3080
        %v3153 = vand.u32 2147483647, %v3129
        %v3154 = vand.u32 2147483647, %v3130
        %v3155 = vand.u32 2147483647, %v3131
        %v3156 = vand.u32 2147483647, %v3132
        %v3157 = vand.u32 2147483647, %v3133
        %v3158 = vand.u32 2147483647, %v3134
        %v3159 = vand.u32 2147483647, %v3135
        %v3160 = vand.u32 2147483647, %v3136
        %v3161 = vand.u32 2147483647, %v3137
        %v3162 = vand.u32 2147483647, %v3138
        %v3163 = vand.u32 2147483647, %v3139
        %v3164 = vand.u32 2147483647, %v3140
        %v3165 = vand.u32 2147483647, %v3141
        %v3166 = vand.u32 2147483647, %v3142
        %v3167 = vand.u32 2147483647, %v3143
        %v3168 = vand.u32 2147483647, %v3144
        %v3169 = vand.u32 2147483647, %v3145
        %v3170 = vand.u32 2147483647, %v3146
        %v3171 = vand.u32 2147483647, %v3147
        %v3172 = vand.u32 2147483647, %v3148
        %v3173 = vand.u32 2147483647, %v3149
        %v3174 = vand.u32 2147483647, %v3150
        %v3175 = vand.u32 2147483647, %v3151
        %v3176 = vand.u32 2147483647, %v3152
        %v3201 = vrot.slane %v521, 1
        %v3202 = vrot.slane %v522, 1
        %v3203 = vrot.slane %v523, 1
        %v3204 = vrot.slane %v539, 1
        %v3205 = vrot.slane %v540, 1
        %v3206 = vrot.slane %v541, 1
        %v3207 = vrot.slane %v557, 1
        %v3208 = vrot.slane %v558, 1
        %v3209 = vrot.slane %v559, 1
        %v3210 = vrot.slane %v575, 1
        %v3211 = vrot.slane %v576, 1
        %v3212 = vrot.slane %v577, 1
        %v3213 = vrot.slane %v593, 1
        %v3214 = vrot.slane %v594, 1
        %v3215 = vrot.slane %v595, 1
        %v3216 = vrot.slane %v611, 1
        %v3217 = vrot.slane %v612, 1
        %v3218 = vrot.slane %v613, 1
        %v3219 = vrot.slane %v629, 1
        %v3220 = vrot.slane %v630, 1
        %v3221 = vrot.slane %v631, 1
        %v3222 = vrot.slane %v647, 1
        %v3223 = vrot.slane %v648, 1
        %v3224 = vrot.slane %v649, 1
        %v3249 = vsub.f32 %v521, %v3201
        %v3250 = vsub.f32 %v522, %v3202
        %v3251 = vsub.f32 %v523, %v3203
        %v3252 = vsub.f32 %v539, %v3204
        %v3253 = vsub.f32 %v540, %v3205
        %v3254 = vsub.f32 %v541, %v3206
        %v3255 = vsub.f32 %v557, %v3207
        %v3256 = vsub.f32 %v558, %v3208
        %v3257 = vsub.f32 %v559, %v3209
        %v3258 = vsub.f32 %v575, %v3210
        %v3259 = vsub.f32 %v576, %v3211
        %v3260 = vsub.f32 %v577, %v3212
        %v3261 = vsub.f32 %v593, %v3213
        %v3262 = vsub.f32 %v594, %v3214
        %v3263 = vsub.f32 %v595, %v3215
        %v3264 = vsub.f32 %v611, %v3216
        %v3265 = vsub.f32 %v612, %v3217
        %v3266 = vsub.f32 %v613, %v3218
        %v3267 = vsub.f32 %v629, %v3219
        %v3268 = vsub.f32 %v630, %v3220
        %v3269 = vsub.f32 %v631, %v3221
        %v3270 = vsub.f32 %v647, %v3222
        %v3271 = vsub.f32 %v648, %v3223
        %v3272 = vsub.f32 %v649, %v3224
        %v3273 = vand.u32 2147483647, %v3249
        %v3274 = vand.u32 2147483647, %v3250
        %v3275 = vand.u32 2147483647, %v3251
        %v3276 = vand.u32 2147483647, %v3252
        %v3277 = vand.u32 2147483647, %v3253
        %v3278 = vand.u32 2147483647, %v3254
        %v3279 = vand.u32 2147483647, %v3255
        %v3280 = vand.u32 2147483647, %v3256
        %v3281 = vand.u32 2147483647, %v3257
        %v3282 = vand.u32 2147483647, %v3258
        %v3283 = vand.u32 2147483647, %v3259
        %v3284 = vand.u32 2147483647, %v3260
        %v3285 = vand.u32 2147483647, %v3261
        %v3286 = vand.u32 2147483647, %v3262
        %v3287 = vand.u32 2147483647, %v3263
        %v3288 = vand.u32 2147483647, %v3264
        %v3289 = vand.u32 2147483647, %v3265
        %v3290 = vand.u32 2147483647, %v3266
        %v3291 = vand.u32 2147483647, %v3267
        %v3292 = vand.u32 2147483647, %v3268
        %v3293 = vand.u32 2147483647, %v3269
        %v3294 = vand.u32 2147483647, %v3270
        %v3295 = vand.u32 2147483647, %v3271
        %v3296 = vand.u32 2147483647, %v3272
        %v3321 = vrot.slane %v3108, 7
        %vm3322 = vcmask 1041409
        %v3323 = vsel %vm3322, %v3321, %v3105
        %v3324 = vrot.slane %v3111, 6
        %vm3325 = vcmask 1042434
        %v3326 = vsel %vm3325, %v3324, %v3323
        %v3327 = vrot.slane %v3114, 5
        %vm3328 = vcmask 1043459
        %v3329 = vsel %vm3328, %v3327, %v3326
        %v3330 = vrot.slane %v3117, 4
        %vm3331 = vcmask 1044484
        %v3332 = vsel %vm3331, %v3330, %v3329
        %v3333 = vrot.slane %v3120, 3
        %vm3334 = vcmask 1045509
        %v3335 = vsel %vm3334, %v3333, %v3332
        %v3336 = vrot.slane %v3123, 2
        %vm3337 = vcmask 1046534
        %v3338 = vsel %vm3337, %v3336, %v3335
        %v3339 = vrot.slane %v3126, 1
        %vm3340 = vcmask 1047559
        %v3341 = vsel %vm3340, %v3339, %v3338
        %v3342 = vrot.slane %v3109, 7
        %v3343 = vsel %vm3322, %v3342, %v3106
        %v3344 = vrot.slane %v3112, 6
        %v3345 = vsel %vm3325, %v3344, %v3343
        %v3346 = vrot.slane %v3115, 5
        %v3347 = vsel %vm3328, %v3346, %v3345
        %v3348 = vrot.slane %v3118, 4
        %v3349 = vsel %vm3331, %v3348, %v3347
        %v3350 = vrot.slane %v3121, 3
        %v3351 = vsel %vm3334, %v3350, %v3349
        %v3352 = vrot.slane %v3124, 2
        %v3353 = vsel %vm3337, %v3352, %v3351
        %v3354 = vrot.slane %v3127, 1
        %v3355 = vsel %vm3340, %v3354, %v3353
        %v3356 = vrot.slane %v3110, 7
        %v3357 = vsel %vm3322, %v3356, %v3107
        %v3358 = vrot.slane %v3113, 6
        %v3359 = vsel %vm3325, %v3358, %v3357
        %v3360 = vrot.slane %v3116, 5
        %v3361 = vsel %vm3328, %v3360, %v3359
        %v3362 = vrot.slane %v3119, 4
        %v3363 = vsel %vm3331, %v3362, %v3361
        %v3364 = vrot.slane %v3122, 3
        %v3365 = vsel %vm3334, %v3364, %v3363
        %v3366 = vrot.slane %v3125, 2
        %v3367 = vsel %vm3337, %v3366, %v3365
        %v3368 = vrot.slane %v3128, 1
        %v3369 = vsel %vm3340, %v3368, %v3367
        %v3397 = vrot.slane %v3156, 7
        %v3398 = vsel %vm3322, %v3397, %v3153
        %v3399 = vrot.slane %v3159, 6
        %v3400 = vsel %vm3325, %v3399, %v3398
        %v3401 = vrot.slane %v3162, 5
        %v3402 = vsel %vm3328, %v3401, %v3400
        %v3403 = vrot.slane %v3165, 4
        %v3404 = vsel %vm3331, %v3403, %v3402
        %v3405 = vrot.slane %v3168, 3
        %v3406 = vsel %vm3334, %v3405, %v3404
        %v3407 = vrot.slane %v3171, 2
        %v3408 = vsel %vm3337, %v3407, %v3406
        %v3409 = vrot.slane %v3174, 1
        %v3410 = vsel %vm3340, %v3409, %v3408
        %v3411 = vrot.slane %v3157, 7
        %v3412 = vsel %vm3322, %v3411, %v3154
        %v3413 = vrot.slane %v3160, 6
        %v3414 = vsel %vm3325, %v3413, %v3412
        %v3415 = vrot.slane %v3163, 5
        %v3416 = vsel %vm3328, %v3415, %v3414
        %v3417 = vrot.slane %v3166, 4
        %v3418 = vsel %vm3331, %v3417, %v3416
        %v3419 = vrot.slane %v3169, 3
        %v3420 = vsel %vm3334, %v3419, %v3418
        %v3421 = vrot.slane %v3172, 2
        %v3422 = vsel %vm3337, %v3421, %v3420
        %v3423 = vrot.slane %v3175, 1
        %v3424 = vsel %vm3340, %v3423, %v3422
        %v3425 = vrot.slane %v3158, 7
        %v3426 = vsel %vm3322, %v3425, %v3155
        %v3427 = vrot.slane %v3161, 6
        %v3428 = vsel %vm3325, %v3427, %v3426
        %v3429 = vrot.slane %v3164, 5
        %v3430 = vsel %vm3328, %v3429, %v3428
        %v3431 = vrot.slane %v3167, 4
        %v3432 = vsel %vm3331, %v3431, %v3430
        %v3433 = vrot.slane %v3170, 3
        %v3434 = vsel %vm3334, %v3433, %v3432
        %v3435 = vrot.slane %v3173, 2
        %v3436 = vsel %vm3337, %v3435, %v3434
        %v3437 = vrot.slane %v3176, 1
        %v3438 = vsel %vm3340, %v3437, %v3436
        %v3466 = vrot.slane %v3276, 7
        %v3467 = vsel %vm3322, %v3466, %v3273
        %v3468 = vrot.slane %v3279, 6
        %v3469 = vsel %vm3325, %v3468, %v3467
        %v3470 = vrot.slane %v3282, 5
        %v3471 = vsel %vm3328, %v3470, %v3469
        %v3472 = vrot.slane %v3285, 4
        %v3473 = vsel %vm3331, %v3472, %v3471
        %v3474 = vrot.slane %v3288, 3
        %v3475 = vsel %vm3334, %v3474, %v3473
        %v3476 = vrot.slane %v3291, 2
        %v3477 = vsel %vm3337, %v3476, %v3475
        %v3478 = vrot.slane %v3294, 1
        %v3479 = vsel %vm3340, %v3478, %v3477
        %v3480 = vrot.slane %v3277, 7
        %v3481 = vsel %vm3322, %v3480, %v3274
        %v3482 = vrot.slane %v3280, 6
        %v3483 = vsel %vm3325, %v3482, %v3481
        %v3484 = vrot.slane %v3283, 5
        %v3485 = vsel %vm3328, %v3484, %v3483
        %v3486 = vrot.slane %v3286, 4
        %v3487 = vsel %vm3331, %v3486, %v3485
        %v3488 = vrot.slane %v3289, 3
        %v3489 = vsel %vm3334, %v3488, %v3487
        %v3490 = vrot.slane %v3292, 2
        %v3491 = vsel %vm3337, %v3490, %v3489
        %v3492 = vrot.slane %v3295, 1
        %v3493 = vsel %vm3340, %v3492, %v3491
        %v3494 = vrot.slane %v3278, 7
        %v3495 = vsel %vm3322, %v3494, %v3275
        %v3496 = vrot.slane %v3281, 6
        %v3497 = vsel %vm3325, %v3496, %v3495
        %v3498 = vrot.slane %v3284, 5
        %v3499 = vsel %vm3328, %v3498, %v3497
        %v3500 = vrot.slane %v3287, 4
        %v3501 = vsel %vm3331, %v3500, %v3499
        %v3502 = vrot.slane %v3290, 3
        %v3503 = vsel %vm3334, %v3502, %v3501
        %v3504 = vrot.slane %v3293, 2
        %v3505 = vsel %vm3337, %v3504, %v3503
        %v3506 = vrot.slane %v3296, 1
        %v3507 = vsel %vm3340, %v3506, %v3505
        %v3511 = vld [vmem:[%s4] sm:$0xff]
        %v3512 = vld [vmem:[%s4 + $0x8] sm:$0xff]
        %v3513 = vld [vmem:[%s4 + $0x10] sm:$0xff]
        %v3514 = vld [vmem:[%s4 + $0x18] sm:$0xff]
        %v3515 = vld [vmem:[%s4 + $0x20] sm:$0xff]
        %v3516 = vld [vmem:[%s4 + $0x28] sm:$0xff]
        %v3517 = vld [vmem:[%s4 + $0x30] sm:$0xff]
        %v3518 = vld [vmem:[%s4 + $0x38] sm:$0xff]
        %v3519 = vld [vmem:[%s4 + $0x40] sm:$0xff]
        %v3520 = vld [vmem:[%s4 + $0x48] sm:$0xff]
        %v3521 = vld [vmem:[%s4 + $0x50] sm:$0xff]
        %v3522 = vld [vmem:[%s4 + $0x58] sm:$0xff]
        %v3523 = vld [vmem:[%s4 + $0x60] sm:$0xff]
        %v3524 = vld [vmem:[%s4 + $0x68] sm:$0xff]
        %v3525 = vld [vmem:[%s4 + $0x70] sm:$0xff]
        %v3526 = vld [vmem:[%s4 + $0x78] sm:$0xff]
        %v3527 = vld [vmem:[%s4 + $0x80] sm:$0xff]
        %v3528 = vld [vmem:[%s4 + $0x88] sm:$0xff]
        %v3529 = vld [vmem:[%s4 + $0x90] sm:$0xff]
        %v3530 = vld [vmem:[%s4 + $0x98] sm:$0xff]
        %v3531 = vld [vmem:[%s4 + $0xa0] sm:$0xff]
        %v3532 = vld [vmem:[%s4 + $0xa8] sm:$0xff]
        %v3533 = vld [vmem:[%s4 + $0xb0] sm:$0xff]
        %v3534 = vld [vmem:[%s4 + $0xb8] sm:$0xff]
        %v3535 = vld [vmem:[%s4 + $0xc0] sm:$0xff]
        %v3536 = vld [vmem:[%s4 + $0xc8] sm:$0xff]
        %v3537 = vld [vmem:[%s4 + $0xd0] sm:$0xff]
        %v3538 = vld [vmem:[%s4 + $0xd8] sm:$0xff]
        %v3539 = vld [vmem:[%s4 + $0xe0] sm:$0xff]
        %v3540 = vld [vmem:[%s4 + $0xe8] sm:$0xff]
        %v3541 = vld [vmem:[%s4 + $0xf0] sm:$0xff]
        %v3542 = vld [vmem:[%s4 + $0xf8] sm:$0xff]
        %v3543 = vld [vmem:[%s4 + $0x100] sm:$0xff]
        %v3544 = vld [vmem:[%s4 + $0x108] sm:$0xff]
        %v3545 = vld [vmem:[%s4 + $0x110] sm:$0xff]
        %v3546 = vld [vmem:[%s4 + $0x118] sm:$0xff]
        %v3547 = vld [vmem:[%s4 + $0x120] sm:$0xff]
        %v3548 = vld [vmem:[%s4 + $0x128] sm:$0xff]
        %v3549 = vld [vmem:[%s4 + $0x130] sm:$0xff]
        %v3550 = vld [vmem:[%s4 + $0x138] sm:$0xff]
        %v3551 = vld [vmem:[%s4 + $0x140] sm:$0xff]
        %v3552 = vld [vmem:[%s4 + $0x148] sm:$0xff]
        %v3553 = vld [vmem:[%s4 + $0x150] sm:$0xff]
        %v3554 = vld [vmem:[%s4 + $0x158] sm:$0xff]
        %v3555 = vld [vmem:[%s4 + $0x160] sm:$0xff]
        %v3556 = vld [vmem:[%s4 + $0x168] sm:$0xff]
        %v3557 = vld [vmem:[%s4 + $0x170] sm:$0xff]
        %v3558 = vld [vmem:[%s4 + $0x178] sm:$0xff]
        %v3559 = vld [vmem:[%s4 + $0x180] sm:$0xff]
        %v3560 = vld [vmem:[%s4 + $0x188] sm:$0xff]
        %v3561 = vld [vmem:[%s4 + $0x190] sm:$0xff]
        %v3562 = vld [vmem:[%s4 + $0x198] sm:$0xff]
        %v3563 = vld [vmem:[%s4 + $0x1a0] sm:$0xff]
        %v3564 = vld [vmem:[%s4 + $0x1a8] sm:$0xff]
        %v3565 = vld [vmem:[%s4 + $0x1b0] sm:$0xff]
        %v3566 = vld [vmem:[%s4 + $0x1b8] sm:$0xff]
        %v3567 = vld [vmem:[%s4 + $0x1c0] sm:$0xff]
        %v3568 = vld [vmem:[%s4 + $0x1c8] sm:$0xff]
        %v3569 = vld [vmem:[%s4 + $0x1d0] sm:$0xff]
        %v3570 = vld [vmem:[%s4 + $0x1d8] sm:$0xff]
        %v3571 = vld [vmem:[%s4 + $0x1e0] sm:$0xff]
        %v3572 = vld [vmem:[%s4 + $0x1e8] sm:$0xff]
        %v3573 = vld [vmem:[%s4 + $0x1f0] sm:$0xff]
        %v3574 = vld [vmem:[%s4 + $0x1f8] sm:$0xff]
        %v3575 = vld [vmem:[%s4 + $0x200] sm:$0xff]
        %v3576 = vld [vmem:[%s4 + $0x208] sm:$0xff]
        %v3577 = vld [vmem:[%s4 + $0x210] sm:$0xff]
        %v3578 = vld [vmem:[%s4 + $0x218] sm:$0xff]
        %v3579 = vld [vmem:[%s4 + $0x220] sm:$0xff]
        %v3580 = vld [vmem:[%s4 + $0x228] sm:$0xff]
        %v3581 = vld [vmem:[%s4 + $0x230] sm:$0xff]
        %v3582 = vld [vmem:[%s4 + $0x238] sm:$0xff]
        %v3583 = vld [vmem:[%s4 + $0x240] sm:$0xff]
        %v3584 = vld [vmem:[%s4 + $0x248] sm:$0xff]
        %v3585 = vld [vmem:[%s4 + $0x250] sm:$0xff]
        %v3586 = vld [vmem:[%s4 + $0x258] sm:$0xff]
        %v3587 = vld [vmem:[%s4 + $0x260] sm:$0xff]
        %v3588 = vld [vmem:[%s4 + $0x268] sm:$0xff]
        %v3589 = vld [vmem:[%s4 + $0x270] sm:$0xff]
        %v3590 = vld [vmem:[%s4 + $0x278] sm:$0xff]
        %v3591 = vld [vmem:[%s4 + $0x280] sm:$0xff]
        %v3592 = vld [vmem:[%s4 + $0x288] sm:$0xff]
        %v3593 = vld [vmem:[%s4 + $0x290] sm:$0xff]
        %v3594 = vld [vmem:[%s4 + $0x298] sm:$0xff]
        %v3595 = vld [vmem:[%s4 + $0x2a0] sm:$0xff]
        %v3596 = vld [vmem:[%s4 + $0x2a8] sm:$0xff]
        %v3597 = vld [vmem:[%s4 + $0x2b0] sm:$0xff]
        %v3598 = vld [vmem:[%s4 + $0x2b8] sm:$0xff]
        %v3599 = vld [vmem:[%s4 + $0x2c0] sm:$0xff]
        %v3600 = vld [vmem:[%s4 + $0x2c8] sm:$0xff]
        %v3601 = vld [vmem:[%s4 + $0x2d0] sm:$0xff]
        %v3602 = vld [vmem:[%s4 + $0x2d8] sm:$0xff]
        %v3603 = vld [vmem:[%s4 + $0x2e0] sm:$0xff]
        %v3604 = vld [vmem:[%s4 + $0x2e8] sm:$0xff]
        %v3605 = vld [vmem:[%s4 + $0x2f0] sm:$0xff]
        %v3606 = vld [vmem:[%s4 + $0x2f8] sm:$0xff]
        %v3607 = vld [vmem:[%s4 + $0x300] sm:$0xff]
        %v3608 = vld [vmem:[%s4 + $0x308] sm:$0xff]
        %v3609 = vld [vmem:[%s4 + $0x310] sm:$0xff]
        %v3610 = vld [vmem:[%s4 + $0x318] sm:$0xff]
        %v3611 = vld [vmem:[%s4 + $0x320] sm:$0xff]
        %v3612 = vld [vmem:[%s4 + $0x328] sm:$0xff]
        %v3613 = vld [vmem:[%s4 + $0x330] sm:$0xff]
        %v3614 = vld [vmem:[%s4 + $0x338] sm:$0xff]
        %v3615 = vld [vmem:[%s4 + $0x340] sm:$0xff]
        %v3616 = vld [vmem:[%s4 + $0x348] sm:$0xff]
        %v3617 = vld [vmem:[%s4 + $0x350] sm:$0xff]
        %v3618 = vld [vmem:[%s4 + $0x358] sm:$0xff]
        %v3619 = vld [vmem:[%s4 + $0x360] sm:$0xff]
        %v3620 = vld [vmem:[%s4 + $0x368] sm:$0xff]
        %v3621 = vld [vmem:[%s4 + $0x370] sm:$0xff]
        %v3622 = vld [vmem:[%s4 + $0x378] sm:$0xff]
        %v3623 = vld [vmem:[%s4 + $0x380] sm:$0xff]
        %v3624 = vld [vmem:[%s4 + $0x388] sm:$0xff]
        %v3625 = vld [vmem:[%s4 + $0x390] sm:$0xff]
        %v3626 = vld [vmem:[%s4 + $0x398] sm:$0xff]
        %v3627 = vld [vmem:[%s4 + $0x3a0] sm:$0xff]
        %v3628 = vld [vmem:[%s4 + $0x3a8] sm:$0xff]
        %v3629 = vld [vmem:[%s4 + $0x3b0] sm:$0xff]
        %v3630 = vld [vmem:[%s4 + $0x3b8] sm:$0xff]
        %v3631 = vld [vmem:[%s4 + $0x3c0] sm:$0xff]
        %v3632 = vld [vmem:[%s4 + $0x3c8] sm:$0xff]
        %v3633 = vld [vmem:[%s4 + $0x3d0] sm:$0xff]
        %v3634 = vld [vmem:[%s4 + $0x3d8] sm:$0xff]
        %v3635 = vld [vmem:[%s4 + $0x3e0] sm:$0xff]
        %v3636 = vld [vmem:[%s4 + $0x3e8] sm:$0xff]
        %v3637 = vld [vmem:[%s4 + $0x3f0] sm:$0xff]
        %v3638 = vld [vmem:[%s4 + $0x3f8] sm:$0xff]
        %v3639 = vld [vmem:[%s4 + $0x400] sm:$0xff]
        %v3640 = vld [vmem:[%s4 + $0x408] sm:$0xff]
        %v3641 = vld [vmem:[%s4 + $0x410] sm:$0xff]
        %v3642 = vld [vmem:[%s4 + $0x418] sm:$0xff]
        %v3643 = vld [vmem:[%s4 + $0x420] sm:$0xff]
        %v3644 = vld [vmem:[%s4 + $0x428] sm:$0xff]
        %v3645 = vld [vmem:[%s4 + $0x430] sm:$0xff]
        %v3646 = vld [vmem:[%s4 + $0x438] sm:$0xff]
        %v3647 = vld [vmem:[%s4 + $0x440] sm:$0xff]
        %v3648 = vld [vmem:[%s4 + $0x448] sm:$0xff]
        %v3649 = vld [vmem:[%s4 + $0x450] sm:$0xff]
        %v3650 = vld [vmem:[%s4 + $0x458] sm:$0xff]
        %v3651 = vld [vmem:[%s4 + $0x460] sm:$0xff]
        %v3652 = vld [vmem:[%s4 + $0x468] sm:$0xff]
        %v3653 = vld [vmem:[%s4 + $0x470] sm:$0xff]
        %v3654 = vld [vmem:[%s4 + $0x478] sm:$0xff]
        %v3655 = vld [vmem:[%s5] sm:$0x1]
        %v3657 = vlaneseq
        %v3658 = vshrl.u32 %v3657, 7
        %v3659 = vsub.s32 0, %v3658
        %v3660 = vrot.slane %v3655, %v3659
        %3662 = vmatprep.subr.mxu0 0.0
        %3663 = vmatpush1.msra.mxu0 %v3511
        %3664 = vmatprep.subr.mxu0 0.0
        %3665 = vmatpush1.msra.mxu0 %v3512
        %3666 = vmatprep.subr.mxu0 0.0
        %3667 = vmatpush1.msra.mxu0 %v3513
        %3668 = vmatprep.subr.mxu0 0.0
        %3669 = vmatpush1.msra.mxu0 %v3514
        %3670 = vmatprep.subr.mxu0 0.0
        %3671 = vmatpush1.msra.mxu0 %v3515
        %3672 = vmatprep.subr.mxu0 0.0
        %3673 = vmatpush1.msra.mxu0 %v3516
        %3674 = vmatprep.subr.mxu0 0.0
        %3675 = vmatpush1.msra.mxu0 %v3517
        %3676 = vmatprep.subr.mxu0 0.0
        %3677 = vmatpush1.msra.mxu0 %v3518
        %3678 = vmatprep.subr.mxu0 0.0
        %3679 = vmatpush1.msra.mxu0 %v3519
        %3680 = vmatprep.subr.mxu0 0.0
        %3681 = vmatpush1.msra.mxu0 %v3520
        %3682 = vmatprep.subr.mxu0 0.0
        %3683 = vmatpush1.msra.mxu0 %v3521
        %3684 = vmatprep.subr.mxu0 0.0
        %3685 = vmatpush1.msra.mxu0 %v3522
        %3686 = vmatprep.subr.mxu0 0.0
        %3687 = vmatpush1.msra.mxu0 %v3523
        %3688 = vmatprep.subr.mxu0 0.0
        %3689 = vmatpush1.msra.mxu0 %v3524
        %3690 = vmatprep.subr.mxu0 0.0
        %3691 = vmatpush1.msra.mxu0 %v3525
        %3692 = vmatprep.subr.mxu0 0.0
        %3693 = vmatpush1.msra.mxu0 %v3526
        %3694 = vmatprep.subr.mxu0 0.0
        %3695 = vmatpush1.msra.mxu0 %v3527
        %3696 = vmatprep.subr.mxu0 0.0
        %3697 = vmatpush1.msra.mxu0 %v3528
        %3698 = vmatprep.subr.mxu0 0.0
        %3699 = vmatpush1.msra.mxu0 %v3529
        %3700 = vmatprep.subr.mxu0 0.0
        %3701 = vmatpush1.msra.mxu0 %v3530
        %3702 = vmatprep.subr.mxu0 0.0
        %3703 = vmatpush1.msra.mxu0 %v3531
        %3704 = vmatprep.subr.mxu0 0.0
        %3705 = vmatpush1.msra.mxu0 %v3532
        %3706 = vmatprep.subr.mxu0 0.0
        %3707 = vmatpush1.msra.mxu0 %v3533
        %3708 = vmatprep.subr.mxu0 0.0
        %3709 = vmatpush1.msra.mxu0 %v3534
        %3710 = vmatprep.subr.mxu0 0.0
        %3711 = vmatpush1.msra.mxu0 %v3535
        %3712 = vmatprep.subr.mxu0 0.0
        %3713 = vmatpush1.msra.mxu0 %v3536
        %3714 = vmatprep.subr.mxu0 0.0
        %3715 = vmatpush1.msra.mxu0 %v3537
        %3716 = vmatprep.subr.mxu0 0.0
        %3717 = vmatpush1.msra.mxu0 %v3538
        %3718 = vmatprep.subr.mxu0 0.0
        %3719 = vmatpush1.msra.mxu0 %v3539
        %3720 = vmatprep.subr.mxu0 0.0
        %3721 = vmatpush1.msra.mxu0 %v3540
        %3722 = vmatprep.subr.mxu0 0.0
        %3723 = vmatpush1.msra.mxu0 %v3541
        %3724 = vmatprep.subr.mxu0 0.0
        %3725 = vmatpush1.msra.mxu0 %v3542
        %3726 = vmatprep.mubr.f32.mxu0 %v3355
        %3727 = vmatmul.mubr.f32.gmra.mrb[0].mxu0 %v3341
        %v3728 = vpop.f32.mrb[0].mxu0
        %v3729 = vadd.f32 %v3660, %v3728
        %v3730 = vpop.f32.mrb[0].mxu0
        %3731 = vdwg.mxu0
        %3732 = vmatprep.subr.mxu0 0.0
        %3733 = vmatpush1.msra.mxu0 %v3543
        %3734 = vmatprep.subr.mxu0 0.0
        %3735 = vmatpush1.msra.mxu0 %v3544
        %3736 = vmatprep.subr.mxu0 0.0
        %3737 = vmatpush1.msra.mxu0 %v3545
        %3738 = vmatprep.subr.mxu0 0.0
        %3739 = vmatpush1.msra.mxu0 %v3546
        %3740 = vmatprep.subr.mxu0 0.0
        %3741 = vmatpush1.msra.mxu0 %v3547
        %3742 = vmatprep.subr.mxu0 0.0
        %3743 = vmatpush1.msra.mxu0 %v3548
        %3744 = vmatprep.subr.mxu0 0.0
        %3745 = vmatpush1.msra.mxu0 %v3549
        %3746 = vmatprep.subr.mxu0 0.0
        %3747 = vmatpush1.msra.mxu0 %v3550
        %3748 = vmatprep.subr.mxu0 0.0
        %3749 = vmatpush1.msra.mxu0 %v3551
        %3750 = vmatprep.subr.mxu0 0.0
        %3751 = vmatpush1.msra.mxu0 %v3552
        %3752 = vmatprep.subr.mxu0 0.0
        %3753 = vmatpush1.msra.mxu0 %v3553
        %3754 = vmatprep.subr.mxu0 0.0
        %3755 = vmatpush1.msra.mxu0 %v3554
        %3756 = vmatprep.subr.mxu0 0.0
        %3757 = vmatpush1.msra.mxu0 %v3555
        %3758 = vmatprep.subr.mxu0 0.0
        %3759 = vmatpush1.msra.mxu0 %v3556
        %3760 = vmatprep.subr.mxu0 0.0
        %3761 = vmatpush1.msra.mxu0 %v3557
        %3762 = vmatprep.subr.mxu0 0.0
        %3763 = vmatpush1.msra.mxu0 %v3558
        %3764 = vmatprep.subr.mxu0 0.0
        %3765 = vmatpush1.msra.mxu0 %v3559
        %3766 = vmatprep.subr.mxu0 0.0
        %3767 = vmatpush1.msra.mxu0 %v3560
        %3768 = vmatprep.subr.mxu0 0.0
        %3769 = vmatpush1.msra.mxu0 %v3561
        %3770 = vmatprep.subr.mxu0 0.0
        %3771 = vmatpush1.msra.mxu0 %v3562
        %3772 = vmatprep.subr.mxu0 0.0
        %3773 = vmatpush1.msra.mxu0 %v3563
        %3774 = vmatprep.subr.mxu0 0.0
        %3775 = vmatpush1.msra.mxu0 %v3564
        %3776 = vmatprep.subr.mxu0 0.0
        %3777 = vmatpush1.msra.mxu0 %v3565
        %3778 = vmatprep.subr.mxu0 0.0
        %3779 = vmatpush1.msra.mxu0 %v3566
        %3780 = vmatprep.subr.mxu0 0.0
        %3781 = vmatpush1.msra.mxu0 %v3567
        %3782 = vmatprep.subr.mxu0 0.0
        %3783 = vmatpush1.msra.mxu0 %v3568
        %3784 = vmatprep.subr.mxu0 0.0
        %3785 = vmatpush1.msra.mxu0 %v3569
        %3786 = vmatprep.subr.mxu0 0.0
        %3787 = vmatpush1.msra.mxu0 %v3570
        %3788 = vmatprep.subr.mxu0 0.0
        %3789 = vmatpush1.msra.mxu0 %v3571
        %3790 = vmatprep.subr.mxu0 0.0
        %3791 = vmatpush1.msra.mxu0 %v3572
        %3792 = vmatprep.subr.mxu0 0.0
        %3793 = vmatpush1.msra.mxu0 %v3573
        %3794 = vmatprep.subr.mxu0 0.0
        %3795 = vmatpush1.msra.mxu0 %v3574
        %3796 = vmatprep.mubr.f32.mxu0 %v3410
        %3797 = vmatmul.mubr.f32.gmra.mrb[0].mxu0 %v3369
        %v3798 = vpop.f32.mrb[0].mxu0
        %v3799 = vadd.f32 %v3729, %v3798
        %v3800 = vpop.f32.mrb[0].mxu0
        %3801 = vdwg.mxu0
        %3802 = vmatprep.subr.mxu0 0.0
        %3803 = vmatpush1.msra.mxu0 %v3575
        %3804 = vmatprep.subr.mxu0 0.0
        %3805 = vmatpush1.msra.mxu0 %v3576
        %3806 = vmatprep.subr.mxu0 0.0
        %3807 = vmatpush1.msra.mxu0 %v3577
        %3808 = vmatprep.subr.mxu0 0.0
        %3809 = vmatpush1.msra.mxu0 %v3578
        %3810 = vmatprep.subr.mxu0 0.0
        %3811 = vmatpush1.msra.mxu0 %v3579
        %3812 = vmatprep.subr.mxu0 0.0
        %3813 = vmatpush1.msra.mxu0 %v3580
        %3814 = vmatprep.subr.mxu0 0.0
        %3815 = vmatpush1.msra.mxu0 %v3581
        %3816 = vmatprep.subr.mxu0 0.0
        %3817 = vmatpush1.msra.mxu0 %v3582
        %3818 = vmatprep.subr.mxu0 0.0
        %3819 = vmatpush1.msra.mxu0 %v3583
        %3820 = vmatprep.subr.mxu0 0.0
        %3821 = vmatpush1.msra.mxu0 %v3584
        %3822 = vmatprep.subr.mxu0 0.0
        %3823 = vmatpush1.msra.mxu0 %v3585
        %3824 = vmatprep.subr.mxu0 0.0
        %3825 = vmatpush1.msra.mxu0 %v3586
        %3826 = vmatprep.subr.mxu0 0.0
        %3827 = vmatpush1.msra.mxu0 %v3587
        %3828 = vmatprep.subr.mxu0 0.0
        %3829 = vmatpush1.msra.mxu0 %v3588
        %3830 = vmatprep.subr.mxu0 0.0
        %3831 = vmatpush1.msra.mxu0 %v3589
        %3832 = vmatprep.subr.mxu0 0.0
        %3833 = vmatpush1.msra.mxu0 %v3590
        %3834 = vmatprep.subr.mxu0 0.0
        %3835 = vmatpush1.msra.mxu0 %v3591
        %3836 = vmatprep.subr.mxu0 0.0
        %3837 = vmatpush1.msra.mxu0 %v3592
        %3838 = vmatprep.subr.mxu0 0.0
        %3839 = vmatpush1.msra.mxu0 %v3593
        %3840 = vmatprep.subr.mxu0 0.0
        %3841 = vmatpush1.msra.mxu0 %v3594
        %3842 = vmatprep.subr.mxu0 0.0
        %3843 = vmatpush1.msra.mxu0 %v3595
        %3844 = vmatprep.subr.mxu0 0.0
        %3845 = vmatpush1.msra.mxu0 %v3596
        %3846 = vmatprep.subr.mxu0 0.0
        %3847 = vmatpush1.msra.mxu0 %v3597
        %3848 = vmatprep.subr.mxu0 0.0
        %3849 = vmatpush1.msra.mxu0 %v3598
        %3850 = vmatprep.subr.mxu0 0.0
        %3851 = vmatpush1.msra.mxu0 %v3599
        %3852 = vmatprep.subr.mxu0 0.0
        %3853 = vmatpush1.msra.mxu0 %v3600
        %3854 = vmatprep.subr.mxu0 0.0
        %3855 = vmatpush1.msra.mxu0 %v3601
        %3856 = vmatprep.subr.mxu0 0.0
        %3857 = vmatpush1.msra.mxu0 %v3602
        %3858 = vmatprep.subr.mxu0 0.0
        %3859 = vmatpush1.msra.mxu0 %v3603
        %3860 = vmatprep.subr.mxu0 0.0
        %3861 = vmatpush1.msra.mxu0 %v3604
        %3862 = vmatprep.subr.mxu0 0.0
        %3863 = vmatpush1.msra.mxu0 %v3605
        %3864 = vmatprep.subr.mxu0 0.0
        %3865 = vmatpush1.msra.mxu0 %v3606
        %3866 = vmatprep.mubr.f32.mxu0 %v3438
        %3867 = vmatmul.mubr.f32.gmra.mrb[0].mxu0 %v3424
        %v3868 = vpop.f32.mrb[0].mxu0
        %v3869 = vadd.f32 %v3799, %v3868
        %v3870 = vpop.f32.mrb[0].mxu0
        %3871 = vdwg.mxu0
        %3872 = vmatprep.subr.mxu0 0.0
        %3873 = vmatpush1.msra.mxu0 %v3607
        %3874 = vmatprep.subr.mxu0 0.0
        %3875 = vmatpush1.msra.mxu0 %v3608
        %3876 = vmatprep.subr.mxu0 0.0
        %3877 = vmatpush1.msra.mxu0 %v3609
        %3878 = vmatprep.subr.mxu0 0.0
        %3879 = vmatpush1.msra.mxu0 %v3610
        %3880 = vmatprep.subr.mxu0 0.0
        %3881 = vmatpush1.msra.mxu0 %v3611
        %3882 = vmatprep.subr.mxu0 0.0
        %3883 = vmatpush1.msra.mxu0 %v3612
        %3884 = vmatprep.subr.mxu0 0.0
        %3885 = vmatpush1.msra.mxu0 %v3613
        %3886 = vmatprep.subr.mxu0 0.0
        %3887 = vmatpush1.msra.mxu0 %v3614
        %3888 = vmatprep.subr.mxu0 0.0
        %3889 = vmatpush1.msra.mxu0 %v3615
        %3890 = vmatprep.subr.mxu0 0.0
        %3891 = vmatpush1.msra.mxu0 %v3616
        %3892 = vmatprep.subr.mxu0 0.0
        %3893 = vmatpush1.msra.mxu0 %v3617
        %3894 = vmatprep.subr.mxu0 0.0
        %3895 = vmatpush1.msra.mxu0 %v3618
        %3896 = vmatprep.subr.mxu0 0.0
        %3897 = vmatpush1.msra.mxu0 %v3619
        %3898 = vmatprep.subr.mxu0 0.0
        %3899 = vmatpush1.msra.mxu0 %v3620
        %3900 = vmatprep.subr.mxu0 0.0
        %3901 = vmatpush1.msra.mxu0 %v3621
        %3902 = vmatprep.subr.mxu0 0.0
        %3903 = vmatpush1.msra.mxu0 %v3622
        %3904 = vmatprep.subr.mxu0 0.0
        %3905 = vmatpush1.msra.mxu0 %v3623
        %3906 = vmatprep.subr.mxu0 0.0
        %3907 = vmatpush1.msra.mxu0 %v3624
        %3908 = vmatprep.subr.mxu0 0.0
        %3909 = vmatpush1.msra.mxu0 %v3625
        %3910 = vmatprep.subr.mxu0 0.0
        %3911 = vmatpush1.msra.mxu0 %v3626
        %3912 = vmatprep.subr.mxu0 0.0
        %3913 = vmatpush1.msra.mxu0 %v3627
        %3914 = vmatprep.subr.mxu0 0.0
        %3915 = vmatpush1.msra.mxu0 %v3628
        %3916 = vmatprep.subr.mxu0 0.0
        %3917 = vmatpush1.msra.mxu0 %v3629
        %3918 = vmatprep.subr.mxu0 0.0
        %3919 = vmatpush1.msra.mxu0 %v3630
        %3920 = vmatprep.subr.mxu0 0.0
        %3921 = vmatpush1.msra.mxu0 %v3631
        %3922 = vmatprep.subr.mxu0 0.0
        %3923 = vmatpush1.msra.mxu0 %v3632
        %3924 = vmatprep.subr.mxu0 0.0
        %3925 = vmatpush1.msra.mxu0 %v3633
        %3926 = vmatprep.subr.mxu0 0.0
        %3927 = vmatpush1.msra.mxu0 %v3634
        %3928 = vmatprep.subr.mxu0 0.0
        %3929 = vmatpush1.msra.mxu0 %v3635
        %3930 = vmatprep.subr.mxu0 0.0
        %3931 = vmatpush1.msra.mxu0 %v3636
        %3932 = vmatprep.subr.mxu0 0.0
        %3933 = vmatpush1.msra.mxu0 %v3637
        %3934 = vmatprep.subr.mxu0 0.0
        %3935 = vmatpush1.msra.mxu0 %v3638
        %3936 = vmatprep.mubr.f32.mxu0 %v3493
        %3937 = vmatmul.mubr.f32.gmra.mrb[0].mxu0 %v3479
        %v3938 = vpop.f32.mrb[0].mxu0
        %v3939 = vadd.f32 %v3869, %v3938
        %v3940 = vpop.f32.mrb[0].mxu0
        %3941 = vdwg.mxu0
        %3942 = vmatprep.subr.mxu0 0.0
        %3943 = vmatpush1.msra.mxu0 %v3639
        %3944 = vmatprep.subr.mxu0 0.0
        %3945 = vmatpush1.msra.mxu0 %v3640
        %3946 = vmatprep.subr.mxu0 0.0
        %3947 = vmatpush1.msra.mxu0 %v3641
        %3948 = vmatprep.subr.mxu0 0.0
        %3949 = vmatpush1.msra.mxu0 %v3642
        %3950 = vmatprep.subr.mxu0 0.0
        %3951 = vmatpush1.msra.mxu0 %v3643
        %3952 = vmatprep.subr.mxu0 0.0
        %3953 = vmatpush1.msra.mxu0 %v3644
        %3954 = vmatprep.subr.mxu0 0.0
        %3955 = vmatpush1.msra.mxu0 %v3645
        %3956 = vmatprep.subr.mxu0 0.0
        %3957 = vmatpush1.msra.mxu0 %v3646
        %3958 = vmatprep.subr.mxu0 0.0
        %3959 = vmatpush1.msra.mxu0 %v3647
        %3960 = vmatprep.subr.mxu0 0.0
        %3961 = vmatpush1.msra.mxu0 %v3648
        %3962 = vmatprep.subr.mxu0 0.0
        %3963 = vmatpush1.msra.mxu0 %v3649
        %3964 = vmatprep.subr.mxu0 0.0
        %3965 = vmatpush1.msra.mxu0 %v3650
        %3966 = vmatprep.subr.mxu0 0.0
        %3967 = vmatpush1.msra.mxu0 %v3651
        %3968 = vmatprep.subr.mxu0 0.0
        %3969 = vmatpush1.msra.mxu0 %v3652
        %3970 = vmatprep.subr.mxu0 0.0
        %3971 = vmatpush1.msra.mxu0 %v3653
        %3972 = vmatprep.subr.mxu0 0.0
        %3973 = vmatpush1.msra.mxu0 %v3654
        %3974 = vmatprep.subr.mxu0 0.0
        %3975 = vmatpush1.msra.mxu0 0.0
        %3976 = vmatprep.subr.mxu0 0.0
        %3977 = vmatpush1.msra.mxu0 0.0
        %3978 = vmatprep.subr.mxu0 0.0
        %3979 = vmatpush1.msra.mxu0 0.0
        %3980 = vmatprep.subr.mxu0 0.0
        %3981 = vmatpush1.msra.mxu0 0.0
        %3982 = vmatprep.subr.mxu0 0.0
        %3983 = vmatpush1.msra.mxu0 0.0
        %3984 = vmatprep.subr.mxu0 0.0
        %3985 = vmatpush1.msra.mxu0 0.0
        %3986 = vmatprep.subr.mxu0 0.0
        %3987 = vmatpush1.msra.mxu0 0.0
        %3988 = vmatprep.subr.mxu0 0.0
        %3989 = vmatpush1.msra.mxu0 0.0
        %3990 = vmatprep.subr.mxu0 0.0
        %3991 = vmatpush1.msra.mxu0 0.0
        %3992 = vmatprep.subr.mxu0 0.0
        %3993 = vmatpush1.msra.mxu0 0.0
        %3994 = vmatprep.subr.mxu0 0.0
        %3995 = vmatpush1.msra.mxu0 0.0
        %3996 = vmatprep.subr.mxu0 0.0
        %3997 = vmatpush1.msra.mxu0 0.0
        %3998 = vmatprep.subr.mxu0 0.0
        %3999 = vmatpush1.msra.mxu0 0.0
        %4000 = vmatprep.subr.mxu0 0.0
        %4001 = vmatpush1.msra.mxu0 0.0
        %4002 = vmatprep.subr.mxu0 0.0
        %4003 = vmatpush1.msra.mxu0 0.0
        %4004 = vmatprep.subr.mxu0 0.0
        %4005 = vmatpush1.msra.mxu0 0.0
        %4006 = vmatprep.mubr.f32.mxu0 0.0
        %4007 = vmatmul.mubr.f32.gmra.mrb[0].mxu0 %v3507
        %v4008 = vpop.f32.mrb[0].mxu0
        %v4009 = vadd.f32 %v3939, %v4008
        %v4010 = vpop.f32.mrb[0].mxu0
        %4011 = vdwg.mxu0
        %vm4012 = vcmask 80896
        %v4013 = vsel %vm4012, %v4009, -inf
        %4014 = vmax.xlane.f32.xlu0 %v4013
        %v4015 = vpop.xlane.xlu0 %4014
        %v4016 = vsub.f32 %v4009, %v4015
        %v4017 = vmul.f32 %v4016, 1.442695
        %v4018 = vpow.pop %v4017
        %v4019 = vsel %vm4012, %v4018, 0.0
        %4020 = vadd.xlane.f32.xlu0 %v4019
        %v4021 = vpop.xlane.xlu0 %4020
        %v4022 = vrcp.pop %v4021
        %v4023 = vmul.f32 %v4018, %v4022
        %v4024 = vmul.f32 %v2702, %v2871
        %v4025 = vmul.f32 %v2709, %v2878
        %v4026 = vmul.f32 %v2716, %v2885
        %v4027 = vmul.f32 %v2723, %v2892
        %v4028 = vmul.f32 %v2730, %v2899
        %v4029 = vmul.f32 %v2737, %v2906
        %v4030 = vmul.f32 %v2744, %v2913
        %v4031 = vmul.f32 %v2751, %v2920
        %v4032 = vmul.f32 %v2758, %v2927
        %v4033 = vmul.f32 %v2765, %v2934
        %v4034 = vmul.f32 %v2772, %v2941
        %v4035 = vmul.f32 %v2779, %v2948
        %v4036 = vmul.f32 %v2786, %v2955
        %v4037 = vmul.f32 %v2793, %v2962
        %v4038 = vmul.f32 %v2800, %v2969
        %v4039 = vmul.f32 %v2807, %v2976
        %v4040 = vmul.f32 %v2814, %v2983
        %v4041 = vmul.f32 %v2821, %v2990
        %v4042 = vmul.f32 %v2828, %v2997
        %v4043 = vmul.f32 %v2835, %v3004
        %v4044 = vmul.f32 %v2842, %v3011
        %v4045 = vmul.f32 %v2849, %v3018
        %v4046 = vmul.f32 %v2856, %v3025
        %v4047 = vmul.f32 %v2863, %v3032
        %v4048 = vsub.f32 %v2702, %v2871
        %v4049 = vsub.f32 %v2709, %v2878
        %v4050 = vsub.f32 %v2716, %v2885
        %v4051 = vsub.f32 %v2723, %v2892
        %v4052 = vsub.f32 %v2730, %v2899
        %v4053 = vsub.f32 %v2737, %v2906
        %v4054 = vsub.f32 %v2744, %v2913
        %v4055 = vsub.f32 %v2751, %v2920
        %v4056 = vsub.f32 %v2758, %v2927
        %v4057 = vsub.f32 %v2765, %v2934
        %v4058 = vsub.f32 %v2772, %v2941
        %v4059 = vsub.f32 %v2779, %v2948
        %v4060 = vsub.f32 %v2786, %v2955
        %v4061 = vsub.f32 %v2793, %v2962
        %v4062 = vsub.f32 %v2800, %v2969
        %v4063 = vsub.f32 %v2807, %v2976
        %v4064 = vsub.f32 %v2814, %v2983
        %v4065 = vsub.f32 %v2821, %v2990
        %v4066 = vsub.f32 %v2828, %v2997
        %v4067 = vsub.f32 %v2835, %v3004
        %v4068 = vsub.f32 %v2842, %v3011
        %v4069 = vsub.f32 %v2849, %v3018
        %v4070 = vsub.f32 %v2856, %v3025
        %v4071 = vsub.f32 %v2863, %v3032
        %v4072 = vand.u32 2147483647, %v4048
        %v4073 = vand.u32 2147483647, %v4049
        %v4074 = vand.u32 2147483647, %v4050
        %v4075 = vand.u32 2147483647, %v4051
        %v4076 = vand.u32 2147483647, %v4052
        %v4077 = vand.u32 2147483647, %v4053
        %v4078 = vand.u32 2147483647, %v4054
        %v4079 = vand.u32 2147483647, %v4055
        %v4080 = vand.u32 2147483647, %v4056
        %v4081 = vand.u32 2147483647, %v4057
        %v4082 = vand.u32 2147483647, %v4058
        %v4083 = vand.u32 2147483647, %v4059
        %v4084 = vand.u32 2147483647, %v4060
        %v4085 = vand.u32 2147483647, %v4061
        %v4086 = vand.u32 2147483647, %v4062
        %v4087 = vand.u32 2147483647, %v4063
        %v4088 = vand.u32 2147483647, %v4064
        %v4089 = vand.u32 2147483647, %v4065
        %v4090 = vand.u32 2147483647, %v4066
        %v4091 = vand.u32 2147483647, %v4067
        %v4092 = vand.u32 2147483647, %v4068
        %v4093 = vand.u32 2147483647, %v4069
        %v4094 = vand.u32 2147483647, %v4070
        %v4095 = vand.u32 2147483647, %v4071
        %v4120 = vsel %vm3322, %v4027, %v4024
        %v4121 = vsel %vm3325, %v4030, %v4120
        %v4122 = vsel %vm3328, %v4033, %v4121
        %v4123 = vsel %vm3331, %v4036, %v4122
        %v4124 = vsel %vm3334, %v4039, %v4123
        %v4125 = vsel %vm3337, %v4042, %v4124
        %v4126 = vsel %vm3340, %v4045, %v4125
        %v4127 = vsel %vm3322, %v4028, %v4025
        %v4128 = vsel %vm3325, %v4031, %v4127
        %v4129 = vsel %vm3328, %v4034, %v4128
        %v4130 = vsel %vm3331, %v4037, %v4129
        %v4131 = vsel %vm3334, %v4040, %v4130
        %v4132 = vsel %vm3337, %v4043, %v4131
        %v4133 = vsel %vm3340, %v4046, %v4132
        %v4134 = vsel %vm3322, %v4029, %v4026
        %v4135 = vsel %vm3325, %v4032, %v4134
        %v4136 = vsel %vm3328, %v4035, %v4135
        %v4137 = vsel %vm3331, %v4038, %v4136
        %v4138 = vsel %vm3334, %v4041, %v4137
        %v4139 = vsel %vm3337, %v4044, %v4138
        %v4140 = vsel %vm3340, %v4047, %v4139
        %v4168 = vsel %vm3322, %v4075, %v4072
        %v4169 = vsel %vm3325, %v4078, %v4168
        %v4170 = vsel %vm3328, %v4081, %v4169
        %v4171 = vsel %vm3331, %v4084, %v4170
        %v4172 = vsel %vm3334, %v4087, %v4171
        %v4173 = vsel %vm3337, %v4090, %v4172
        %v4174 = vsel %vm3340, %v4093, %v4173
        %v4175 = vsel %vm3322, %v4076, %v4073
        %v4176 = vsel %vm3325, %v4079, %v4175
        %v4177 = vsel %vm3328, %v4082, %v4176
        %v4178 = vsel %vm3331, %v4085, %v4177
        %v4179 = vsel %vm3334, %v4088, %v4178
        %v4180 = vsel %vm3337, %v4091, %v4179
        %v4181 = vsel %vm3340, %v4094, %v4180
        %v4182 = vsel %vm3322, %v4077, %v4074
        %v4183 = vsel %vm3325, %v4080, %v4182
        %v4184 = vsel %vm3328, %v4083, %v4183
        %v4185 = vsel %vm3331, %v4086, %v4184
        %v4186 = vsel %vm3334, %v4089, %v4185
        %v4187 = vsel %vm3337, %v4092, %v4186
        %v4188 = vsel %vm3340, %v4095, %v4187
        %v4192 = vld [vmem:[%s6] sm:$0xff]
        %v4193 = vld [vmem:[%s6 + $0x8] sm:$0xff]
        %v4194 = vld [vmem:[%s6 + $0x10] sm:$0xff]
        %v4195 = vld [vmem:[%s6 + $0x18] sm:$0xff]
        %v4196 = vld [vmem:[%s6 + $0x20] sm:$0xff]
        %v4197 = vld [vmem:[%s6 + $0x28] sm:$0xff]
        %v4198 = vld [vmem:[%s6 + $0x30] sm:$0xff]
        %v4199 = vld [vmem:[%s6 + $0x38] sm:$0xff]
        %v4200 = vld [vmem:[%s6 + $0x40] sm:$0xff]
        %v4201 = vld [vmem:[%s6 + $0x48] sm:$0xff]
        %v4202 = vld [vmem:[%s6 + $0x50] sm:$0xff]
        %v4203 = vld [vmem:[%s6 + $0x58] sm:$0xff]
        %v4204 = vld [vmem:[%s6 + $0x60] sm:$0xff]
        %v4205 = vld [vmem:[%s6 + $0x68] sm:$0xff]
        %v4206 = vld [vmem:[%s6 + $0x70] sm:$0xff]
        %v4207 = vld [vmem:[%s6 + $0x78] sm:$0xff]
        %v4208 = vld [vmem:[%s6 + $0x80] sm:$0xff]
        %v4209 = vld [vmem:[%s6 + $0x88] sm:$0xff]
        %v4210 = vld [vmem:[%s6 + $0x90] sm:$0xff]
        %v4211 = vld [vmem:[%s6 + $0x98] sm:$0xff]
        %v4212 = vld [vmem:[%s6 + $0xa0] sm:$0xff]
        %v4213 = vld [vmem:[%s6 + $0xa8] sm:$0xff]
        %v4214 = vld [vmem:[%s6 + $0xb0] sm:$0xff]
        %v4215 = vld [vmem:[%s6 + $0xb8] sm:$0xff]
        %v4216 = vld [vmem:[%s6 + $0xc0] sm:$0xff]
        %v4217 = vld [vmem:[%s6 + $0xc8] sm:$0xff]
        %v4218 = vld [vmem:[%s6 + $0xd0] sm:$0xff]
        %v4219 = vld [vmem:[%s6 + $0xd8] sm:$0xff]
        %v4220 = vld [vmem:[%s6 + $0xe0] sm:$0xff]
        %v4221 = vld [vmem:[%s6 + $0xe8] sm:$0xff]
        %v4222 = vld [vmem:[%s6 + $0xf0] sm:$0xff]
        %v4223 = vld [vmem:[%s6 + $0xf8] sm:$0xff]
        %v4224 = vld [vmem:[%s6 + $0x100] sm:$0xff]
        %v4225 = vld [vmem:[%s6 + $0x108] sm:$0xff]
        %v4226 = vld [vmem:[%s6 + $0x110] sm:$0xff]
        %v4227 = vld [vmem:[%s6 + $0x118] sm:$0xff]
        %v4228 = vld [vmem:[%s6 + $0x120] sm:$0xff]
        %v4229 = vld [vmem:[%s6 + $0x128] sm:$0xff]
        %v4230 = vld [vmem:[%s6 + $0x130] sm:$0xff]
        %v4231 = vld [vmem:[%s6 + $0x138] sm:$0xff]
        %v4232 = vld [vmem:[%s6 + $0x140] sm:$0xff]
        %v4233 = vld [vmem:[%s6 + $0x148] sm:$0xff]
        %v4234 = vld [vmem:[%s6 + $0x150] sm:$0xff]
        %v4235 = vld [vmem:[%s6 + $0x158] sm:$0xff]
        %v4236 = vld [vmem:[%s6 + $0x160] sm:$0xff]
        %v4237 = vld [vmem:[%s6 + $0x168] sm:$0xff]
        %v4238 = vld [vmem:[%s6 + $0x170] sm:$0xff]
        %v4239 = vld [vmem:[%s6 + $0x178] sm:$0xff]
        %v4240 = vld [vmem:[%s6 + $0x180] sm:$0xff]
        %v4241 = vld [vmem:[%s6 + $0x188] sm:$0xff]
        %v4242 = vld [vmem:[%s6 + $0x190] sm:$0xff]
        %v4243 = vld [vmem:[%s6 + $0x198] sm:$0xff]
        %v4244 = vld [vmem:[%s6 + $0x1a0] sm:$0xff]
        %v4245 = vld [vmem:[%s6 + $0x1a8] sm:$0xff]
        %v4246 = vld [vmem:[%s6 + $0x1b0] sm:$0xff]
        %v4247 = vld [vmem:[%s6 + $0x1b8] sm:$0xff]
        %v4248 = vld [vmem:[%s6 + $0x1c0] sm:$0xff]
        %v4249 = vld [vmem:[%s6 + $0x1c8] sm:$0xff]
        %v4250 = vld [vmem:[%s6 + $0x1d0] sm:$0xff]
        %v4251 = vld [vmem:[%s6 + $0x1d8] sm:$0xff]
        %v4252 = vld [vmem:[%s6 + $0x1e0] sm:$0xff]
        %v4253 = vld [vmem:[%s6 + $0x1e8] sm:$0xff]
        %v4254 = vld [vmem:[%s6 + $0x1f0] sm:$0xff]
        %v4255 = vld [vmem:[%s6 + $0x1f8] sm:$0xff]
        %v4256 = vld [vmem:[%s6 + $0x200] sm:$0xff]
        %v4257 = vld [vmem:[%s6 + $0x208] sm:$0xff]
        %v4258 = vld [vmem:[%s6 + $0x210] sm:$0xff]
        %v4259 = vld [vmem:[%s6 + $0x218] sm:$0xff]
        %v4260 = vld [vmem:[%s6 + $0x220] sm:$0xff]
        %v4261 = vld [vmem:[%s6 + $0x228] sm:$0xff]
        %v4262 = vld [vmem:[%s6 + $0x230] sm:$0xff]
        %v4263 = vld [vmem:[%s6 + $0x238] sm:$0xff]
        %v4264 = vld [vmem:[%s6 + $0x240] sm:$0xff]
        %v4265 = vld [vmem:[%s6 + $0x248] sm:$0xff]
        %v4266 = vld [vmem:[%s6 + $0x250] sm:$0xff]
        %v4267 = vld [vmem:[%s6 + $0x258] sm:$0xff]
        %v4268 = vld [vmem:[%s6 + $0x260] sm:$0xff]
        %v4269 = vld [vmem:[%s6 + $0x268] sm:$0xff]
        %v4270 = vld [vmem:[%s6 + $0x270] sm:$0xff]
        %v4271 = vld [vmem:[%s6 + $0x278] sm:$0xff]
        %v4272 = vld [vmem:[%s6 + $0x280] sm:$0xff]
        %v4273 = vld [vmem:[%s6 + $0x288] sm:$0xff]
        %v4274 = vld [vmem:[%s6 + $0x290] sm:$0xff]
        %v4275 = vld [vmem:[%s6 + $0x298] sm:$0xff]
        %v4276 = vld [vmem:[%s6 + $0x2a0] sm:$0xff]
        %v4277 = vld [vmem:[%s6 + $0x2a8] sm:$0xff]
        %v4278 = vld [vmem:[%s6 + $0x2b0] sm:$0xff]
        %v4279 = vld [vmem:[%s6 + $0x2b8] sm:$0xff]
        %v4280 = vld [vmem:[%s6 + $0x2c0] sm:$0xff]
        %v4281 = vld [vmem:[%s6 + $0x2c8] sm:$0xff]
        %v4282 = vld [vmem:[%s6 + $0x2d0] sm:$0xff]
        %v4283 = vld [vmem:[%s6 + $0x2d8] sm:$0xff]
        %v4284 = vld [vmem:[%s6 + $0x2e0] sm:$0xff]
        %v4285 = vld [vmem:[%s6 + $0x2e8] sm:$0xff]
        %v4286 = vld [vmem:[%s6 + $0x2f0] sm:$0xff]
        %v4287 = vld [vmem:[%s6 + $0x2f8] sm:$0xff]
        %v4288 = vld [vmem:[%s7] sm:$0x1]
        %v4290 = vlaneseq
        %v4291 = vshrl.u32 %v4290, 7
        %v4292 = vsub.s32 0, %v4291
        %v4293 = vrot.slane %v4288, %v4292
        %4295 = vmatprep.subr.mxu0 0.0
        %4296 = vmatpush1.msra.mxu0 %v4192
        %4297 = vmatprep.subr.mxu0 0.0
        %4298 = vmatpush1.msra.mxu0 %v4193
        %4299 = vmatprep.subr.mxu0 0.0
        %4300 = vmatpush1.msra.mxu0 %v4194
        %4301 = vmatprep.subr.mxu0 0.0
        %4302 = vmatpush1.msra.mxu0 %v4195
        %4303 = vmatprep.subr.mxu0 0.0
        %4304 = vmatpush1.msra.mxu0 %v4196
        %4305 = vmatprep.subr.mxu0 0.0
        %4306 = vmatpush1.msra.mxu0 %v4197
        %4307 = vmatprep.subr.mxu0 0.0
        %4308 = vmatpush1.msra.mxu0 %v4198
        %4309 = vmatprep.subr.mxu0 0.0
        %4310 = vmatpush1.msra.mxu0 %v4199
        %4311 = vmatprep.subr.mxu0 0.0
        %4312 = vmatpush1.msra.mxu0 %v4200
        %4313 = vmatprep.subr.mxu0 0.0
        %4314 = vmatpush1.msra.mxu0 %v4201
        %4315 = vmatprep.subr.mxu0 0.0
        %4316 = vmatpush1.msra.mxu0 %v4202
        %4317 = vmatprep.subr.mxu0 0.0
        %4318 = vmatpush1.msra.mxu0 %v4203
        %4319 = vmatprep.subr.mxu0 0.0
        %4320 = vmatpush1.msra.mxu0 %v4204
        %4321 = vmatprep.subr.mxu0 0.0
        %4322 = vmatpush1.msra.mxu0 %v4205
        %4323 = vmatprep.subr.mxu0 0.0
        %4324 = vmatpush1.msra.mxu0 %v4206
        %4325 = vmatprep.subr.mxu0 0.0
        %4326 = vmatpush1.msra.mxu0 %v4207
        %4327 = vmatprep.subr.mxu0 0.0
        %4328 = vmatpush1.msra.mxu0 %v4208
        %4329 = vmatprep.subr.mxu0 0.0
        %4330 = vmatpush1.msra.mxu0 %v4209
        %4331 = vmatprep.subr.mxu0 0.0
        %4332 = vmatpush1.msra.mxu0 %v4210
        %4333 = vmatprep.subr.mxu0 0.0
        %4334 = vmatpush1.msra.mxu0 %v4211
        %4335 = vmatprep.subr.mxu0 0.0
        %4336 = vmatpush1.msra.mxu0 %v4212
        %4337 = vmatprep.subr.mxu0 0.0
        %4338 = vmatpush1.msra.mxu0 %v4213
        %4339 = vmatprep.subr.mxu0 0.0
        %4340 = vmatpush1.msra.mxu0 %v4214
        %4341 = vmatprep.subr.mxu0 0.0
        %4342 = vmatpush1.msra.mxu0 %v4215
        %4343 = vmatprep.subr.mxu0 0.0
        %4344 = vmatpush1.msra.mxu0 %v4216
        %4345 = vmatprep.subr.mxu0 0.0
        %4346 = vmatpush1.msra.mxu0 %v4217
        %4347 = vmatprep.subr.mxu0 0.0
        %4348 = vmatpush1.msra.mxu0 %v4218
        %4349 = vmatprep.subr.mxu0 0.0
        %4350 = vmatpush1.msra.mxu0 %v4219
        %4351 = vmatprep.subr.mxu0 0.0
        %4352 = vmatpush1.msra.mxu0 %v4220
        %4353 = vmatprep.subr.mxu0 0.0
        %4354 = vmatpush1.msra.mxu0 %v4221
        %4355 = vmatprep.subr.mxu0 0.0
        %4356 = vmatpush1.msra.mxu0 %v4222
        %4357 = vmatprep.subr.mxu0 0.0
        %4358 = vmatpush1.msra.mxu0 %v4223
        %4359 = vmatprep.mubr.f32.mxu0 %v4133
        %4360 = vmatmul.mubr.f32.gmra.mrb[0].mxu0 %v4126
        %v4361 = vpop.f32.mrb[0].mxu0
        %v4362 = vadd.f32 %v4293, %v4361
        %v4363 = vpop.f32.mrb[0].mxu0
        %4364 = vdwg.mxu0
        %4365 = vmatprep.subr.mxu0 0.0
        %4366 = vmatpush1.msra.mxu0 %v4224
        %4367 = vmatprep.subr.mxu0 0.0
        %4368 = vmatpush1.msra.mxu0 %v4225
        %4369 = vmatprep.subr.mxu0 0.0
        %4370 = vmatpush1.msra.mxu0 %v4226
        %4371 = vmatprep.subr.mxu0 0.0
        %4372 = vmatpush1.msra.mxu0 %v4227
        %4373 = vmatprep.subr.mxu0 0.0
        %4374 = vmatpush1.msra.mxu0 %v4228
        %4375 = vmatprep.subr.mxu0 0.0
        %4376 = vmatpush1.msra.mxu0 %v4229
        %4377 = vmatprep.subr.mxu0 0.0
        %4378 = vmatpush1.msra.mxu0 %v4230
        %4379 = vmatprep.subr.mxu0 0.0
        %4380 = vmatpush1.msra.mxu0 %v4231
        %4381 = vmatprep.subr.mxu0 0.0
        %4382 = vmatpush1.msra.mxu0 %v4232
        %4383 = vmatprep.subr.mxu0 0.0
        %4384 = vmatpush1.msra.mxu0 %v4233
        %4385 = vmatprep.subr.mxu0 0.0
        %4386 = vmatpush1.msra.mxu0 %v4234
        %4387 = vmatprep.subr.mxu0 0.0
        %4388 = vmatpush1.msra.mxu0 %v4235
        %4389 = vmatprep.subr.mxu0 0.0
        %4390 = vmatpush1.msra.mxu0 %v4236
        %4391 = vmatprep.subr.mxu0 0.0
        %4392 = vmatpush1.msra.mxu0 %v4237
        %4393 = vmatprep.subr.mxu0 0.0
        %4394 = vmatpush1.msra.mxu0 %v4238
        %4395 = vmatprep.subr.mxu0 0.0
        %4396 = vmatpush1.msra.mxu0 %v4239
        %4397 = vmatprep.subr.mxu0 0.0
        %4398 = vmatpush1.msra.mxu0 %v4240
        %4399 = vmatprep.subr.mxu0 0.0
        %4400 = vmatpush1.msra.mxu0 %v4241
        %4401 = vmatprep.subr.mxu0 0.0
        %4402 = vmatpush1.msra.mxu0 %v4242
        %4403 = vmatprep.subr.mxu0 0.0
        %4404 = vmatpush1.msra.mxu0 %v4243
        %4405 = vmatprep.subr.mxu0 0.0
        %4406 = vmatpush1.msra.mxu0 %v4244
        %4407 = vmatprep.subr.mxu0 0.0
        %4408 = vmatpush1.msra.mxu0 %v4245
        %4409 = vmatprep.subr.mxu0 0.0
        %4410 = vmatpush1.msra.mxu0 %v4246
        %4411 = vmatprep.subr.mxu0 0.0
        %4412 = vmatpush1.msra.mxu0 %v4247
        %4413 = vmatprep.subr.mxu0 0.0
        %4414 = vmatpush1.msra.mxu0 %v4248
        %4415 = vmatprep.subr.mxu0 0.0
        %4416 = vmatpush1.msra.mxu0 %v4249
        %4417 = vmatprep.subr.mxu0 0.0
        %4418 = vmatpush1.msra.mxu0 %v4250
        %4419 = vmatprep.subr.mxu0 0.0
        %4420 = vmatpush1.msra.mxu0 %v4251
        %4421 = vmatprep.subr.mxu0 0.0
        %4422 = vmatpush1.msra.mxu0 %v4252
        %4423 = vmatprep.subr.mxu0 0.0
        %4424 = vmatpush1.msra.mxu0 %v4253
        %4425 = vmatprep.subr.mxu0 0.0
        %4426 = vmatpush1.msra.mxu0 %v4254
        %4427 = vmatprep.subr.mxu0 0.0
        %4428 = vmatpush1.msra.mxu0 %v4255
        %4429 = vmatprep.mubr.f32.mxu0 %v4174
        %4430 = vmatmul.mubr.f32.gmra.mrb[0].mxu0 %v4140
        %v4431 = vpop.f32.mrb[0].mxu0
        %v4432 = vadd.f32 %v4362, %v4431
        %v4433 = vpop.f32.mrb[0].mxu0
        %4434 = vdwg.mxu0
        %4435 = vmatprep.subr.mxu0 0.0
        %4436 = vmatpush1.msra.mxu0 %v4256
        %4437 = vmatprep.subr.mxu0 0.0
        %4438 = vmatpush1.msra.mxu0 %v4257
        %4439 = vmatprep.subr.mxu0 0.0
        %4440 = vmatpush1.msra.mxu0 %v4258
        %4441 = vmatprep.subr.mxu0 0.0
        %4442 = vmatpush1.msra.mxu0 %v4259
        %4443 = vmatprep.subr.mxu0 0.0
        %4444 = vmatpush1.msra.mxu0 %v4260
        %4445 = vmatprep.subr.mxu0 0.0
        %4446 = vmatpush1.msra.mxu0 %v4261
        %4447 = vmatprep.subr.mxu0 0.0
        %4448 = vmatpush1.msra.mxu0 %v4262
        %4449 = vmatprep.subr.mxu0 0.0
        %4450 = vmatpush1.msra.mxu0 %v4263
        %4451 = vmatprep.subr.mxu0 0.0
        %4452 = vmatpush1.msra.mxu0 %v4264
        %4453 = vmatprep.subr.mxu0 0.0
        %4454 = vmatpush1.msra.mxu0 %v4265
        %4455 = vmatprep.subr.mxu0 0.0
        %4456 = vmatpush1.msra.mxu0 %v4266
        %4457 = vmatprep.subr.mxu0 0.0
        %4458 = vmatpush1.msra.mxu0 %v4267
        %4459 = vmatprep.subr.mxu0 0.0
        %4460 = vmatpush1.msra.mxu0 %v4268
        %4461 = vmatprep.subr.mxu0 0.0
        %4462 = vmatpush1.msra.mxu0 %v4269
        %4463 = vmatprep.subr.mxu0 0.0
        %4464 = vmatpush1.msra.mxu0 %v4270
        %4465 = vmatprep.subr.mxu0 0.0
        %4466 = vmatpush1.msra.mxu0 %v4271
        %4467 = vmatprep.subr.mxu0 0.0
        %4468 = vmatpush1.msra.mxu0 %v4272
        %4469 = vmatprep.subr.mxu0 0.0
        %4470 = vmatpush1.msra.mxu0 %v4273
        %4471 = vmatprep.subr.mxu0 0.0
        %4472 = vmatpush1.msra.mxu0 %v4274
        %4473 = vmatprep.subr.mxu0 0.0
        %4474 = vmatpush1.msra.mxu0 %v4275
        %4475 = vmatprep.subr.mxu0 0.0
        %4476 = vmatpush1.msra.mxu0 %v4276
        %4477 = vmatprep.subr.mxu0 0.0
        %4478 = vmatpush1.msra.mxu0 %v4277
        %4479 = vmatprep.subr.mxu0 0.0
        %4480 = vmatpush1.msra.mxu0 %v4278
        %4481 = vmatprep.subr.mxu0 0.0
        %4482 = vmatpush1.msra.mxu0 %v4279
        %4483 = vmatprep.subr.mxu0 0.0
        %4484 = vmatpush1.msra.mxu0 %v4280
        %4485 = vmatprep.subr.mxu0 0.0
        %4486 = vmatpush1.msra.mxu0 %v4281
        %4487 = vmatprep.subr.mxu0 0.0
        %4488 = vmatpush1.msra.mxu0 %v4282
        %4489 = vmatprep.subr.mxu0 0.0
        %4490 = vmatpush1.msra.mxu0 %v4283
        %4491 = vmatprep.subr.mxu0 0.0
        %4492 = vmatpush1.msra.mxu0 %v4284
        %4493 = vmatprep.subr.mxu0 0.0
        %4494 = vmatpush1.msra.mxu0 %v4285
        %4495 = vmatprep.subr.mxu0 0.0
        %4496 = vmatpush1.msra.mxu0 %v4286
        %4497 = vmatprep.subr.mxu0 0.0
        %4498 = vmatpush1.msra.mxu0 %v4287
        %4499 = vmatprep.mubr.f32.mxu0 %v4188
        %4500 = vmatmul.mubr.f32.gmra.mrb[0].mxu0 %v4181
        %v4501 = vpop.f32.mrb[0].mxu0
        %v4502 = vadd.f32 %v4432, %v4501
        %v4503 = vpop.f32.mrb[0].mxu0
        %4504 = vdwg.mxu0
        %vm4505 = vcmask 15360
        %v4506 = vsel %vm4505, %v4502, -inf
        %4507 = vmax.xlane.f32.xlu0 %v4506
        %v4508 = vpop.xlane.xlu0 %4507
        %v4509 = vsub.f32 %v4502, %v4508
        %v4510 = vmul.f32 %v4509, 1.442695
        %v4511 = vpow.pop %v4510
        %v4512 = vsel %vm4505, %v4511, 0.0
        %4513 = vadd.xlane.f32.xlu0 %v4512
        %v4514 = vpop.xlane.xlu0 %4513
        %v4515 = vrcp.pop %v4514
        %v4516 = vmul.f32 %v4511, %v4515
        %v4517 = vmul.f32 %v2365, %v2533
        %v4518 = vmul.f32 %v2372, %v2540
        %v4519 = vmul.f32 %v2379, %v2547
        %v4520 = vmul.f32 %v2386, %v2554
        %v4521 = vmul.f32 %v2393, %v2561
        %v4522 = vmul.f32 %v2400, %v2568
        %v4523 = vmul.f32 %v2407, %v2575
        %v4524 = vmul.f32 %v2414, %v2582
        %v4525 = vmul.f32 %v2421, %v2589
        %v4526 = vmul.f32 %v2428, %v2596
        %v4527 = vmul.f32 %v2435, %v2603
        %v4528 = vmul.f32 %v2442, %v2610
        %v4529 = vmul.f32 %v2449, %v2617
        %v4530 = vmul.f32 %v2456, %v2624
        %v4531 = vmul.f32 %v2463, %v2631
        %v4532 = vmul.f32 %v2470, %v2638
        %v4533 = vmul.f32 %v2477, %v2645
        %v4534 = vmul.f32 %v2484, %v2652
        %v4535 = vmul.f32 %v2491, %v2659
        %v4536 = vmul.f32 %v2498, %v2666
        %v4537 = vmul.f32 %v2505, %v2673
        %v4538 = vmul.f32 %v2512, %v2680
        %v4539 = vmul.f32 %v2519, %v2687
        %v4540 = vmul.f32 %v2526, %v2694
        %v4541 = vsub.f32 %v2365, %v2533
        %v4542 = vsub.f32 %v2372, %v2540
        %v4543 = vsub.f32 %v2379, %v2547
        %v4544 = vsub.f32 %v2386, %v2554
        %v4545 = vsub.f32 %v2393, %v2561
        %v4546 = vsub.f32 %v2400, %v2568
        %v4547 = vsub.f32 %v2407, %v2575
        %v4548 = vsub.f32 %v2414, %v2582
        %v4549 = vsub.f32 %v2421, %v2589
        %v4550 = vsub.f32 %v2428, %v2596
        %v4551 = vsub.f32 %v2435, %v2603
        %v4552 = vsub.f32 %v2442, %v2610
        %v4553 = vsub.f32 %v2449, %v2617
        %v4554 = vsub.f32 %v2456, %v2624
        %v4555 = vsub.f32 %v2463, %v2631
        %v4556 = vsub.f32 %v2470, %v2638
        %v4557 = vsub.f32 %v2477, %v2645
        %v4558 = vsub.f32 %v2484, %v2652
        %v4559 = vsub.f32 %v2491, %v2659
        %v4560 = vsub.f32 %v2498, %v2666
        %v4561 = vsub.f32 %v2505, %v2673
        %v4562 = vsub.f32 %v2512, %v2680
        %v4563 = vsub.f32 %v2519, %v2687
        %v4564 = vsub.f32 %v2526, %v2694
        %v4565 = vand.u32 2147483647, %v4541
        %v4566 = vand.u32 2147483647, %v4542
        %v4567 = vand.u32 2147483647, %v4543
        %v4568 = vand.u32 2147483647, %v4544
        %v4569 = vand.u32 2147483647, %v4545
        %v4570 = vand.u32 2147483647, %v4546
        %v4571 = vand.u32 2147483647, %v4547
        %v4572 = vand.u32 2147483647, %v4548
        %v4573 = vand.u32 2147483647, %v4549
        %v4574 = vand.u32 2147483647, %v4550
        %v4575 = vand.u32 2147483647, %v4551
        %v4576 = vand.u32 2147483647, %v4552
        %v4577 = vand.u32 2147483647, %v4553
        %v4578 = vand.u32 2147483647, %v4554
        %v4579 = vand.u32 2147483647, %v4555
        %v4580 = vand.u32 2147483647, %v4556
        %v4581 = vand.u32 2147483647, %v4557
        %v4582 = vand.u32 2147483647, %v4558
        %v4583 = vand.u32 2147483647, %v4559
        %v4584 = vand.u32 2147483647, %v4560
        %v4585 = vand.u32 2147483647, %v4561
        %v4586 = vand.u32 2147483647, %v4562
        %v4587 = vand.u32 2147483647, %v4563
        %v4588 = vand.u32 2147483647, %v4564
        %v4613 = vsel %vm3322, %v4520, %v4517
        %v4614 = vsel %vm3325, %v4523, %v4613
        %v4615 = vsel %vm3328, %v4526, %v4614
        %v4616 = vsel %vm3331, %v4529, %v4615
        %v4617 = vsel %vm3334, %v4532, %v4616
        %v4618 = vsel %vm3337, %v4535, %v4617
        %v4619 = vsel %vm3340, %v4538, %v4618
        %v4620 = vsel %vm3322, %v4521, %v4518
        %v4621 = vsel %vm3325, %v4524, %v4620
        %v4622 = vsel %vm3328, %v4527, %v4621
        %v4623 = vsel %vm3331, %v4530, %v4622
        %v4624 = vsel %vm3334, %v4533, %v4623
        %v4625 = vsel %vm3337, %v4536, %v4624
        %v4626 = vsel %vm3340, %v4539, %v4625
        %v4627 = vsel %vm3322, %v4522, %v4519
        %v4628 = vsel %vm3325, %v4525, %v4627
        %v4629 = vsel %vm3328, %v4528, %v4628
        %v4630 = vsel %vm3331, %v4531, %v4629
        %v4631 = vsel %vm3334, %v4534, %v4630
        %v4632 = vsel %vm3337, %v4537, %v4631
        %v4633 = vsel %vm3340, %v4540, %v4632
        %v4661 = vsel %vm3322, %v4568, %v4565
        %v4662 = vsel %vm3325, %v4571, %v4661
        %v4663 = vsel %vm3328, %v4574, %v4662
        %v4664 = vsel %vm3331, %v4577, %v4663
        %v4665 = vsel %vm3334, %v4580, %v4664
        %v4666 = vsel %vm3337, %v4583, %v4665
        %v4667 = vsel %vm3340, %v4586, %v4666
        %v4668 = vsel %vm3322, %v4569, %v4566
        %v4669 = vsel %vm3325, %v4572, %v4668
        %v4670 = vsel %vm3328, %v4575, %v4669
        %v4671 = vsel %vm3331, %v4578, %v4670
        %v4672 = vsel %vm3334, %v4581, %v4671
        %v4673 = vsel %vm3337, %v4584, %v4672
        %v4674 = vsel %vm3340, %v4587, %v4673
        %v4675 = vsel %vm3322, %v4570, %v4567
        %v4676 = vsel %vm3325, %v4573, %v4675
        %v4677 = vsel %vm3328, %v4576, %v4676
        %v4678 = vsel %vm3331, %v4579, %v4677
        %v4679 = vsel %vm3334, %v4582, %v4678
        %v4680 = vsel %vm3337, %v4585, %v4679
        %v4681 = vsel %vm3340, %v4588, %v4680
        %v4685 = vld [vmem:[%s8] sm:$0xff]
        %v4686 = vld [vmem:[%s8 + $0x8] sm:$0xff]
        %v4687 = vld [vmem:[%s8 + $0x10] sm:$0xff]
        %v4688 = vld [vmem:[%s8 + $0x18] sm:$0xff]
        %v4689 = vld [vmem:[%s8 + $0x20] sm:$0xff]
        %v4690 = vld [vmem:[%s8 + $0x28] sm:$0xff]
        %v4691 = vld [vmem:[%s8 + $0x30] sm:$0xff]
        %v4692 = vld [vmem:[%s8 + $0x38] sm:$0xff]
        %v4693 = vld [vmem:[%s8 + $0x40] sm:$0xff]
        %v4694 = vld [vmem:[%s8 + $0x48] sm:$0xff]
        %v4695 = vld [vmem:[%s8 + $0x50] sm:$0xff]
        %v4696 = vld [vmem:[%s8 + $0x58] sm:$0xff]
        %v4697 = vld [vmem:[%s8 + $0x60] sm:$0xff]
        %v4698 = vld [vmem:[%s8 + $0x68] sm:$0xff]
        %v4699 = vld [vmem:[%s8 + $0x70] sm:$0xff]
        %v4700 = vld [vmem:[%s8 + $0x78] sm:$0xff]
        %v4701 = vld [vmem:[%s8 + $0x80] sm:$0xff]
        %v4702 = vld [vmem:[%s8 + $0x88] sm:$0xff]
        %v4703 = vld [vmem:[%s8 + $0x90] sm:$0xff]
        %v4704 = vld [vmem:[%s8 + $0x98] sm:$0xff]
        %v4705 = vld [vmem:[%s8 + $0xa0] sm:$0xff]
        %v4706 = vld [vmem:[%s8 + $0xa8] sm:$0xff]
        %v4707 = vld [vmem:[%s8 + $0xb0] sm:$0xff]
        %v4708 = vld [vmem:[%s8 + $0xb8] sm:$0xff]
        %v4709 = vld [vmem:[%s8 + $0xc0] sm:$0xff]
        %v4710 = vld [vmem:[%s8 + $0xc8] sm:$0xff]
        %v4711 = vld [vmem:[%s8 + $0xd0] sm:$0xff]
        %v4712 = vld [vmem:[%s8 + $0xd8] sm:$0xff]
        %v4713 = vld [vmem:[%s8 + $0xe0] sm:$0xff]
        %v4714 = vld [vmem:[%s8 + $0xe8] sm:$0xff]
        %v4715 = vld [vmem:[%s8 + $0xf0] sm:$0xff]
        %v4716 = vld [vmem:[%s8 + $0xf8] sm:$0xff]
        %v4717 = vld [vmem:[%s8 + $0x100] sm:$0xff]
        %v4718 = vld [vmem:[%s8 + $0x108] sm:$0xff]
        %v4719 = vld [vmem:[%s8 + $0x110] sm:$0xff]
        %v4720 = vld [vmem:[%s8 + $0x118] sm:$0xff]
        %v4721 = vld [vmem:[%s8 + $0x120] sm:$0xff]
        %v4722 = vld [vmem:[%s8 + $0x128] sm:$0xff]
        %v4723 = vld [vmem:[%s8 + $0x130] sm:$0xff]
        %v4724 = vld [vmem:[%s8 + $0x138] sm:$0xff]
        %v4725 = vld [vmem:[%s8 + $0x140] sm:$0xff]
        %v4726 = vld [vmem:[%s8 + $0x148] sm:$0xff]
        %v4727 = vld [vmem:[%s8 + $0x150] sm:$0xff]
        %v4728 = vld [vmem:[%s8 + $0x158] sm:$0xff]
        %v4729 = vld [vmem:[%s8 + $0x160] sm:$0xff]
        %v4730 = vld [vmem:[%s8 + $0x168] sm:$0xff]
        %v4731 = vld [vmem:[%s8 + $0x170] sm:$0xff]
        %v4732 = vld [vmem:[%s8 + $0x178] sm:$0xff]
        %v4733 = vld [vmem:[%s8 + $0x180] sm:$0xff]
        %v4734 = vld [vmem:[%s8 + $0x188] sm:$0xff]
        %v4735 = vld [vmem:[%s8 + $0x190] sm:$0xff]
        %v4736 = vld [vmem:[%s8 + $0x198] sm:$0xff]
        %v4737 = vld [vmem:[%s8 + $0x1a0] sm:$0xff]
        %v4738 = vld [vmem:[%s8 + $0x1a8] sm:$0xff]
        %v4739 = vld [vmem:[%s8 + $0x1b0] sm:$0xff]
        %v4740 = vld [vmem:[%s8 + $0x1b8] sm:$0xff]
        %v4741 = vld [vmem:[%s8 + $0x1c0] sm:$0xff]
        %v4742 = vld [vmem:[%s8 + $0x1c8] sm:$0xff]
        %v4743 = vld [vmem:[%s8 + $0x1d0] sm:$0xff]
        %v4744 = vld [vmem:[%s8 + $0x1d8] sm:$0xff]
        %v4745 = vld [vmem:[%s8 + $0x1e0] sm:$0xff]
        %v4746 = vld [vmem:[%s8 + $0x1e8] sm:$0xff]
        %v4747 = vld [vmem:[%s8 + $0x1f0] sm:$0xff]
        %v4748 = vld [vmem:[%s8 + $0x1f8] sm:$0xff]
        %v4749 = vld [vmem:[%s8 + $0x200] sm:$0xff]
        %v4750 = vld [vmem:[%s8 + $0x208] sm:$0xff]
        %v4751 = vld [vmem:[%s8 + $0x210] sm:$0xff]
        %v4752 = vld [vmem:[%s8 + $0x218] sm:$0xff]
        %v4753 = vld [vmem:[%s8 + $0x220] sm:$0xff]
        %v4754 = vld [vmem:[%s8 + $0x228] sm:$0xff]
        %v4755 = vld [vmem:[%s8 + $0x230] sm:$0xff]
        %v4756 = vld [vmem:[%s8 + $0x238] sm:$0xff]
        %v4757 = vld [vmem:[%s8 + $0x240] sm:$0xff]
        %v4758 = vld [vmem:[%s8 + $0x248] sm:$0xff]
        %v4759 = vld [vmem:[%s8 + $0x250] sm:$0xff]
        %v4760 = vld [vmem:[%s8 + $0x258] sm:$0xff]
        %v4761 = vld [vmem:[%s8 + $0x260] sm:$0xff]
        %v4762 = vld [vmem:[%s8 + $0x268] sm:$0xff]
        %v4763 = vld [vmem:[%s8 + $0x270] sm:$0xff]
        %v4764 = vld [vmem:[%s8 + $0x278] sm:$0xff]
        %v4765 = vld [vmem:[%s8 + $0x280] sm:$0xff]
        %v4766 = vld [vmem:[%s8 + $0x288] sm:$0xff]
        %v4767 = vld [vmem:[%s8 + $0x290] sm:$0xff]
        %v4768 = vld [vmem:[%s8 + $0x298] sm:$0xff]
        %v4769 = vld [vmem:[%s8 + $0x2a0] sm:$0xff]
        %v4770 = vld [vmem:[%s8 + $0x2a8] sm:$0xff]
        %v4771 = vld [vmem:[%s8 + $0x2b0] sm:$0xff]
        %v4772 = vld [vmem:[%s8 + $0x2b8] sm:$0xff]
        %v4773 = vld [vmem:[%s8 + $0x2c0] sm:$0xff]
        %v4774 = vld [vmem:[%s8 + $0x2c8] sm:$0xff]
        %v4775 = vld [vmem:[%s8 + $0x2d0] sm:$0xff]
        %v4776 = vld [vmem:[%s8 + $0x2d8] sm:$0xff]
        %v4777 = vld [vmem:[%s8 + $0x2e0] sm:$0xff]
        %v4778 = vld [vmem:[%s8 + $0x2e8] sm:$0xff]
        %v4779 = vld [vmem:[%s8 + $0x2f0] sm:$0xff]
        %v4780 = vld [vmem:[%s8 + $0x2f8] sm:$0xff]
        %v4781 = vld [vmem:[%s9] sm:$0x1]
        %v4783 = vlaneseq
        %v4784 = vshrl.u32 %v4783, 7
        %v4785 = vsub.s32 0, %v4784
        %v4786 = vrot.slane %v4781, %v4785
        %4788 = vmatprep.subr.mxu0 0.0
        %4789 = vmatpush1.msra.mxu0 %v4685
        %4790 = vmatprep.subr.mxu0 0.0
        %4791 = vmatpush1.msra.mxu0 %v4686
        %4792 = vmatprep.subr.mxu0 0.0
        %4793 = vmatpush1.msra.mxu0 %v4687
        %4794 = vmatprep.subr.mxu0 0.0
        %4795 = vmatpush1.msra.mxu0 %v4688
        %4796 = vmatprep.subr.mxu0 0.0
        %4797 = vmatpush1.msra.mxu0 %v4689
        %4798 = vmatprep.subr.mxu0 0.0
        %4799 = vmatpush1.msra.mxu0 %v4690
        %4800 = vmatprep.subr.mxu0 0.0
        %4801 = vmatpush1.msra.mxu0 %v4691
        %4802 = vmatprep.subr.mxu0 0.0
        %4803 = vmatpush1.msra.mxu0 %v4692
        %4804 = vmatprep.subr.mxu0 0.0
        %4805 = vmatpush1.msra.mxu0 %v4693
        %4806 = vmatprep.subr.mxu0 0.0
        %4807 = vmatpush1.msra.mxu0 %v4694
        %4808 = vmatprep.subr.mxu0 0.0
        %4809 = vmatpush1.msra.mxu0 %v4695
        %4810 = vmatprep.subr.mxu0 0.0
        %4811 = vmatpush1.msra.mxu0 %v4696
        %4812 = vmatprep.subr.mxu0 0.0
        %4813 = vmatpush1.msra.mxu0 %v4697
        %4814 = vmatprep.subr.mxu0 0.0
        %4815 = vmatpush1.msra.mxu0 %v4698
        %4816 = vmatprep.subr.mxu0 0.0
        %4817 = vmatpush1.msra.mxu0 %v4699
        %4818 = vmatprep.subr.mxu0 0.0
        %4819 = vmatpush1.msra.mxu0 %v4700
        %4820 = vmatprep.subr.mxu0 0.0
        %4821 = vmatpush1.msra.mxu0 %v4701
        %4822 = vmatprep.subr.mxu0 0.0
        %4823 = vmatpush1.msra.mxu0 %v4702
        %4824 = vmatprep.subr.mxu0 0.0
        %4825 = vmatpush1.msra.mxu0 %v4703
        %4826 = vmatprep.subr.mxu0 0.0
        %4827 = vmatpush1.msra.mxu0 %v4704
        %4828 = vmatprep.subr.mxu0 0.0
        %4829 = vmatpush1.msra.mxu0 %v4705
        %4830 = vmatprep.subr.mxu0 0.0
        %4831 = vmatpush1.msra.mxu0 %v4706
        %4832 = vmatprep.subr.mxu0 0.0
        %4833 = vmatpush1.msra.mxu0 %v4707
        %4834 = vmatprep.subr.mxu0 0.0
        %4835 = vmatpush1.msra.mxu0 %v4708
        %4836 = vmatprep.subr.mxu0 0.0
        %4837 = vmatpush1.msra.mxu0 %v4709
        %4838 = vmatprep.subr.mxu0 0.0
        %4839 = vmatpush1.msra.mxu0 %v4710
        %4840 = vmatprep.subr.mxu0 0.0
        %4841 = vmatpush1.msra.mxu0 %v4711
        %4842 = vmatprep.subr.mxu0 0.0
        %4843 = vmatpush1.msra.mxu0 %v4712
        %4844 = vmatprep.subr.mxu0 0.0
        %4845 = vmatpush1.msra.mxu0 %v4713
        %4846 = vmatprep.subr.mxu0 0.0
        %4847 = vmatpush1.msra.mxu0 %v4714
        %4848 = vmatprep.subr.mxu0 0.0
        %4849 = vmatpush1.msra.mxu0 %v4715
        %4850 = vmatprep.subr.mxu0 0.0
        %4851 = vmatpush1.msra.mxu0 %v4716
        %4852 = vmatprep.mubr.f32.mxu0 %v4626
        %4853 = vmatmul.mubr.f32.gmra.mrb[0].mxu0 %v4619
        %v4854 = vpop.f32.mrb[0].mxu0
        %v4855 = vadd.f32 %v4786, %v4854
        %v4856 = vpop.f32.mrb[0].mxu0
        %4857 = vdwg.mxu0
        %4858 = vmatprep.subr.mxu0 0.0
        %4859 = vmatpush1.msra.mxu0 %v4717
        %4860 = vmatprep.subr.mxu0 0.0
        %4861 = vmatpush1.msra.mxu0 %v4718
        %4862 = vmatprep.subr.mxu0 0.0
        %4863 = vmatpush1.msra.mxu0 %v4719
        %4864 = vmatprep.subr.mxu0 0.0
        %4865 = vmatpush1.msra.mxu0 %v4720
        %4866 = vmatprep.subr.mxu0 0.0
        %4867 = vmatpush1.msra.mxu0 %v4721
        %4868 = vmatprep.subr.mxu0 0.0
        %4869 = vmatpush1.msra.mxu0 %v4722
        %4870 = vmatprep.subr.mxu0 0.0
        %4871 = vmatpush1.msra.mxu0 %v4723
        %4872 = vmatprep.subr.mxu0 0.0
        %4873 = vmatpush1.msra.mxu0 %v4724
        %4874 = vmatprep.subr.mxu0 0.0
        %4875 = vmatpush1.msra.mxu0 %v4725
        %4876 = vmatprep.subr.mxu0 0.0
        %4877 = vmatpush1.msra.mxu0 %v4726
        %4878 = vmatprep.subr.mxu0 0.0
        %4879 = vmatpush1.msra.mxu0 %v4727
        %4880 = vmatprep.subr.mxu0 0.0
        %4881 = vmatpush1.msra.mxu0 %v4728
        %4882 = vmatprep.subr.mxu0 0.0
        %4883 = vmatpush1.msra.mxu0 %v4729
        %4884 = vmatprep.subr.mxu0 0.0
        %4885 = vmatpush1.msra.mxu0 %v4730
        %4886 = vmatprep.subr.mxu0 0.0
        %4887 = vmatpush1.msra.mxu0 %v4731
        %4888 = vmatprep.subr.mxu0 0.0
        %4889 = vmatpush1.msra.mxu0 %v4732
        %4890 = vmatprep.subr.mxu0 0.0
        %4891 = vmatpush1.msra.mxu0 %v4733
        %4892 = vmatprep.subr.mxu0 0.0
        %4893 = vmatpush1.msra.mxu0 %v4734
        %4894 = vmatprep.subr.mxu0 0.0
        %4895 = vmatpush1.msra.mxu0 %v4735
        %4896 = vmatprep.subr.mxu0 0.0
        %4897 = vmatpush1.msra.mxu0 %v4736
        %4898 = vmatprep.subr.mxu0 0.0
        %4899 = vmatpush1.msra.mxu0 %v4737
        %4900 = vmatprep.subr.mxu0 0.0
        %4901 = vmatpush1.msra.mxu0 %v4738
        %4902 = vmatprep.subr.mxu0 0.0
        %4903 = vmatpush1.msra.mxu0 %v4739
        %4904 = vmatprep.subr.mxu0 0.0
        %4905 = vmatpush1.msra.mxu0 %v4740
        %4906 = vmatprep.subr.mxu0 0.0
        %4907 = vmatpush1.msra.mxu0 %v4741
        %4908 = vmatprep.subr.mxu0 0.0
        %4909 = vmatpush1.msra.mxu0 %v4742
        %4910 = vmatprep.subr.mxu0 0.0
        %4911 = vmatpush1.msra.mxu0 %v4743
        %4912 = vmatprep.subr.mxu0 0.0
        %4913 = vmatpush1.msra.mxu0 %v4744
        %4914 = vmatprep.subr.mxu0 0.0
        %4915 = vmatpush1.msra.mxu0 %v4745
        %4916 = vmatprep.subr.mxu0 0.0
        %4917 = vmatpush1.msra.mxu0 %v4746
        %4918 = vmatprep.subr.mxu0 0.0
        %4919 = vmatpush1.msra.mxu0 %v4747
        %4920 = vmatprep.subr.mxu0 0.0
        %4921 = vmatpush1.msra.mxu0 %v4748
        %4922 = vmatprep.mubr.f32.mxu0 %v4667
        %4923 = vmatmul.mubr.f32.gmra.mrb[0].mxu0 %v4633
        %v4924 = vpop.f32.mrb[0].mxu0
        %v4925 = vadd.f32 %v4855, %v4924
        %v4926 = vpop.f32.mrb[0].mxu0
        %4927 = vdwg.mxu0
        %4928 = vmatprep.subr.mxu0 0.0
        %4929 = vmatpush1.msra.mxu0 %v4749
        %4930 = vmatprep.subr.mxu0 0.0
        %4931 = vmatpush1.msra.mxu0 %v4750
        %4932 = vmatprep.subr.mxu0 0.0
        %4933 = vmatpush1.msra.mxu0 %v4751
        %4934 = vmatprep.subr.mxu0 0.0
        %4935 = vmatpush1.msra.mxu0 %v4752
        %4936 = vmatprep.subr.mxu0 0.0
        %4937 = vmatpush1.msra.mxu0 %v4753
        %4938 = vmatprep.subr.mxu0 0.0
        %4939 = vmatpush1.msra.mxu0 %v4754
        %4940 = vmatprep.subr.mxu0 0.0
        %4941 = vmatpush1.msra.mxu0 %v4755
        %4942 = vmatprep.subr.mxu0 0.0
        %4943 = vmatpush1.msra.mxu0 %v4756
        %4944 = vmatprep.subr.mxu0 0.0
        %4945 = vmatpush1.msra.mxu0 %v4757
        %4946 = vmatprep.subr.mxu0 0.0
        %4947 = vmatpush1.msra.mxu0 %v4758
        %4948 = vmatprep.subr.mxu0 0.0
        %4949 = vmatpush1.msra.mxu0 %v4759
        %4950 = vmatprep.subr.mxu0 0.0
        %4951 = vmatpush1.msra.mxu0 %v4760
        %4952 = vmatprep.subr.mxu0 0.0
        %4953 = vmatpush1.msra.mxu0 %v4761
        %4954 = vmatprep.subr.mxu0 0.0
        %4955 = vmatpush1.msra.mxu0 %v4762
        %4956 = vmatprep.subr.mxu0 0.0
        %4957 = vmatpush1.msra.mxu0 %v4763
        %4958 = vmatprep.subr.mxu0 0.0
        %4959 = vmatpush1.msra.mxu0 %v4764
        %4960 = vmatprep.subr.mxu0 0.0
        %4961 = vmatpush1.msra.mxu0 %v4765
        %4962 = vmatprep.subr.mxu0 0.0
        %4963 = vmatpush1.msra.mxu0 %v4766
        %4964 = vmatprep.subr.mxu0 0.0
        %4965 = vmatpush1.msra.mxu0 %v4767
        %4966 = vmatprep.subr.mxu0 0.0
        %4967 = vmatpush1.msra.mxu0 %v4768
        %4968 = vmatprep.subr.mxu0 0.0
        %4969 = vmatpush1.msra.mxu0 %v4769
        %4970 = vmatprep.subr.mxu0 0.0
        %4971 = vmatpush1.msra.mxu0 %v4770
        %4972 = vmatprep.subr.mxu0 0.0
        %4973 = vmatpush1.msra.mxu0 %v4771
        %4974 = vmatprep.subr.mxu0 0.0
        %4975 = vmatpush1.msra.mxu0 %v4772
        %4976 = vmatprep.subr.mxu0 0.0
        %4977 = vmatpush1.msra.mxu0 %v4773
        %4978 = vmatprep.subr.mxu0 0.0
        %4979 = vmatpush1.msra.mxu0 %v4774
        %4980 = vmatprep.subr.mxu0 0.0
        %4981 = vmatpush1.msra.mxu0 %v4775
        %4982 = vmatprep.subr.mxu0 0.0
        %4983 = vmatpush1.msra.mxu0 %v4776
        %4984 = vmatprep.subr.mxu0 0.0
        %4985 = vmatpush1.msra.mxu0 %v4777
        %4986 = vmatprep.subr.mxu0 0.0
        %4987 = vmatpush1.msra.mxu0 %v4778
        %4988 = vmatprep.subr.mxu0 0.0
        %4989 = vmatpush1.msra.mxu0 %v4779
        %4990 = vmatprep.subr.mxu0 0.0
        %4991 = vmatpush1.msra.mxu0 %v4780
        %4992 = vmatprep.mubr.f32.mxu0 %v4681
        %4993 = vmatmul.mubr.f32.gmra.mrb[0].mxu0 %v4674
        %v4994 = vpop.f32.mrb[0].mxu0
        %v4995 = vadd.f32 %v4925, %v4994
        %v4996 = vpop.f32.mrb[0].mxu0
        %4997 = vdwg.mxu0
        %v4998 = vsel %vm4505, %v4995, -inf
        %4999 = vmax.xlane.f32.xlu0 %v4998
        %v5000 = vpop.xlane.xlu0 %4999
        %v5001 = vsub.f32 %v4995, %v5000
        %v5002 = vmul.f32 %v5001, 1.442695
        %v5003 = vpow.pop %v5002
        %v5004 = vsel %vm4505, %v5003, 0.0
        %5005 = vadd.xlane.f32.xlu0 %v5004
        %v5006 = vpop.xlane.xlu0 %5005
        %v5007 = vrcp.pop %v5006
        %v5008 = vmul.f32 %v5003, %v5007
        %v5009 = vld [vmem:[%s500] sm:$0xff]
        %5011 = vrot.lane.b32.xlu0 %v4516, 10
        %v5012 = vpop.permute.xlu0 %5011
        %5015 = vrot.lane.b32.xlu0 %v5008, 12
        %v5016 = vpop.permute.xlu0 %5015
        %5019 = vrot.lane.b32.xlu0 %v5009, 14
        %v5020 = vpop.permute.xlu0 %5019
        %v5022 = vsel %vm4012, %v4023, %v5012
        %vm5023 = vcmask 97280
        %v5024 = vsel %vm5023, %v5022, %v5016
        %vm5025 = vcmask 113664
        %v5026 = vsel %vm5025, %v5024, %v5020
        %v5027 = vld [vmem:[%s10] sm:$0xff]
        %v5028 = vld [vmem:[%s10 + $0x8] sm:$0xff]
        %v5029 = vld [vmem:[%s10 + $0x10] sm:$0xff]
        %v5030 = vld [vmem:[%s10 + $0x18] sm:$0xff]
        %v5031 = vld [vmem:[%s10 + $0x20] sm:$0xff]
        %v5032 = vld [vmem:[%s10 + $0x28] sm:$0xff]
        %v5033 = vld [vmem:[%s10 + $0x30] sm:$0xff]
        %v5034 = vld [vmem:[%s10 + $0x38] sm:$0xff]
        %v5035 = vld [vmem:[%s10 + $0x40] sm:$0xff]
        %v5036 = vld [vmem:[%s10 + $0x48] sm:$0xff]
        %v5037 = vld [vmem:[%s10 + $0x50] sm:$0xff]
        %v5038 = vld [vmem:[%s10 + $0x58] sm:$0xff]
        %v5039 = vld [vmem:[%s10 + $0x60] sm:$0xff]
        %v5040 = vld [vmem:[%s10 + $0x68] sm:$0xff]
        %v5041 = vld [vmem:[%s10 + $0x70] sm:$0xff]
        %v5042 = vld [vmem:[%s10 + $0x78] sm:$0xff]
        %v5043 = vld [vmem:[%s10 + $0x80] sm:$0xff]
        %v5044 = vld [vmem:[%s10 + $0x88] sm:$0xff]
        %v5045 = vld [vmem:[%s10 + $0x90] sm:$0xff]
        %v5046 = vld [vmem:[%s10 + $0x98] sm:$0xff]
        %v5047 = vld [vmem:[%s10 + $0xa0] sm:$0xff]
        %v5048 = vld [vmem:[%s10 + $0xa8] sm:$0xff]
        %v5049 = vld [vmem:[%s10 + $0xb0] sm:$0xff]
        %v5050 = vld [vmem:[%s10 + $0xb8] sm:$0xff]
        %v5051 = vld [vmem:[%s10 + $0xc0] sm:$0xff]
        %v5052 = vld [vmem:[%s10 + $0xc8] sm:$0xff]
        %v5053 = vld [vmem:[%s10 + $0xd0] sm:$0xff]
        %v5054 = vld [vmem:[%s10 + $0xd8] sm:$0xff]
        %v5055 = vld [vmem:[%s10 + $0xe0] sm:$0xff]
        %v5056 = vld [vmem:[%s10 + $0xe8] sm:$0xff]
        %v5057 = vld [vmem:[%s10 + $0xf0] sm:$0xff]
        %v5058 = vld [vmem:[%s10 + $0xf8] sm:$0xff]
        %v5059 = vld [vmem:[%s10 + $0x100] sm:$0xff]
        %v5060 = vld [vmem:[%s10 + $0x108] sm:$0xff]
        %v5061 = vld [vmem:[%s10 + $0x110] sm:$0xff]
        %v5062 = vld [vmem:[%s10 + $0x118] sm:$0xff]
        %v5063 = vld [vmem:[%s10 + $0x120] sm:$0xff]
        %v5064 = vld [vmem:[%s10 + $0x128] sm:$0xff]
        %v5065 = vld [vmem:[%s10 + $0x130] sm:$0xff]
        %v5066 = vld [vmem:[%s10 + $0x138] sm:$0xff]
        %v5067 = vld [vmem:[%s10 + $0x140] sm:$0xff]
        %v5068 = vld [vmem:[%s10 + $0x148] sm:$0xff]
        %v5069 = vld [vmem:[%s10 + $0x150] sm:$0xff]
        %v5070 = vld [vmem:[%s10 + $0x158] sm:$0xff]
        %v5071 = vld [vmem:[%s10 + $0x160] sm:$0xff]
        %v5072 = vld [vmem:[%s10 + $0x168] sm:$0xff]
        %v5073 = vld [vmem:[%s10 + $0x170] sm:$0xff]
        %v5074 = vld [vmem:[%s10 + $0x178] sm:$0xff]
        %v5075 = vld [vmem:[%s10 + $0x180] sm:$0xff]
        %v5076 = vld [vmem:[%s10 + $0x188] sm:$0xff]
        %v5077 = vld [vmem:[%s10 + $0x190] sm:$0xff]
        %v5078 = vld [vmem:[%s10 + $0x198] sm:$0x3f]
        %v5079 = vld [vmem:[%s10 + $0x1a0] sm:$0x3f]
        %v5080 = vld [vmem:[%s10 + $0x1a8] sm:$0x3f]
        %v5081 = vld [vmem:[%s11] sm:$0x7]
        %v5083 = vlaneseq
        %v5084 = vshrl.u32 %v5083, 7
        %v5085 = vsub.s32 0, %v5084
        %v5086 = vrot.slane %v5081, %v5085
        %v5087 = vlaneseq
        %v5088 = vshrl.u32 %v5087, 7
        %v5089 = vsub.s32 1, %v5088
        %v5090 = vrot.slane %v5081, %v5089
        %v5091 = vlaneseq
        %v5092 = vshrl.u32 %v5091, 7
        %v5093 = vsub.s32 2, %v5092
        %v5094 = vrot.slane %v5081, %v5093
        %v5098 = vsel %vm5025, %v5020, 0
        %vm5100 = vcmask 1045504
        %v5102 = vsel %vm5100, %v5078, 0
        %v5105 = vsel %vm5100, %v5079, 0
        %v5108 = vsel %vm5100, %v5080, 0
        %5110 = vmatprep.subr.mxu0 %v5028
        %5111 = vmatpush1.msra.mxu0 %v5027
        %5112 = vmatprep.subr.mxu0 %v5031
        %5113 = vmatpush1.msra.mxu0 %v5030
        %5114 = vmatprep.subr.mxu0 %v5034
        %5115 = vmatpush1.msra.mxu0 %v5033
        %5116 = vmatprep.subr.mxu0 %v5037
        %5117 = vmatpush1.msra.mxu0 %v5036
        %5118 = vmatprep.subr.mxu0 %v5040
        %5119 = vmatpush1.msra.mxu0 %v5039
        %5120 = vmatprep.subr.mxu0 %v5043
        %5121 = vmatpush1.msra.mxu0 %v5042
        %5122 = vmatprep.subr.mxu0 %v5046
        %5123 = vmatpush1.msra.mxu0 %v5045
        %5124 = vmatprep.subr.mxu0 %v5049
        %5125 = vmatpush1.msra.mxu0 %v5048
        %5126 = vmatprep.subr.mxu0 %v5052
        %5127 = vmatpush1.msra.mxu0 %v5051
        %5128 = vmatprep.subr.mxu0 %v5055
        %5129 = vmatpush1.msra.mxu0 %v5054
        %5130 = vmatprep.subr.mxu0 %v5058
        %5131 = vmatpush1.msra.mxu0 %v5057
        %5132 = vmatprep.subr.mxu0 %v5061
        %5133 = vmatpush1.msra.mxu0 %v5060
        %5134 = vmatprep.subr.mxu0 %v5064
        %5135 = vmatpush1.msra.mxu0 %v5063
        %5136 = vmatprep.subr.mxu0 %v5067
        %5137 = vmatpush1.msra.mxu0 %v5066
        %5138 = vmatprep.subr.mxu0 %v5070
        %5139 = vmatpush1.msra.mxu0 %v5069
        %5140 = vmatprep.subr.mxu0 %v5073
        %5141 = vmatpush1.msra.mxu0 %v5072
        %5142 = vmatprep.subr.mxu0 %v5076
        %5143 = vmatpush1.msra.mxu0 %v5075
        %5144 = vmatprep.subr.mxu0 %v5105
        %5145 = vmatpush1.msra.mxu0 %v5102
        %5146 = vmatprep.subr.mxu0 0.0
        %5147 = vmatpush1.msra.mxu0 0.0
        %5148 = vmatprep.subr.mxu0 0.0
        %5149 = vmatpush1.msra.mxu0 0.0
        %5150 = vmatprep.subr.mxu0 0.0
        %5151 = vmatpush1.msra.mxu0 0.0
        %5152 = vmatprep.subr.mxu0 0.0
        %5153 = vmatpush1.msra.mxu0 0.0
        %5154 = vmatprep.subr.mxu0 0.0
        %5155 = vmatpush1.msra.mxu0 0.0
        %5156 = vmatprep.subr.mxu0 0.0
        %5157 = vmatpush1.msra.mxu0 0.0
        %5158 = vmatprep.subr.mxu0 0.0
        %5159 = vmatpush1.msra.mxu0 0.0
        %5160 = vmatprep.subr.mxu0 0.0
        %5161 = vmatpush1.msra.mxu0 0.0
        %5162 = vmatprep.subr.mxu0 0.0
        %5163 = vmatpush1.msra.mxu0 0.0
        %5164 = vmatprep.subr.mxu0 0.0
        %5165 = vmatpush1.msra.mxu0 0.0
        %5166 = vmatprep.subr.mxu0 0.0
        %5167 = vmatpush1.msra.mxu0 0.0
        %5168 = vmatprep.subr.mxu0 0.0
        %5169 = vmatpush1.msra.mxu0 0.0
        %5170 = vmatprep.subr.mxu0 0.0
        %5171 = vmatpush1.msra.mxu0 0.0
        %5172 = vmatprep.subr.mxu0 0.0
        %5173 = vmatpush1.msra.mxu0 0.0
        %5174 = vmatprep.mubr.f32.mxu0 %v5098
        %5175 = vmatmul.mubr.f32.gmra.mrb[0].mxu0 %v5026
        %v5176 = vpop.f32.mrb[0].mxu0
        %v5177 = vadd.f32 %v5086, %v5176
        %v5178 = vpop.f32.mrb[0].mxu0
        %v5179 = vadd.f32 %v5090, %v5178
        %5180 = vdwg.mxu0
        %5181 = vmatprep.subr.mxu0 0.0
        %5182 = vmatpush1.msra.mxu0 %v5029
        %5183 = vmatprep.subr.mxu0 0.0
        %5184 = vmatpush1.msra.mxu0 %v5032
        %5185 = vmatprep.subr.mxu0 0.0
        %5186 = vmatpush1.msra.mxu0 %v5035
        %5187 = vmatprep.subr.mxu0 0.0
        %5188 = vmatpush1.msra.mxu0 %v5038
        %5189 = vmatprep.subr.mxu0 0.0
        %5190 = vmatpush1.msra.mxu0 %v5041
        %5191 = vmatprep.subr.mxu0 0.0
        %5192 = vmatpush1.msra.mxu0 %v5044
        %5193 = vmatprep.subr.mxu0 0.0
        %5194 = vmatpush1.msra.mxu0 %v5047
        %5195 = vmatprep.subr.mxu0 0.0
        %5196 = vmatpush1.msra.mxu0 %v5050
        %5197 = vmatprep.subr.mxu0 0.0
        %5198 = vmatpush1.msra.mxu0 %v5053
        %5199 = vmatprep.subr.mxu0 0.0
        %5200 = vmatpush1.msra.mxu0 %v5056
        %5201 = vmatprep.subr.mxu0 0.0
        %5202 = vmatpush1.msra.mxu0 %v5059
        %5203 = vmatprep.subr.mxu0 0.0
        %5204 = vmatpush1.msra.mxu0 %v5062
        %5205 = vmatprep.subr.mxu0 0.0
        %5206 = vmatpush1.msra.mxu0 %v5065
        %5207 = vmatprep.subr.mxu0 0.0
        %5208 = vmatpush1.msra.mxu0 %v5068
        %5209 = vmatprep.subr.mxu0 0.0
        %5210 = vmatpush1.msra.mxu0 %v5071
        %5211 = vmatprep.subr.mxu0 0.0
        %5212 = vmatpush1.msra.mxu0 %v5074
        %5213 = vmatprep.subr.mxu0 0.0
        %5214 = vmatpush1.msra.mxu0 %v5077
        %5215 = vmatprep.subr.mxu0 0.0
        %5216 = vmatpush1.msra.mxu0 %v5108
        %5217 = vmatprep.subr.mxu0 0.0
        %5218 = vmatpush1.msra.mxu0 0.0
        %5219 = vmatprep.subr.mxu0 0.0
        %5220 = vmatpush1.msra.mxu0 0.0
        %5221 = vmatprep.subr.mxu0 0.0
        %5222 = vmatpush1.msra.mxu0 0.0
        %5223 = vmatprep.subr.mxu0 0.0
        %5224 = vmatpush1.msra.mxu0 0.0
        %5225 = vmatprep.subr.mxu0 0.0
        %5226 = vmatpush1.msra.mxu0 0.0
        %5227 = vmatprep.subr.mxu0 0.0
        %5228 = vmatpush1.msra.mxu0 0.0
        %5229 = vmatprep.subr.mxu0 0.0
        %5230 = vmatpush1.msra.mxu0 0.0
        %5231 = vmatprep.subr.mxu0 0.0
        %5232 = vmatpush1.msra.mxu0 0.0
        %5233 = vmatprep.subr.mxu0 0.0
        %5234 = vmatpush1.msra.mxu0 0.0
        %5235 = vmatprep.subr.mxu0 0.0
        %5236 = vmatpush1.msra.mxu0 0.0
        %5237 = vmatprep.subr.mxu0 0.0
        %5238 = vmatpush1.msra.mxu0 0.0
        %5239 = vmatprep.subr.mxu0 0.0
        %5240 = vmatpush1.msra.mxu0 0.0
        %5241 = vmatprep.subr.mxu0 0.0
        %5242 = vmatpush1.msra.mxu0 0.0
        %5243 = vmatprep.subr.mxu0 0.0
        %5244 = vmatpush1.msra.mxu0 0.0
        %5245 = vmatprep.mubr.f32.mxu0 %v5098
        %5246 = vmatmul.mubr.f32.gmra.mrb[0].mxu0 %v5026
        %v5247 = vpop.f32.mrb[0].mxu0
        %v5248 = vadd.f32 %v5094, %v5247
        %v5249 = vpop.f32.mrb[0].mxu0
        %5250 = vdwg.mxu0
        %v5251 = vtanh.pop %v5177
        %v5252 = vtanh.pop %v5179
        %v5253 = vtanh.pop %v5248
        %v5254 = vld [vmem:[%s12] sm:$0x7]
        %v5256 = vlaneseq
        %v5257 = vshrl.u32 %v5256, 7
        %v5258 = vsub.s32 0, %v5257
        %v5259 = vrot.slane %v5254, %v5258
        %v5260 = vlaneseq
        %v5261 = vshrl.u32 %v5260, 7
        %v5262 = vsub.s32 1, %v5261
        %v5263 = vrot.slane %v5254, %v5262
        %v5264 = vlaneseq
        %v5265 = vshrl.u32 %v5264, 7
        %v5266 = vsub.s32 2, %v5265
        %v5267 = vrot.slane %v5254, %v5266
        %v5271 = vmul.f32 %v5251, %v5259
        %v5272 = vmul.f32 %v5252, %v5263
        %v5273 = vmul.f32 %v5253, %v5267
        %v5274 = vadd.f32 %v5271, %v5272
        %v5275 = vadd.f32 %v5274, %v5273
        %5276 = vadd.xlane.f32.xlu0 %v5275
        %v5277 = vpop.xlane.xlu0 %5276
        %v5278 = vld [vmem:[#allocation2] sm:$0x1]
        %v5280 = vlaneseq
        %v5281 = vshrl.u32 %v5280, 7
        %v5282 = vsub.s32 0, %v5281
        %v5283 = vrot.slane %v5278, %v5282
        %v5285 = vadd.f32 %v5277, %v5283
        %v5286 = vsub.f32 0.0, %v5285
        %v5287 = vmul.f32 %v5286, 1.442695
        %v5288 = vpow.pop %v5287
        %v5289 = vadd.f32 %v5288, 1.0
        %v5290 = vrcp.pop %v5289
        %v5291 = vmul.f32 1.0, %v5290
        %vm5292 = vcmask 7168
        %5293 = vst.msk [vmem:[%s504] sm:$0xff] %vm5292, %v5291
        %p5294 = scmp.lt.s32.totalorder %s28, 1
        %s5295 = scalar_select %p5294, %s28, 1
        %s5296 = smul.addr %s5295, 8
        %s5297 = scalar_lea.vmem %s14, %s5296
        // Predicated region
        $region81: #{tpu_custom_call.1} parent=75 // pred_check
          %p5298 = pneg %p350
        $region82: #{tpu_custom_call.1} parent=75 // pred_check_branch
          %5300 = sbr.rel (%p5298) target = $region84
        $region83: #{tpu_custom_call.1} parent=75 // pred_region
          _
        $region84: #{tpu_custom_call.1} parent=75 // pred_fallthru
          _
      $region76: #{tpu_custom_call.1} parent=5 // pred_fallthru
        _
      %p5301 = scmp.le.s32.totalorder 2, %s23
      // Predicated region
      $region85: #{tpu_custom_call.1} parent=5 // pred_check
        %p5302 = pneg %p5301
      $region86: #{tpu_custom_call.1} parent=5 // pred_check_branch
        %5304 = sbr.rel (%p5302) target = $region88
      $region87: #{tpu_custom_call.1} parent=5 // pred_region
        %s5305 = ssub.s32 %s23, 2
        // Predicated region
        $region89: #{tpu_custom_call.1} parent=87 // pred_check
          %p5306 = pneg %p356
        $region90: #{tpu_custom_call.1} parent=87 // pred_check_branch
          %5308 = sbr.rel (%p5306) target = $region92
        $region91: #{tpu_custom_call.1} parent=87 // pred_region
          %p5309 = scmp.lt.s32.totalorder %s29, 1
          %s5310 = scalar_select %p5309, %s29, 1
          %s5311 = smul.addr %s5310, 8
          %s5312 = scalar_lea.vmem %s14, %s5311
        $region92: #{tpu_custom_call.1} parent=87 // pred_fallthru
          _
      $region88: #{tpu_custom_call.1} parent=5 // pred_fallthru
        _
    $region6: #{tpu_custom_call.1} parent=1 // loop_footer
      %s27 = sadd.s32 1, %s23
    $region7: #{tpu_custom_call.1} parent=1 // loop_footer_branch
      %22 = sbr.rel target = $region3
    $region8: #{tpu_custom_call.1} parent=1 // loop_exit
      _
    %5313 = vsyncpa [#allocation4], 1
    %s5314 = scalar_lea.sflag [#allocation4], 1
    %5315 = vsyncpa %s5314, 1

</llo_original>
